<compile_context>
chip_gen: v5e
topology: v5e:2x2
jax: 0.10.0
libtpu: 0.0.40
codegen_flags: <defaults>
</compile_context>

<pallas_src>
import functools

import jax
import jax.numpy as jnp
from jax.experimental import pallas as pl
from jax.experimental.pallas import tpu as pltpu


# ----------------------------------------------------------------------------
# Fused kernel: conv(lq) + conv(refs) + similarity + weighted aggregation
# ----------------------------------------------------------------------------
def _make_kernel(g, R, C, H, W):
    P = R + 1                      # stacked conv planes: [lq, ref_0, ..., ref_{R-1}]
    PC = P * C
    RC = R * C
    HW = H * W
    PADW = W + 1                   # zero margin so every tap shift is a plain slice
    EXT = HW + 2 * PADW
    taps = [(dy, dx) for dy in range(3) for dx in range(3)]

    def kernel(lq_ref, refs_ref, mix_ref, bias_ref, o_ref,
               ext_ref, s2d_ref, simf_ref):
        # Column masks for the horizontal (dx = +/-1) conv borders, built once.
        col = jax.lax.broadcasted_iota(jnp.int32, (PC, HW), 1) % W
        mask_l = col >= 1                      # reading the left neighbour is valid
        mask_r = col <= W - 2                  # reading the right neighbour is valid

        mix = mix_ref[...]                     # (9, PC, PC) block-diag channel mixers
        bias = bias_ref[...]                   # (PC, 1)
        lq_all = lq_ref[...]                   # (g, C, HW)  lane-dense flat planes
        refs_all = refs_ref[...]               # (R, g, C, HW)

        # Zero the shift buffer once: its PADW-lane borders stay zero for all
        # taps and all batch elements handled by this grid step.
        ext_ref[...] = jnp.zeros((PC, EXT), jnp.float32)

        for j in range(g):                     # batch elements of this grid step
            lq = lq_all[j]                     # (C, HW)

            # ---- fused 3x3 convs (lq_res + ref_res) on the MXU -----------------
            ext_ref[0:C, PADW:PADW + HW] = lq
            for r in range(R):
                ext_ref[C + r * C:C + (r + 1) * C, PADW:PADW + HW] = refs_all[r, j]

            acc = jnp.zeros((PC, HW), jnp.float32)
            for t, (dy, dx) in enumerate(taps):
                off = (dy - 1) * W + (dx - 1)
                sv = ext_ref[:, PADW + off:PADW + off + HW]   # shared shifted view
                if dx == 0:
                    sv = jnp.where(mask_l, sv, 0.0)
                elif dx == 2:
                    sv = jnp.where(mask_r, sv, 0.0)
                acc = acc + jnp.dot(mix[t], sv,
                                    preferred_element_type=jnp.float32)
            acc = acc + bias                                   # conv outputs (PC, HW)

            # ---- restore (H, W) structure only for the similarity matmul ------
            for h in range(H):
                s2d_ref[:, h, :] = acc[:, h * W:(h + 1) * W]
            conv2d = s2d_ref[...]                              # (PC, H, W)
            l2d = conv2d[0:C]                                  # (C, H, W)
            rc2d = conv2d[C:PC]                                # (RC, H, W)
            l_rep = jnp.broadcast_to(l2d[None], (R, C, H, W)).reshape(RC, H, W)

            # sim[x, a, b] = sigmoid(sum_h rc[x, h, a] * l[x, h, b]),  x = r*C + c
            s = jnp.einsum('xha,xhb->xab', rc2d, l_rep,
                           preferred_element_type=jnp.float32)  # (RC, W, W)
            sim = pl.reciprocal(1.0 + jnp.exp(-s), approx=True)

            # ---- back to lane-dense layout for aggregation + dense store ------
            for a in range(H):
                simf_ref[:, a * W:(a + 1) * W] = sim[:, a, :]

            num = jnp.zeros((C, HW), jnp.float32)
            den = jnp.zeros((C, HW), jnp.float32)
            for r in range(R):
                sim_r = simf_ref[r * C:(r + 1) * C, :]          # (C, HW)
                num = num + sim_r * refs_all[r, j]
                den = den + sim_r
            o_ref[j] = num * pl.reciprocal(den, approx=True) + lq

    return kernel


def _num_batch_per_step(N):
    """Fold the whole batch into one grid step on single-TensorCore chips."""
    if N <= 1:
        return 1
    try:
        kind = jax.devices()[0].device_kind.lower()
    except Exception:
        return 1
    single_tc = any(tag in kind for tag in
                    ("v5e", "v5 lite", "v5lite", "v6e", "v6 lite", "v6lite"))
    return N if single_tc else 1       # v7x / unknown: keep a parallel batch grid


@functools.lru_cache(maxsize=None)
def _build_feature_aggregation(N, R, C, H, W, g):
    HW = H * W
    PC = (R + 1) * C
    RC = R * C
    kernel = _make_kernel(g, R, C, H, W)
    return pl.pallas_call(
        kernel,
        out_shape=jax.ShapeDtypeStruct((N, C, HW), jnp.float32),
        grid_spec=pltpu.PrefetchScalarGridSpec(
            num_scalar_prefetch=0,
            grid=(N // g,),
            in_specs=[
                pl.BlockSpec((g, C, HW), lambda i: (i, 0, 0)),        # lq (flat)
                pl.BlockSpec((R, g, C, HW), lambda i: (0, i, 0, 0)),  # refs, no transpose
                pl.BlockSpec((9, PC, PC), lambda i: (0, 0, 0)),       # per-tap mixers
                pl.BlockSpec((PC, 1), lambda i: (0, 0)),              # stacked biases
            ],
            out_specs=pl.BlockSpec((g, C, HW), lambda i: (i, 0, 0)),
            scratch_shapes=[
                pltpu.VMEM((PC, HW + 2 * (W + 1)), jnp.float32),      # shift buffer
                pltpu.VMEM((PC, H, W), jnp.float32),                  # conv out, 2-D view
                pltpu.VMEM((RC, HW), jnp.float32),                    # sim, flattened
            ],
        ),
        compiler_params=pltpu.CompilerParams(
            dimension_semantics=("parallel",)),                       # feeds both v7x TCs
    )


def _mix_matrices(lq_w, ref_w, R):
    """Per-tap block-diagonal mixers: mix[t, p*C+co, q*C+ci] = (p==q) * w_p[t, ci, co]."""
    C = lq_w.shape[-1]
    P = R + 1
    lq_t = jnp.transpose(lq_w.reshape(9, C, C), (0, 2, 1))     # (9, co, ci)
    ref_t = jnp.transpose(ref_w.reshape(9, C, C), (0, 2, 1))   # (9, co, ci)
    blocks = jnp.concatenate(
        [lq_t[:, None], jnp.broadcast_to(ref_t[:, None], (9, R, C, C))], axis=1)
    eye_p = jnp.eye(P, dtype=jnp.float32)
    return jnp.einsum('pq,tpoi->tpoqi', eye_p, blocks).reshape(9, P * C, P * C)


def feature_aggregation(params, lq_f, refs_a):
    """lq_f: (N, C, H, W); refs_a: stacked (R, N, C, H, W) or list of (N, C, H, W)."""
    refs = jnp.stack(list(refs_a), 0) if isinstance(refs_a, (list, tuple)) else refs_a
    R, N, C, H, W = refs.shape
    assert lq_f.shape == (N, C, H, W)
    assert H == W, "FeatureAggregation's sim * ref broadcast requires square inputs"
    assert params['lq_w'].shape == (3, 3, C, C) and params['ref_w'].shape == (3, 3, C, C), \
        "weights must be HWIO with out_nc == in_nc"

    HW = H * W
    lq_flat = lq_f.astype(jnp.float32).reshape(N, C, HW)        # contiguous -> free
    refs_flat = refs.astype(jnp.float32).reshape(R, N, C, HW)   # NO transpose (review #1)
    mix = _mix_matrices(params['lq_w'].astype(jnp.float32),
                        params['ref_w'].astype(jnp.float32), R)
    bias = jnp.concatenate(
        [params['lq_b'], jnp.tile(params['ref_b'], R)]).astype(jnp.float32).reshape(-1, 1)

    g = _num_batch_per_step(N)
    call = _build_feature_aggregation(N, R, C, H, W, g)
    out_flat = call(lq_flat, refs_flat, mix, bias)
    return out_flat.reshape(N, C, H, W)


# ----------------------------------------------------------------------------
# Deterministic synthetic parameters (shapes follow nn.Conv2d(in_nc, out_nc, 3))
# ----------------------------------------------------------------------------
def init_params(key, nc=4):
    k1, k2, k3, k4 = jax.random.split(key, 4)
    w_scale = 1.0 / (3.0 * float(nc) ** 0.5)
    return dict(
        lq_w=w_scale * jax.random.normal(k1, (3, 3, nc, nc), jnp.float32),   # HWIO
        lq_b=0.05 * jax.random.normal(k2, (nc,), jnp.float32),
        ref_w=w_scale * jax.random.normal(k3, (3, 3, nc, nc), jnp.float32),  # HWIO
        ref_b=0.05 * jax.random.normal(k4, (nc,), jnp.float32),
    )


# ----------------------------------------------------------------------------
# Pure-JAX (XLA) reference for validation
# ----------------------------------------------------------------------------
def _conv_nchw_ref(x, w_hwio, b):
    y = jax.lax.conv_general_dilated(
        jnp.transpose(x, (0, 2, 3, 1)), w_hwio, (1, 1), 'SAME',
        dimension_numbers=('NHWC', 'HWIO', 'NHWC'))
    y = y + b.reshape(1, 1, 1, -1)
    return jnp.transpose(y, (0, 3, 1, 2))


def feature_aggregation_ref(params, lq_f, refs):
    l = _conv_nchw_ref(lq_f, params['lq_w'], params['lq_b'])
    num = 0.0
    den = 0.0
    for r in range(refs.shape[0]):
        ref = refs[r]
        rc = _conv_nchw_ref(ref, params['ref_w'], params['ref_b'])
        s = jnp.einsum('ncha,nchb->ncab', rc, l)     # matmul(transpose(rc, 2, 3), l)
        sim = 1.0 / (1.0 + jnp.exp(-s))
        num = num + sim * ref
        den = den + sim
    return num / den + lq_f


if __name__ == "__main__":
    key = jax.random.PRNGKey(0)
    k_param, k_lq, k_ref = jax.random.split(key, 3)

    N, C, H, W, R = 2, 4, 16, 16, 3                 # batch=2, channels=4, 16x16, 3 refs
    params = init_params(k_param, nc=C)
    lq_f = jax.random.normal(k_lq, (N, C, H, W), jnp.float32)      # NCHW like PyTorch
    refs = jax.random.normal(k_ref, (R, N, C, H, W), jnp.float32)  # stacked refs_a

    out = jax.block_until_ready(jax.jit(feature_aggregation)(params, lq_f, refs))
    assert out.shape == (N, C, H, W) and out.dtype == jnp.float32

    ref_out = jax.block_until_ready(jax.jit(feature_aggregation_ref)(params, lq_f, refs))
    err = float(jnp.max(jnp.abs(out - ref_out)))
    scale = float(jnp.max(jnp.abs(ref_out))) + 1e-6
    # tolerance covers the two approx reciprocals (~2^-12 relative each)
    assert err <= 2e-3 * scale + 5e-4, f"mismatch: abs err {err}, ref scale {scale}"

    print("KERNEL_OK")
</pallas_src>

<mosaic_0001>
module attributes {stable_mosaic.version = 11 : i64} {
  func.func @kernel(%arg0: i32, %arg1: memref<1x4x256xf32, #tpu.memory_space<vmem>>, %arg2: memref<3x1x4x256xf32, #tpu.memory_space<vmem>>, %arg3: memref<9x16x16xf32, #tpu.memory_space<vmem>>, %arg4: memref<16x1xf32, #tpu.memory_space<vmem>>, %arg5: memref<1x4x256xf32, #tpu.memory_space<vmem>>, %arg6: memref<16x290xf32, #tpu.memory_space<vmem>>, %arg7: memref<16x16x16xf32, #tpu.memory_space<vmem>>, %arg8: memref<12x256xf32, #tpu.memory_space<vmem>>) attributes {dimension_semantics = [#tpu.dimension_semantics<parallel>], iteration_bounds = array<i64: 2>, scalar_prefetch = 0 : i64, scratch_operands = 3 : i64, tpu.core_type = #tpu.core_type<tc>, window_params = [{transform_indices = @transform_0, window_bounds = array<i64: 1, 4, 256>}, {transform_indices = @transform_1, window_bounds = array<i64: 3, 1, 4, 256>}, {pipeline_mode = #tpu.pipeline_mode<synchronous>, transform_indices = @transform_2, window_bounds = array<i64: 9, 16, 16>}, {pipeline_mode = #tpu.pipeline_mode<synchronous>, transform_indices = @transform_3, window_bounds = array<i64: 16, 1>}, {transform_indices = @transform_4, window_bounds = array<i64: 1, 4, 256>}]} {
    %0 = tpu.iota {dimensions = array<i32: 1>} : vector<16x256xi32>
    %c16_i32 = arith.constant 16 : i32
    %c0_i32 = arith.constant 0 : i32
    %1 = arith.cmpi eq, %c16_i32, %c0_i32 : i32
    %c1_i32 = arith.constant 1 : i32
    %2 = arith.select %1, %c1_i32, %c16_i32 : i32
    %3 = vector.broadcast %2 : i32 to vector<16x256xi32>
    %4 = arith.remsi %0, %3 : vector<16x256xi32>
    %c0_i32_0 = arith.constant 0 : i32
    %5 = vector.broadcast %c0_i32_0 : i32 to vector<16x256xi32>
    %6 = arith.cmpi ne, %4, %5 : vector<16x256xi32>
    %c0_i32_1 = arith.constant 0 : i32
    %7 = vector.broadcast %c0_i32_1 : i32 to vector<16x256xi32>
    %8 = arith.cmpi slt, %4, %7 : vector<16x256xi32>
    %c0_i32_2 = arith.constant 0 : i32
    %9 = arith.cmpi slt, %2, %c0_i32_2 : i32
    %10 = vector.broadcast %9 : i1 to vector<16x256xi1>
    %11 = vector.broadcast %10 : vector<16x256xi1> to vector<16x256xi1>
    %12 = arith.xori %8, %11 : vector<16x256xi1>
    %13 = arith.andi %12, %6 : vector<16x256xi1>
    %14 = vector.broadcast %2 : i32 to vector<16x256xi32>
    %15 = arith.addi %4, %14 : vector<16x256xi32>
    %16 = arith.select %13, %15, %4 : vector<16x256xi1>, vector<16x256xi32>
    %c1_i32_3 = arith.constant 1 : i32
    %17 = vector.broadcast %c1_i32_3 : i32 to vector<16x256xi32>
    %18 = arith.cmpi sge, %16, %17 : vector<16x256xi32>
    %c14_i32 = arith.constant 14 : i32
    %19 = vector.broadcast %c14_i32 : i32 to vector<16x256xi32>
    %20 = arith.cmpi sle, %16, %19 : vector<16x256xi32>
    %c0 = arith.constant 0 : index
    %c0_4 = arith.constant 0 : index
    %c0_5 = arith.constant 0 : index
    %21 = vector.load %arg3[%c0, %c0_4, %c0_5] : memref<9x16x16xf32, #tpu.memory_space<vmem>>, vector<9x16x16xf32>
    %c0_6 = arith.constant 0 : index
    %c0_7 = arith.constant 0 : index
    %22 = vector.load %arg4[%c0_6, %c0_7] : memref<16x1xf32, #tpu.memory_space<vmem>>, vector<16x1xf32>
    %c0_8 = arith.constant 0 : index
    %c0_9 = arith.constant 0 : index
    %c0_10 = arith.constant 0 : index
    %23 = vector.load %arg1[%c0_8, %c0_9, %c0_10] : memref<1x4x256xf32, #tpu.memory_space<vmem>>, vector<1x4x256xf32>
    %c0_11 = arith.constant 0 : index
    %c0_12 = arith.constant 0 : index
    %c0_13 = arith.constant 0 : index
    %c0_14 = arith.constant 0 : index
    %24 = vector.load %arg2[%c0_11, %c0_12, %c0_13, %c0_14] : memref<3x1x4x256xf32, #tpu.memory_space<vmem>>, vector<3x1x4x256xf32>
    %cst = arith.constant 0.000000e+00 : f32
    %25 = vector.broadcast %cst : f32 to vector<16x290xf32>
    %c0_15 = arith.constant 0 : index
    %c0_16 = arith.constant 0 : index
    %26 = vector.load %arg6[%c0_15, %c0_16] : memref<16x290xf32, #tpu.memory_space<vmem>>, vector<16x290xf32>
    tpu.vector_store %arg6[%c0_15, %c0_16], %25 {strides = array<i32>} : memref<16x290xf32, #tpu.memory_space<vmem>>, vector<16x290xf32>,
    %27 = vector.shape_cast %23 : vector<1x4x256xf32> to vector<4x256xf32>
    %c0_17 = arith.constant 0 : index
    %c17 = arith.constant 17 : index
    %28 = vector.load %arg6[%c0_17, %c17] : memref<16x290xf32, #tpu.memory_space<vmem>>, vector<4x256xf32>
    tpu.vector_store %arg6[%c0_17, %c17], %27 {strides = array<i32>} : memref<16x290xf32, #tpu.memory_space<vmem>>, vector<4x256xf32>,
    %29 = vector.extract_strided_slice %24 {offsets = [0, 0, 0, 0], sizes = [1, 1, 4, 256], strides = [1, 1, 1, 1]} : vector<3x1x4x256xf32> to vector<1x1x4x256xf32>
    %30 = vector.shape_cast %29 : vector<1x1x4x256xf32> to vector<4x256xf32>
    %c4 = arith.constant 4 : index
    %c17_18 = arith.constant 17 : index
    %31 = vector.load %arg6[%c4, %c17_18] : memref<16x290xf32, #tpu.memory_space<vmem>>, vector<4x256xf32>
    tpu.vector_store %arg6[%c4, %c17_18], %30 {strides = array<i32>} : memref<16x290xf32, #tpu.memory_space<vmem>>, vector<4x256xf32>,
    %32 = vector.extract_strided_slice %24 {offsets = [1, 0, 0, 0], sizes = [1, 1, 4, 256], strides = [1, 1, 1, 1]} : vector<3x1x4x256xf32> to vector<1x1x4x256xf32>
    %33 = vector.shape_cast %32 : vector<1x1x4x256xf32> to vector<4x256xf32>
    %c8 = arith.constant 8 : index
    %c17_19 = arith.constant 17 : index
    %34 = vector.load %arg6[%c8, %c17_19] : memref<16x290xf32, #tpu.memory_space<vmem>>, vector<4x256xf32>
    tpu.vector_store %arg6[%c8, %c17_19], %33 {strides = array<i32>} : memref<16x290xf32, #tpu.memory_space<vmem>>, vector<4x256xf32>,
    %35 = vector.extract_strided_slice %24 {offsets = [2, 0, 0, 0], sizes = [1, 1, 4, 256], strides = [1, 1, 1, 1]} : vector<3x1x4x256xf32> to vector<1x1x4x256xf32>
    %36 = vector.shape_cast %35 : vector<1x1x4x256xf32> to vector<4x256xf32>
    %c12 = arith.constant 12 : index
    %c17_20 = arith.constant 17 : index
    %37 = vector.load %arg6[%c12, %c17_20] : memref<16x290xf32, #tpu.memory_space<vmem>>, vector<4x256xf32>
    tpu.vector_store %arg6[%c12, %c17_20], %36 {strides = array<i32>} : memref<16x290xf32, #tpu.memory_space<vmem>>, vector<4x256xf32>,
    %cst_21 = arith.constant 0.000000e+00 : f32
    %38 = vector.broadcast %cst_21 : f32 to vector<16x256xf32>
    %c0_22 = arith.constant 0 : index
    %c0_23 = arith.constant 0 : index
    %39 = vector.load %arg6[%c0_22, %c0_23] : memref<16x290xf32, #tpu.memory_space<vmem>>, vector<16x256xf32>
    %cst_24 = arith.constant 0.000000e+00 : f32
    %40 = vector.broadcast %cst_24 : f32 to vector<16x256xf32>
    %41 = arith.select %18, %39, %40 : vector<16x256xi1>, vector<16x256xf32>
    %42 = vector.extract_strided_slice %21 {offsets = [0, 0, 0], sizes = [1, 16, 16], strides = [1, 1, 1]} : vector<9x16x16xf32> to vector<1x16x16xf32>
    %43 = vector.shape_cast %42 : vector<1x16x16xf32> to vector<16x16xf32>
    %cst_25 = arith.constant dense<0.000000e+00> : vector<16x256xf32>
    %44 = tpu.matmul %43, %41, %cst_25 {dimension_numbers = #tpu.dot_dimension_numbers<[1], [0], [0], [1], [0, 0, 1, 1], [], []>} : vector<16x16xf32>, vector<16x256xf32>, vector<16x256xf32> -> vector<16x256xf32>
    %45 = arith.addf %38, %44 : vector<16x256xf32>
    %c0_26 = arith.constant 0 : index
    %c1 = arith.constant 1 : index
    %46 = vector.load %arg6[%c0_26, %c1] : memref<16x290xf32, #tpu.memory_space<vmem>>, vector<16x256xf32>
    %47 = vector.extract_strided_slice %21 {offsets = [1, 0, 0], sizes = [1, 16, 16], strides = [1, 1, 1]} : vector<9x16x16xf32> to vector<1x16x16xf32>
    %48 = vector.shape_cast %47 : vector<1x16x16xf32> to vector<16x16xf32>
    %cst_27 = arith.constant dense<0.000000e+00> : vector<16x256xf32>
    %49 = tpu.matmul %48, %46, %cst_27 {dimension_numbers = #tpu.dot_dimension_numbers<[1], [0], [0], [1], [0, 0, 1, 1], [], []>} : vector<16x16xf32>, vector<16x256xf32>, vector<16x256xf32> -> vector<16x256xf32>
    %50 = arith.addf %45, %49 : vector<16x256xf32>
    %c0_28 = arith.constant 0 : index
    %c2 = arith.constant 2 : index
    %51 = vector.load %arg6[%c0_28, %c2] : memref<16x290xf32, #tpu.memory_space<vmem>>, vector<16x256xf32>
    %cst_29 = arith.constant 0.000000e+00 : f32
    %52 = vector.broadcast %cst_29 : f32 to vector<16x256xf32>
    %53 = arith.select %20, %51, %52 : vector<16x256xi1>, vector<16x256xf32>
    %54 = vector.extract_strided_slice %21 {offsets = [2, 0, 0], sizes = [1, 16, 16], strides = [1, 1, 1]} : vector<9x16x16xf32> to vector<1x16x16xf32>
    %55 = vector.shape_cast %54 : vector<1x16x16xf32> to vector<16x16xf32>
    %cst_30 = arith.constant dense<0.000000e+00> : vector<16x256xf32>
    %56 = tpu.matmul %55, %53, %cst_30 {dimension_numbers = #tpu.dot_dimension_numbers<[1], [0], [0], [1], [0, 0, 1, 1], [], []>} : vector<16x16xf32>, vector<16x256xf32>, vector<16x256xf32> -> vector<16x256xf32>
    %57 = arith.addf %50, %56 : vector<16x256xf32>
    %c0_31 = arith.constant 0 : index
    %c16 = arith.constant 16 : index
    %58 = vector.load %arg6[%c0_31, %c16] : memref<16x290xf32, #tpu.memory_space<vmem>>, vector<16x256xf32>
    %cst_32 = arith.constant 0.000000e+00 : f32
    %59 = vector.broadcast %cst_32 : f32 to vector<16x256xf32>
    %60 = arith.select %18, %58, %59 : vector<16x256xi1>, vector<16x256xf32>
    %61 = vector.extract_strided_slice %21 {offsets = [3, 0, 0], sizes = [1, 16, 16], strides = [1, 1, 1]} : vector<9x16x16xf32> to vector<1x16x16xf32>
    %62 = vector.shape_cast %61 : vector<1x16x16xf32> to vector<16x16xf32>
    %cst_33 = arith.constant dense<0.000000e+00> : vector<16x256xf32>
    %63 = tpu.matmul %62, %60, %cst_33 {dimension_numbers = #tpu.dot_dimension_numbers<[1], [0], [0], [1], [0, 0, 1, 1], [], []>} : vector<16x16xf32>, vector<16x256xf32>, vector<16x256xf32> -> vector<16x256xf32>
    %64 = arith.addf %57, %63 : vector<16x256xf32>
    %c0_34 = arith.constant 0 : index
    %c17_35 = arith.constant 17 : index
    %65 = vector.load %arg6[%c0_34, %c17_35] : memref<16x290xf32, #tpu.memory_space<vmem>>, vector<16x256xf32>
    %66 = vector.extract_strided_slice %21 {offsets = [4, 0, 0], sizes = [1, 16, 16], strides = [1, 1, 1]} : vector<9x16x16xf32> to vector<1x16x16xf32>
    %67 = vector.shape_cast %66 : vector<1x16x16xf32> to vector<16x16xf32>
    %cst_36 = arith.constant dense<0.000000e+00> : vector<16x256xf32>
    %68 = tpu.matmul %67, %65, %cst_36 {dimension_numbers = #tpu.dot_dimension_numbers<[1], [0], [0], [1], [0, 0, 1, 1], [], []>} : vector<16x16xf32>, vector<16x256xf32>, vector<16x256xf32> -> vector<16x256xf32>
    %69 = arith.addf %64, %68 : vector<16x256xf32>
    %c0_37 = arith.constant 0 : index
    %c18 = arith.constant 18 : index
    %70 = vector.load %arg6[%c0_37, %c18] : memref<16x290xf32, #tpu.memory_space<vmem>>, vector<16x256xf32>
    %cst_38 = arith.constant 0.000000e+00 : f32
    %71 = vector.broadcast %cst_38 : f32 to vector<16x256xf32>
    %72 = arith.select %20, %70, %71 : vector<16x256xi1>, vector<16x256xf32>
    %73 = vector.extract_strided_slice %21 {offsets = [5, 0, 0], sizes = [1, 16, 16], strides = [1, 1, 1]} : vector<9x16x16xf32> to vector<1x16x16xf32>
    %74 = vector.shape_cast %73 : vector<1x16x16xf32> to vector<16x16xf32>
    %cst_39 = arith.constant dense<0.000000e+00> : vector<16x256xf32>
    %75 = tpu.matmul %74, %72, %cst_39 {dimension_numbers = #tpu.dot_dimension_numbers<[1], [0], [0], [1], [0, 0, 1, 1], [], []>} : vector<16x16xf32>, vector<16x256xf32>, vector<16x256xf32> -> vector<16x256xf32>
    %76 = arith.addf %69, %75 : vector<16x256xf32>
    %c0_40 = arith.constant 0 : index
    %c32 = arith.constant 32 : index
    %77 = vector.load %arg6[%c0_40, %c32] : memref<16x290xf32, #tpu.memory_space<vmem>>, vector<16x256xf32>
    %cst_41 = arith.constant 0.000000e+00 : f32
    %78 = vector.broadcast %cst_41 : f32 to vector<16x256xf32>
    %79 = arith.select %18, %77, %78 : vector<16x256xi1>, vector<16x256xf32>
    %80 = vector.extract_strided_slice %21 {offsets = [6, 0, 0], sizes = [1, 16, 16], strides = [1, 1, 1]} : vector<9x16x16xf32> to vector<1x16x16xf32>
    %81 = vector.shape_cast %80 : vector<1x16x16xf32> to vector<16x16xf32>
    %cst_42 = arith.constant dense<0.000000e+00> : vector<16x256xf32>
    %82 = tpu.matmul %81, %79, %cst_42 {dimension_numbers = #tpu.dot_dimension_numbers<[1], [0], [0], [1], [0, 0, 1, 1], [], []>} : vector<16x16xf32>, vector<16x256xf32>, vector<16x256xf32> -> vector<16x256xf32>
    %83 = arith.addf %76, %82 : vector<16x256xf32>
    %c0_43 = arith.constant 0 : index
    %c33 = arith.constant 33 : index
    %84 = vector.load %arg6[%c0_43, %c33] : memref<16x290xf32, #tpu.memory_space<vmem>>, vector<16x256xf32>
    %85 = vector.extract_strided_slice %21 {offsets = [7, 0, 0], sizes = [1, 16, 16], strides = [1, 1, 1]} : vector<9x16x16xf32> to vector<1x16x16xf32>
    %86 = vector.shape_cast %85 : vector<1x16x16xf32> to vector<16x16xf32>
    %cst_44 = arith.constant dense<0.000000e+00> : vector<16x256xf32>
    %87 = tpu.matmul %86, %84, %cst_44 {dimension_numbers = #tpu.dot_dimension_numbers<[1], [0], [0], [1], [0, 0, 1, 1], [], []>} : vector<16x16xf32>, vector<16x256xf32>, vector<16x256xf32> -> vector<16x256xf32>
    %88 = arith.addf %83, %87 : vector<16x256xf32>
    %c0_45 = arith.constant 0 : index
    %c34 = arith.constant 34 : index
    %89 = vector.load %arg6[%c0_45, %c34] : memref<16x290xf32, #tpu.memory_space<vmem>>, vector<16x256xf32>
    %cst_46 = arith.constant 0.000000e+00 : f32
    %90 = vector.broadcast %cst_46 : f32 to vector<16x256xf32>
    %91 = arith.select %20, %89, %90 : vector<16x256xi1>, vector<16x256xf32>
    %92 = vector.extract_strided_slice %21 {offsets = [8, 0, 0], sizes = [1, 16, 16], strides = [1, 1, 1]} : vector<9x16x16xf32> to vector<1x16x16xf32>
    %93 = vector.shape_cast %92 : vector<1x16x16xf32> to vector<16x16xf32>
    %cst_47 = arith.constant dense<0.000000e+00> : vector<16x256xf32>
    %94 = tpu.matmul %93, %91, %cst_47 {dimension_numbers = #tpu.dot_dimension_numbers<[1], [0], [0], [1], [0, 0, 1, 1], [], []>} : vector<16x16xf32>, vector<16x256xf32>, vector<16x256xf32> -> vector<16x256xf32>
    %95 = arith.addf %88, %94 : vector<16x256xf32>
    %96 = vector.broadcast %22 : vector<16x1xf32> to vector<16x256xf32>
    %97 = arith.addf %95, %96 : vector<16x256xf32>
    %98 = vector.extract_strided_slice %97 {offsets = [0, 0], sizes = [16, 16], strides = [1, 1]} : vector<16x256xf32> to vector<16x16xf32>
    %c0_48 = arith.constant 0 : index
    %c0_49 = arith.constant 0 : index
    %c0_50 = arith.constant 0 : index
    %99 = vector.load %arg7[%c0_48, %c0_49, %c0_50] : memref<16x16x16xf32, #tpu.memory_space<vmem>>, vector<16x1x16xf32>
    %100 = vector.shape_cast %99 : vector<16x1x16xf32> to vector<16x16xf32>
    %101 = vector.shape_cast %98 : vector<16x16xf32> to vector<16x1x16xf32>
    tpu.vector_store %arg7[%c0_48, %c0_49, %c0_50], %101 {strides = array<i32>} : memref<16x16x16xf32, #tpu.memory_space<vmem>>, vector<16x1x16xf32>,
    %102 = vector.extract_strided_slice %97 {offsets = [0, 16], sizes = [16, 16], strides = [1, 1]} : vector<16x256xf32> to vector<16x16xf32>
    %c0_51 = arith.constant 0 : index
    %c1_52 = arith.constant 1 : index
    %c0_53 = arith.constant 0 : index
    %103 = vector.load %arg7[%c0_51, %c1_52, %c0_53] : memref<16x16x16xf32, #tpu.memory_space<vmem>>, vector<16x1x16xf32>
    %104 = vector.shape_cast %103 : vector<16x1x16xf32> to vector<16x16xf32>
    %105 = vector.shape_cast %102 : vector<16x16xf32> to vector<16x1x16xf32>
    tpu.vector_store %arg7[%c0_51, %c1_52, %c0_53], %105 {strides = array<i32>} : memref<16x16x16xf32, #tpu.memory_space<vmem>>, vector<16x1x16xf32>,
    %106 = vector.extract_strided_slice %97 {offsets = [0, 32], sizes = [16, 16], strides = [1, 1]} : vector<16x256xf32> to vector<16x16xf32>
    %c0_54 = arith.constant 0 : index
    %c2_55 = arith.constant 2 : index
    %c0_56 = arith.constant 0 : index
    %107 = vector.load %arg7[%c0_54, %c2_55, %c0_56] : memref<16x16x16xf32, #tpu.memory_space<vmem>>, vector<16x1x16xf32>
    %108 = vector.shape_cast %107 : vector<16x1x16xf32> to vector<16x16xf32>
    %109 = vector.shape_cast %106 : vector<16x16xf32> to vector<16x1x16xf32>
    tpu.vector_store %arg7[%c0_54, %c2_55, %c0_56], %109 {strides = array<i32>} : memref<16x16x16xf32, #tpu.memory_space<vmem>>, vector<16x1x16xf32>,
    %110 = vector.extract_strided_slice %97 {offsets = [0, 48], sizes = [16, 16], strides = [1, 1]} : vector<16x256xf32> to vector<16x16xf32>
    %c0_57 = arith.constant 0 : index
    %c3 = arith.constant 3 : index
    %c0_58 = arith.constant 0 : index
    %111 = vector.load %arg7[%c0_57, %c3, %c0_58] : memref<16x16x16xf32, #tpu.memory_space<vmem>>, vector<16x1x16xf32>
    %112 = vector.shape_cast %111 : vector<16x1x16xf32> to vector<16x16xf32>
    %113 = vector.shape_cast %110 : vector<16x16xf32> to vector<16x1x16xf32>
    tpu.vector_store %arg7[%c0_57, %c3, %c0_58], %113 {strides = array<i32>} : memref<16x16x16xf32, #tpu.memory_space<vmem>>, vector<16x1x16xf32>,
    %114 = vector.extract_strided_slice %97 {offsets = [0, 64], sizes = [16, 16], strides = [1, 1]} : vector<16x256xf32> to vector<16x16xf32>
    %c0_59 = arith.constant 0 : index
    %c4_60 = arith.constant 4 : index
    %c0_61 = arith.constant 0 : index
    %115 = vector.load %arg7[%c0_59, %c4_60, %c0_61] : memref<16x16x16xf32, #tpu.memory_space<vmem>>, vector<16x1x16xf32>
    %116 = vector.shape_cast %115 : vector<16x1x16xf32> to vector<16x16xf32>
    %117 = vector.shape_cast %114 : vector<16x16xf32> to vector<16x1x16xf32>
    tpu.vector_store %arg7[%c0_59, %c4_60, %c0_61], %117 {strides = array<i32>} : memref<16x16x16xf32, #tpu.memory_space<vmem>>, vector<16x1x16xf32>,
    %118 = vector.extract_strided_slice %97 {offsets = [0, 80], sizes = [16, 16], strides = [1, 1]} : vector<16x256xf32> to vector<16x16xf32>
    %c0_62 = arith.constant 0 : index
    %c5 = arith.constant 5 : index
    %c0_63 = arith.constant 0 : index
    %119 = vector.load %arg7[%c0_62, %c5, %c0_63] : memref<16x16x16xf32, #tpu.memory_space<vmem>>, vector<16x1x16xf32>
    %120 = vector.shape_cast %119 : vector<16x1x16xf32> to vector<16x16xf32>
    %121 = vector.shape_cast %118 : vector<16x16xf32> to vector<16x1x16xf32>
    tpu.vector_store %arg7[%c0_62, %c5, %c0_63], %121 {strides = array<i32>} : memref<16x16x16xf32, #tpu.memory_space<vmem>>, vector<16x1x16xf32>,
    %122 = vector.extract_strided_slice %97 {offsets = [0, 96], sizes = [16, 16], strides = [1, 1]} : vector<16x256xf32> to vector<16x16xf32>
    %c0_64 = arith.constant 0 : index
    %c6 = arith.constant 6 : index
    %c0_65 = arith.constant 0 : index
    %123 = vector.load %arg7[%c0_64, %c6, %c0_65] : memref<16x16x16xf32, #tpu.memory_space<vmem>>, vector<16x1x16xf32>
    %124 = vector.shape_cast %123 : vector<16x1x16xf32> to vector<16x16xf32>
    %125 = vector.shape_cast %122 : vector<16x16xf32> to vector<16x1x16xf32>
    tpu.vector_store %arg7[%c0_64, %c6, %c0_65], %125 {strides = array<i32>} : memref<16x16x16xf32, #tpu.memory_space<vmem>>, vector<16x1x16xf32>,
    %126 = vector.extract_strided_slice %97 {offsets = [0, 112], sizes = [16, 16], strides = [1, 1]} : vector<16x256xf32> to vector<16x16xf32>
    %c0_66 = arith.constant 0 : index
    %c7 = arith.constant 7 : index
    %c0_67 = arith.constant 0 : index
    %127 = vector.load %arg7[%c0_66, %c7, %c0_67] : memref<16x16x16xf32, #tpu.memory_space<vmem>>, vector<16x1x16xf32>
    %128 = vector.shape_cast %127 : vector<16x1x16xf32> to vector<16x16xf32>
    %129 = vector.shape_cast %126 : vector<16x16xf32> to vector<16x1x16xf32>
    tpu.vector_store %arg7[%c0_66, %c7, %c0_67], %129 {strides = array<i32>} : memref<16x16x16xf32, #tpu.memory_space<vmem>>, vector<16x1x16xf32>,
    %130 = vector.extract_strided_slice %97 {offsets = [0, 128], sizes = [16, 16], strides = [1, 1]} : vector<16x256xf32> to vector<16x16xf32>
    %c0_68 = arith.constant 0 : index
    %c8_69 = arith.constant 8 : index
    %c0_70 = arith.constant 0 : index
    %131 = vector.load %arg7[%c0_68, %c8_69, %c0_70] : memref<16x16x16xf32, #tpu.memory_space<vmem>>, vector<16x1x16xf32>
    %132 = vector.shape_cast %131 : vector<16x1x16xf32> to vector<16x16xf32>
    %133 = vector.shape_cast %130 : vector<16x16xf32> to vector<16x1x16xf32>
    tpu.vector_store %arg7[%c0_68, %c8_69, %c0_70], %133 {strides = array<i32>} : memref<16x16x16xf32, #tpu.memory_space<vmem>>, vector<16x1x16xf32>,
    %134 = vector.extract_strided_slice %97 {offsets = [0, 144], sizes = [16, 16], strides = [1, 1]} : vector<16x256xf32> to vector<16x16xf32>
    %c0_71 = arith.constant 0 : index
    %c9 = arith.constant 9 : index
    %c0_72 = arith.constant 0 : index
    %135 = vector.load %arg7[%c0_71, %c9, %c0_72] : memref<16x16x16xf32, #tpu.memory_space<vmem>>, vector<16x1x16xf32>
    %136 = vector.shape_cast %135 : vector<16x1x16xf32> to vector<16x16xf32>
    %137 = vector.shape_cast %134 : vector<16x16xf32> to vector<16x1x16xf32>
    tpu.vector_store %arg7[%c0_71, %c9, %c0_72], %137 {strides = array<i32>} : memref<16x16x16xf32, #tpu.memory_space<vmem>>, vector<16x1x16xf32>,
    %138 = vector.extract_strided_slice %97 {offsets = [0, 160], sizes = [16, 16], strides = [1, 1]} : vector<16x256xf32> to vector<16x16xf32>
    %c0_73 = arith.constant 0 : index
    %c10 = arith.constant 10 : index
    %c0_74 = arith.constant 0 : index
    %139 = vector.load %arg7[%c0_73, %c10, %c0_74] : memref<16x16x16xf32, #tpu.memory_space<vmem>>, vector<16x1x16xf32>
    %140 = vector.shape_cast %139 : vector<16x1x16xf32> to vector<16x16xf32>
    %141 = vector.shape_cast %138 : vector<16x16xf32> to vector<16x1x16xf32>
    tpu.vector_store %arg7[%c0_73, %c10, %c0_74], %141 {strides = array<i32>} : memref<16x16x16xf32, #tpu.memory_space<vmem>>, vector<16x1x16xf32>,
    %142 = vector.extract_strided_slice %97 {offsets = [0, 176], sizes = [16, 16], strides = [1, 1]} : vector<16x256xf32> to vector<16x16xf32>
    %c0_75 = arith.constant 0 : index
    %c11 = arith.constant 11 : index
    %c0_76 = arith.constant 0 : index
    %143 = vector.load %arg7[%c0_75, %c11, %c0_76] : memref<16x16x16xf32, #tpu.memory_space<vmem>>, vector<16x1x16xf32>
    %144 = vector.shape_cast %143 : vector<16x1x16xf32> to vector<16x16xf32>
    %145 = vector.shape_cast %142 : vector<16x16xf32> to vector<16x1x16xf32>
    tpu.vector_store %arg7[%c0_75, %c11, %c0_76], %145 {strides = array<i32>} : memref<16x16x16xf32, #tpu.memory_space<vmem>>, vector<16x1x16xf32>,
    %146 = vector.extract_strided_slice %97 {offsets = [0, 192], sizes = [16, 16], strides = [1, 1]} : vector<16x256xf32> to vector<16x16xf32>
    %c0_77 = arith.constant 0 : index
    %c12_78 = arith.constant 12 : index
    %c0_79 = arith.constant 0 : index
    %147 = vector.load %arg7[%c0_77, %c12_78, %c0_79] : memref<16x16x16xf32, #tpu.memory_space<vmem>>, vector<16x1x16xf32>
    %148 = vector.shape_cast %147 : vector<16x1x16xf32> to vector<16x16xf32>
    %149 = vector.shape_cast %146 : vector<16x16xf32> to vector<16x1x16xf32>
    tpu.vector_store %arg7[%c0_77, %c12_78, %c0_79], %149 {strides = array<i32>} : memref<16x16x16xf32, #tpu.memory_space<vmem>>, vector<16x1x16xf32>,
    %150 = vector.extract_strided_slice %97 {offsets = [0, 208], sizes = [16, 16], strides = [1, 1]} : vector<16x256xf32> to vector<16x16xf32>
    %c0_80 = arith.constant 0 : index
    %c13 = arith.constant 13 : index
    %c0_81 = arith.constant 0 : index
    %151 = vector.load %arg7[%c0_80, %c13, %c0_81] : memref<16x16x16xf32, #tpu.memory_space<vmem>>, vector<16x1x16xf32>
    %152 = vector.shape_cast %151 : vector<16x1x16xf32> to vector<16x16xf32>
    %153 = vector.shape_cast %150 : vector<16x16xf32> to vector<16x1x16xf32>
    tpu.vector_store %arg7[%c0_80, %c13, %c0_81], %153 {strides = array<i32>} : memref<16x16x16xf32, #tpu.memory_space<vmem>>, vector<16x1x16xf32>,
    %154 = vector.extract_strided_slice %97 {offsets = [0, 224], sizes = [16, 16], strides = [1, 1]} : vector<16x256xf32> to vector<16x16xf32>
    %c0_82 = arith.constant 0 : index
    %c14 = arith.constant 14 : index
    %c0_83 = arith.constant 0 : index
    %155 = vector.load %arg7[%c0_82, %c14, %c0_83] : memref<16x16x16xf32, #tpu.memory_space<vmem>>, vector<16x1x16xf32>
    %156 = vector.shape_cast %155 : vector<16x1x16xf32> to vector<16x16xf32>
    %157 = vector.shape_cast %154 : vector<16x16xf32> to vector<16x1x16xf32>
    tpu.vector_store %arg7[%c0_82, %c14, %c0_83], %157 {strides = array<i32>} : memref<16x16x16xf32, #tpu.memory_space<vmem>>, vector<16x1x16xf32>,
    %158 = vector.extract_strided_slice %97 {offsets = [0, 240], sizes = [16, 16], strides = [1, 1]} : vector<16x256xf32> to vector<16x16xf32>
    %c0_84 = arith.constant 0 : index
    %c15 = arith.constant 15 : index
    %c0_85 = arith.constant 0 : index
    %159 = vector.load %arg7[%c0_84, %c15, %c0_85] : memref<16x16x16xf32, #tpu.memory_space<vmem>>, vector<16x1x16xf32>
    %160 = vector.shape_cast %159 : vector<16x1x16xf32> to vector<16x16xf32>
    %161 = vector.shape_cast %158 : vector<16x16xf32> to vector<16x1x16xf32>
    tpu.vector_store %arg7[%c0_84, %c15, %c0_85], %161 {strides = array<i32>} : memref<16x16x16xf32, #tpu.memory_space<vmem>>, vector<16x1x16xf32>,
    %c0_86 = arith.constant 0 : index
    %c0_87 = arith.constant 0 : index
    %c0_88 = arith.constant 0 : index
    %162 = vector.load %arg7[%c0_86, %c0_87, %c0_88] : memref<16x16x16xf32, #tpu.memory_space<vmem>>, vector<16x16x16xf32>
    %163 = vector.extract_strided_slice %162 {offsets = [0, 0, 0], sizes = [4, 16, 16], strides = [1, 1, 1]} : vector<16x16x16xf32> to vector<4x16x16xf32>
    %164 = vector.extract_strided_slice %162 {offsets = [4, 0, 0], sizes = [12, 16, 16], strides = [1, 1, 1]} : vector<16x16x16xf32> to vector<12x16x16xf32>
    %165 = vector.shape_cast %163 : vector<4x16x16xf32> to vector<1x4x16x16xf32>
    %166 = vector.shape_cast %165 : vector<1x4x16x16xf32> to vector<1x4x16x16xf32>
    %167 = vector.broadcast %166 : vector<1x4x16x16xf32> to vector<3x4x16x16xf32>
    %168 = vector.shape_cast %167 : vector<3x4x16x16xf32> to vector<12x16x16xf32>
    "tpu.trace_start"() <{level = 10 : i32, message = "xha,xhb->xab"}> : () -> ()
    %cst_89 = arith.constant dense<0.000000e+00> : vector<12x16x16xf32>
    %169 = tpu.matmul %164, %168, %cst_89 {dimension_numbers = #tpu.dot_dimension_numbers<[1], [1], [2], [2], [0, 0, 0, 2, 1, 2], [0], [0]>} : vector<12x16x16xf32>, vector<12x16x16xf32>, vector<12x16x16xf32> -> vector<12x16x16xf32>
    "tpu.trace_stop"() : () -> ()
    %cst_90 = arith.constant 0.000000e+00 : f32
    %170 = vector.broadcast %cst_90 : f32 to vector<12x16x16xf32>
    %171 = arith.subf %170, %169 : vector<12x16x16xf32>
    %172 = math.exp %171 : vector<12x16x16xf32>
    %cst_91 = arith.constant 1.000000e+00 : f32
    %173 = vector.broadcast %cst_91 : f32 to vector<12x16x16xf32>
    %174 = arith.addf %173, %172 : vector<12x16x16xf32>
    %175 = tpu.reciprocal %174 {approx = true} : vector<12x16x16xf32> -> vector<12x16x16xf32>
    %176 = vector.extract_strided_slice %175 {offsets = [0, 0, 0], sizes = [12, 1, 16], strides = [1, 1, 1]} : vector<12x16x16xf32> to vector<12x1x16xf32>
    %177 = vector.shape_cast %176 : vector<12x1x16xf32> to vector<12x16xf32>
    %c0_92 = arith.constant 0 : index
    %c0_93 = arith.constant 0 : index
    %178 = vector.load %arg8[%c0_92, %c0_93] : memref<12x256xf32, #tpu.memory_space<vmem>>, vector<12x16xf32>
    tpu.vector_store %arg8[%c0_92, %c0_93], %177 {strides = array<i32>} : memref<12x256xf32, #tpu.memory_space<vmem>>, vector<12x16xf32>,
    %179 = vector.extract_strided_slice %175 {offsets = [0, 1, 0], sizes = [12, 1, 16], strides = [1, 1, 1]} : vector<12x16x16xf32> to vector<12x1x16xf32>
    %180 = vector.shape_cast %179 : vector<12x1x16xf32> to vector<12x16xf32>
    %c0_94 = arith.constant 0 : index
    %c16_95 = arith.constant 16 : index
    %181 = vector.load %arg8[%c0_94, %c16_95] : memref<12x256xf32, #tpu.memory_space<vmem>>, vector<12x16xf32>
    tpu.vector_store %arg8[%c0_94, %c16_95], %180 {strides = array<i32>} : memref<12x256xf32, #tpu.memory_space<vmem>>, vector<12x16xf32>,
    %182 = vector.extract_strided_slice %175 {offsets = [0, 2, 0], sizes = [12, 1, 16], strides = [1, 1, 1]} : vector<12x16x16xf32> to vector<12x1x16xf32>
    %183 = vector.shape_cast %182 : vector<12x1x16xf32> to vector<12x16xf32>
    %c0_96 = arith.constant 0 : index
    %c32_97 = arith.constant 32 : index
    %184 = vector.load %arg8[%c0_96, %c32_97] : memref<12x256xf32, #tpu.memory_space<vmem>>, vector<12x16xf32>
    tpu.vector_store %arg8[%c0_96, %c32_97], %183 {strides = array<i32>} : memref<12x256xf32, #tpu.memory_space<vmem>>, vector<12x16xf32>,
    %185 = vector.extract_strided_slice %175 {offsets = [0, 3, 0], sizes = [12, 1, 16], strides = [1, 1, 1]} : vector<12x16x16xf32> to vector<12x1x16xf32>
    %186 = vector.shape_cast %185 : vector<12x1x16xf32> to vector<12x16xf32>
    %c0_98 = arith.constant 0 : index
    %c48 = arith.constant 48 : index
    %187 = vector.load %arg8[%c0_98, %c48] : memref<12x256xf32, #tpu.memory_space<vmem>>, vector<12x16xf32>
    tpu.vector_store %arg8[%c0_98, %c48], %186 {strides = array<i32>} : memref<12x256xf32, #tpu.memory_space<vmem>>, vector<12x16xf32>,
    %188 = vector.extract_strided_slice %175 {offsets = [0, 4, 0], sizes = [12, 1, 16], strides = [1, 1, 1]} : vector<12x16x16xf32> to vector<12x1x16xf32>
    %189 = vector.shape_cast %188 : vector<12x1x16xf32> to vector<12x16xf32>
    %c0_99 = arith.constant 0 : index
    %c64 = arith.constant 64 : index
    %190 = vector.load %arg8[%c0_99, %c64] : memref<12x256xf32, #tpu.memory_space<vmem>>, vector<12x16xf32>
    tpu.vector_store %arg8[%c0_99, %c64], %189 {strides = array<i32>} : memref<12x256xf32, #tpu.memory_space<vmem>>, vector<12x16xf32>,
    %191 = vector.extract_strided_slice %175 {offsets = [0, 5, 0], sizes = [12, 1, 16], strides = [1, 1, 1]} : vector<12x16x16xf32> to vector<12x1x16xf32>
    %192 = vector.shape_cast %191 : vector<12x1x16xf32> to vector<12x16xf32>
    %c0_100 = arith.constant 0 : index
    %c80 = arith.constant 80 : index
    %193 = vector.load %arg8[%c0_100, %c80] : memref<12x256xf32, #tpu.memory_space<vmem>>, vector<12x16xf32>
    tpu.vector_store %arg8[%c0_100, %c80], %192 {strides = array<i32>} : memref<12x256xf32, #tpu.memory_space<vmem>>, vector<12x16xf32>,
    %194 = vector.extract_strided_slice %175 {offsets = [0, 6, 0], sizes = [12, 1, 16], strides = [1, 1, 1]} : vector<12x16x16xf32> to vector<12x1x16xf32>
    %195 = vector.shape_cast %194 : vector<12x1x16xf32> to vector<12x16xf32>
    %c0_101 = arith.constant 0 : index
    %c96 = arith.constant 96 : index
    %196 = vector.load %arg8[%c0_101, %c96] : memref<12x256xf32, #tpu.memory_space<vmem>>, vector<12x16xf32>
    tpu.vector_store %arg8[%c0_101, %c96], %195 {strides = array<i32>} : memref<12x256xf32, #tpu.memory_space<vmem>>, vector<12x16xf32>,
    %197 = vector.extract_strided_slice %175 {offsets = [0, 7, 0], sizes = [12, 1, 16], strides = [1, 1, 1]} : vector<12x16x16xf32> to vector<12x1x16xf32>
    %198 = vector.shape_cast %197 : vector<12x1x16xf32> to vector<12x16xf32>
    %c0_102 = arith.constant 0 : index
    %c112 = arith.constant 112 : index
    %199 = vector.load %arg8[%c0_102, %c112] : memref<12x256xf32, #tpu.memory_space<vmem>>, vector<12x16xf32>
    tpu.vector_store %arg8[%c0_102, %c112], %198 {strides = array<i32>} : memref<12x256xf32, #tpu.memory_space<vmem>>, vector<12x16xf32>,
    %200 = vector.extract_strided_slice %175 {offsets = [0, 8, 0], sizes = [12, 1, 16], strides = [1, 1, 1]} : vector<12x16x16xf32> to vector<12x1x16xf32>
    %201 = vector.shape_cast %200 : vector<12x1x16xf32> to vector<12x16xf32>
    %c0_103 = arith.constant 0 : index
    %c128 = arith.constant 128 : index
    %202 = vector.load %arg8[%c0_103, %c128] : memref<12x256xf32, #tpu.memory_space<vmem>>, vector<12x16xf32>
    tpu.vector_store %arg8[%c0_103, %c128], %201 {strides = array<i32>} : memref<12x256xf32, #tpu.memory_space<vmem>>, vector<12x16xf32>,
    %203 = vector.extract_strided_slice %175 {offsets = [0, 9, 0], sizes = [12, 1, 16], strides = [1, 1, 1]} : vector<12x16x16xf32> to vector<12x1x16xf32>
    %204 = vector.shape_cast %203 : vector<12x1x16xf32> to vector<12x16xf32>
    %c0_104 = arith.constant 0 : index
    %c144 = arith.constant 144 : index
    %205 = vector.load %arg8[%c0_104, %c144] : memref<12x256xf32, #tpu.memory_space<vmem>>, vector<12x16xf32>
    tpu.vector_store %arg8[%c0_104, %c144], %204 {strides = array<i32>} : memref<12x256xf32, #tpu.memory_space<vmem>>, vector<12x16xf32>,
    %206 = vector.extract_strided_slice %175 {offsets = [0, 10, 0], sizes = [12, 1, 16], strides = [1, 1, 1]} : vector<12x16x16xf32> to vector<12x1x16xf32>
    %207 = vector.shape_cast %206 : vector<12x1x16xf32> to vector<12x16xf32>
    %c0_105 = arith.constant 0 : index
    %c160 = arith.constant 160 : index
    %208 = vector.load %arg8[%c0_105, %c160] : memref<12x256xf32, #tpu.memory_space<vmem>>, vector<12x16xf32>
    tpu.vector_store %arg8[%c0_105, %c160], %207 {strides = array<i32>} : memref<12x256xf32, #tpu.memory_space<vmem>>, vector<12x16xf32>,
    %209 = vector.extract_strided_slice %175 {offsets = [0, 11, 0], sizes = [12, 1, 16], strides = [1, 1, 1]} : vector<12x16x16xf32> to vector<12x1x16xf32>
    %210 = vector.shape_cast %209 : vector<12x1x16xf32> to vector<12x16xf32>
    %c0_106 = arith.constant 0 : index
    %c176 = arith.constant 176 : index
    %211 = vector.load %arg8[%c0_106, %c176] : memref<12x256xf32, #tpu.memory_space<vmem>>, vector<12x16xf32>
    tpu.vector_store %arg8[%c0_106, %c176], %210 {strides = array<i32>} : memref<12x256xf32, #tpu.memory_space<vmem>>, vector<12x16xf32>,
    %212 = vector.extract_strided_slice %175 {offsets = [0, 12, 0], sizes = [12, 1, 16], strides = [1, 1, 1]} : vector<12x16x16xf32> to vector<12x1x16xf32>
    %213 = vector.shape_cast %212 : vector<12x1x16xf32> to vector<12x16xf32>
    %c0_107 = arith.constant 0 : index
    %c192 = arith.constant 192 : index
    %214 = vector.load %arg8[%c0_107, %c192] : memref<12x256xf32, #tpu.memory_space<vmem>>, vector<12x16xf32>
    tpu.vector_store %arg8[%c0_107, %c192], %213 {strides = array<i32>} : memref<12x256xf32, #tpu.memory_space<vmem>>, vector<12x16xf32>,
    %215 = vector.extract_strided_slice %175 {offsets = [0, 13, 0], sizes = [12, 1, 16], strides = [1, 1, 1]} : vector<12x16x16xf32> to vector<12x1x16xf32>
    %216 = vector.shape_cast %215 : vector<12x1x16xf32> to vector<12x16xf32>
    %c0_108 = arith.constant 0 : index
    %c208 = arith.constant 208 : index
    %217 = vector.load %arg8[%c0_108, %c208] : memref<12x256xf32, #tpu.memory_space<vmem>>, vector<12x16xf32>
    tpu.vector_store %arg8[%c0_108, %c208], %216 {strides = array<i32>} : memref<12x256xf32, #tpu.memory_space<vmem>>, vector<12x16xf32>,
    %218 = vector.extract_strided_slice %175 {offsets = [0, 14, 0], sizes = [12, 1, 16], strides = [1, 1, 1]} : vector<12x16x16xf32> to vector<12x1x16xf32>
    %219 = vector.shape_cast %218 : vector<12x1x16xf32> to vector<12x16xf32>
    %c0_109 = arith.constant 0 : index
    %c224 = arith.constant 224 : index
    %220 = vector.load %arg8[%c0_109, %c224] : memref<12x256xf32, #tpu.memory_space<vmem>>, vector<12x16xf32>
    tpu.vector_store %arg8[%c0_109, %c224], %219 {strides = array<i32>} : memref<12x256xf32, #tpu.memory_space<vmem>>, vector<12x16xf32>,
    %221 = vector.extract_strided_slice %175 {offsets = [0, 15, 0], sizes = [12, 1, 16], strides = [1, 1, 1]} : vector<12x16x16xf32> to vector<12x1x16xf32>
    %222 = vector.shape_cast %221 : vector<12x1x16xf32> to vector<12x16xf32>
    %c0_110 = arith.constant 0 : index
    %c240 = arith.constant 240 : index
    %223 = vector.load %arg8[%c0_110, %c240] : memref<12x256xf32, #tpu.memory_space<vmem>>, vector<12x16xf32>
    tpu.vector_store %arg8[%c0_110, %c240], %222 {strides = array<i32>} : memref<12x256xf32, #tpu.memory_space<vmem>>, vector<12x16xf32>,
    %cst_111 = arith.constant 0.000000e+00 : f32
    %224 = vector.broadcast %cst_111 : f32 to vector<4x256xf32>
    %cst_112 = arith.constant 0.000000e+00 : f32
    %225 = vector.broadcast %cst_112 : f32 to vector<4x256xf32>
    %c0_113 = arith.constant 0 : index
    %c0_114 = arith.constant 0 : index
    %226 = vector.load %arg8[%c0_113, %c0_114] : memref<12x256xf32, #tpu.memory_space<vmem>>, vector<4x256xf32>
    %227 = vector.extract_strided_slice %24 {offsets = [0, 0, 0, 0], sizes = [1, 1, 4, 256], strides = [1, 1, 1, 1]} : vector<3x1x4x256xf32> to vector<1x1x4x256xf32>
    %228 = vector.shape_cast %227 : vector<1x1x4x256xf32> to vector<4x256xf32>
    %229 = arith.mulf %226, %228 : vector<4x256xf32>
    %230 = arith.addf %224, %229 : vector<4x256xf32>
    %231 = arith.addf %225, %226 : vector<4x256xf32>
    %c4_115 = arith.constant 4 : index
    %c0_116 = arith.constant 0 : index
    %232 = vector.load %arg8[%c4_115, %c0_116] : memref<12x256xf32, #tpu.memory_space<vmem>>, vector<4x256xf32>
    %233 = vector.extract_strided_slice %24 {offsets = [1, 0, 0, 0], sizes = [1, 1, 4, 256], strides = [1, 1, 1, 1]} : vector<3x1x4x256xf32> to vector<1x1x4x256xf32>
    %234 = vector.shape_cast %233 : vector<1x1x4x256xf32> to vector<4x256xf32>
    %235 = arith.mulf %232, %234 : vector<4x256xf32>
    %236 = arith.addf %230, %235 : vector<4x256xf32>
    %237 = arith.addf %231, %232 : vector<4x256xf32>
    %c8_117 = arith.constant 8 : index
    %c0_118 = arith.constant 0 : index
    %238 = vector.load %arg8[%c8_117, %c0_118] : memref<12x256xf32, #tpu.memory_space<vmem>>, vector<4x256xf32>
    %239 = vector.extract_strided_slice %24 {offsets = [2, 0, 0, 0], sizes = [1, 1, 4, 256], strides = [1, 1, 1, 1]} : vector<3x1x4x256xf32> to vector<1x1x4x256xf32>
    %240 = vector.shape_cast %239 : vector<1x1x4x256xf32> to vector<4x256xf32>
    %241 = arith.mulf %238, %240 : vector<4x256xf32>
    %242 = arith.addf %236, %241 : vector<4x256xf32>
    %243 = arith.addf %237, %238 : vector<4x256xf32>
    %244 = tpu.reciprocal %243 {approx = true} : vector<4x256xf32> -> vector<4x256xf32>
    %245 = arith.mulf %242, %244 : vector<4x256xf32>
    %246 = arith.addf %245, %27 : vector<4x256xf32>
    %c0_119 = arith.constant 0 : index
    %c0_120 = arith.constant 0 : index
    %c0_121 = arith.constant 0 : index
    %247 = vector.load %arg5[%c0_119, %c0_120, %c0_121] : memref<1x4x256xf32, #tpu.memory_space<vmem>>, vector<1x4x256xf32>
    %248 = vector.shape_cast %247 : vector<1x4x256xf32> to vector<4x256xf32>
    %249 = vector.shape_cast %246 : vector<4x256xf32> to vector<1x4x256xf32>
    tpu.vector_store %arg5[%c0_119, %c0_120, %c0_121], %249 {strides = array<i32>} : memref<1x4x256xf32, #tpu.memory_space<vmem>>, vector<1x4x256xf32>,
    return
  }
  func.func @transform_0(%arg0: i32) -> (i32, i32, i32) {
    %c0_i32 = arith.constant 0 : i32
    %c0_i32_0 = arith.constant 0 : i32
    %c0_i32_1 = arith.constant 0 : i32
    return %arg0, %c0_i32, %c0_i32_0 : i32, i32, i32
  }
  func.func @transform_1(%arg0: i32) -> (i32, i32, i32, i32) {
    %c0_i32 = arith.constant 0 : i32
    %c0_i32_0 = arith.constant 0 : i32
    %c0_i32_1 = arith.constant 0 : i32
    %c0_i32_2 = arith.constant 0 : i32
    return %c0_i32, %arg0, %c0_i32_0, %c0_i32_1 : i32, i32, i32, i32
  }
  func.func @transform_2(%arg0: i32) -> (i32, i32, i32) {
    %c0_i32 = arith.constant 0 : i32
    %c0_i32_0 = arith.constant 0 : i32
    %c0_i32_1 = arith.constant 0 : i32
    %c0_i32_2 = arith.constant 0 : i32
    return %c0_i32, %c0_i32_0, %c0_i32_1 : i32, i32, i32
  }
  func.func @transform_3(%arg0: i32) -> (i32, i32) {
    %c0_i32 = arith.constant 0 : i32
    %c0_i32_0 = arith.constant 0 : i32
    %c0_i32_1 = arith.constant 0 : i32
    return %c0_i32, %c0_i32_0 : i32, i32
  }
  func.func @transform_4(%arg0: i32) -> (i32, i32, i32) {
    %c0_i32 = arith.constant 0 : i32
    %c0_i32_0 = arith.constant 0 : i32
    %c0_i32_1 = arith.constant 0 : i32
    return %arg0, %c0_i32, %c0_i32_0 : i32, i32, i32
  }
}

</mosaic_0001>

<llo_original>
// kernel: tile.8
$region0: #{tile.8}
  #allocation0 [shape = 's32[1]{0}', space=sflag, size = 0x4, scoped, tag = 'scoped memory for tile.8']
  %s0 = inlined_call_operand.vmem [shape: f32[4], index: 0, kind: input, shape index: {}]
  %s1 = inlined_call_operand.vmem [shape: f32[3,4], index: 1, kind: output, shape index: {}]
  // Predicated region
  $region2: #{tile.8} parent=0 // pred_check
    _
  $region3: #{tile.8} parent=0 // pred_check_branch
    %3 = sbr.rel (0) target = $region5
  $region4: #{tile.8} parent=0 // pred_region
    _
  $region5: #{tile.8} parent=0 // pred_fallthru
    _
  %v4 = vld [vmem:[%s0] ss:$0 sm:$0xff]
  %5 = vst [vmem:[%s1] sm:$0xf] %v4

// kernel: tile.9
$region0: #{tile.9}
  %s0 = inlined_call_operand.vmem [shape: f32[3,4], index: 0, kind: input, shape index: {}]
  %s1 = inlined_call_operand.vmem [shape: f32[12], index: 1, kind: output, shape index: {}]
  $region1: #{tile.9} parent=0
    #allocation0 [shape = 'u8[4096]{0}', space=vmem, size = 0x1000, scoped, tag = 'scoped mem for output reshape']
    #allocation1 [shape = 'u8[4096]{0}', space=vmem, size = 0x1000, scoped, tag = 'scoped mem for input reshape']
    %s3 = ssub.s32 16, 1
    %v4 = vld [vmem:[%s0] sm:%s3]
    %5 = vst [vmem:[#allocation1] sm:%s3] %v4
    %v6 = vld [vmem:[#allocation1] sm:$0x1]
    %vm7 = vcmask 31744
    %8 = vst.msk [vmem:[#allocation0] sm:$0x1] %vm7, %v6
    %s9 = scalar_lea.vmem [#allocation1], 2
    %v10 = vld [vmem:[%s9] sm:$0x1]
    %11 = vrot.lane.b32.xlu0 %v10, 8
    %v12 = vpop.permute.xlu0 %11
    %vm13 = vcmask 97344
    %14 = vst.msk [vmem:[#allocation0] sm:$0x1] %vm13, %v12
    %s15 = scalar_lea.vmem [#allocation1], 1
    %v16 = vld [vmem:[%s15] sm:$0x1]
    %17 = vrot.lane.b32.xlu0 %v16, 4
    %v18 = vpop.permute.xlu0 %17
    %vm19 = vcmask 64544
    %20 = vst.msk [vmem:[#allocation0] sm:$0x1] %vm19, %v18
    %s22 = ssub.s32 2, 1
    %v23 = vld [vmem:[#allocation0] sm:%s22]
    %s25 = ssub.s32 2, 1
    %26 = vst [vmem:[%s1] sm:%s25] %v23

// kernel: feature_aggregation.1
$region0: #{feature_aggregation.1}
  #allocation0 [shape = 'u32[]', space=smem, size = 0x4, offset = 0x4, fixed_abs, tag = 'smem constant byte address 0x4 - core index']
  #allocation1 [shape = 'u32[72,128]{1,0:T(1,128)}', space=vmem, size = 0x9000, scoped, tag = 'internal scratch']
  #allocation2 [shape = 'f32[16,290]{1,0:T(8,128)}', space=vmem, size = 0x6000, scoped, tag = 'scratch operand']
  #allocation3 [shape = 'f32[16,16,16]{2,1,0:T(8,128)}', space=vmem, size = 0x20000, scoped, tag = 'scratch operand']
  #allocation4 [shape = 'f32[12,256]{1,0:T(8,128)}', space=vmem, size = 0x4000, scoped, tag = 'scratch operand']
  %s0 = inlined_call_operand.vmem [shape: f32[2,4,256], index: 0, kind: input, shape index: {}]
  %s1 = inlined_call_operand.vmem [shape: f32[3,2,4,256], index: 1, kind: input, shape index: {}]
  %s2 = inlined_call_operand.vmem [shape: f32[9,16,16], index: 2, kind: input, shape index: {}]
  %s3 = inlined_call_operand.vmem [shape: f32[16,1], index: 3, kind: input, shape index: {}]
  %s4 = inlined_call_operand.vmem [shape: f32[2,4,256], index: 4, kind: output, shape index: {}]
  %s5 = sld [smem:[#allocation0]]
  $region87: #{feature_aggregation.1} parent=0
    _
  %s7 = ssub.s32 1, %s5
  %s8 = scalar_select 0, %s7, %s5
  $region1: #{feature_aggregation.1} parent=0
    #allocation5 [shape = 'u8[24576]{0}', space=vmem, size = 0x6000, scoped, tag = 'input window, operand 1']
    loop: start=0, step=1, limit=4
    $region2: #{feature_aggregation.1} parent=1 // loop_pre_header
      _
    $region3: #{feature_aggregation.1} parent=1 // loop_header
      %s10 = sphi 0, %s14
      %p11 = scmp.ge.s32.totalorder %s10, 4
      %s20 = sphi 0, %s22
      %s23 = sphi 0, %s20
      %s24 = sphi 0, %s23
      %s40 = sphi 0, %s24
      %s46 = sphi 0, %s48
      %s49 = sphi 0, %s46
      %s50 = sphi 0, %s49
      %s66 = sphi 0, %s50
      %s70 = sphi 0, %s70
      %s72 = sphi 0, %s70
      %s73 = sphi 0, %s72
      %s87 = sphi 0, %s73
      %s91 = sphi 0, %s91
      %s93 = sphi 0, %s91
      %s94 = sphi 0, %s93
      %s108 = sphi 0, %s94
      %s114 = sphi 0, %s116
      %s117 = sphi 0, %s114
      %s118 = sphi 0, %s117
      %s134 = sphi 0, %s118
    $region4: #{feature_aggregation.1} parent=1 // loop_header_branch
      %13 = sbr.rel (%p11) target = $region8
    $region5: #{feature_aggregation.1} parent=1 // loop_body
      %s15 = ssub.s32 %s10, 1
      %s16 = ssub.s32 %s10, 2
      %s17 = sadd.s32 %s10, 1
      %s18 = ssub.s32 %s10, %s17
      %p19 = scmp.eq.s32.totalorder %s18, 0
      %s21 = sadd.s32 %s20, 1
      %s22 = scalar_select %p19, %s20, %s21
      %p25 = pneg %p19
      %p26 = scmp.eq.s32.totalorder %s10, 1
      %p27 = por %p25, %p26
      %p28 = scmp.ne.s32.totalorder %s20, %s23
      %p29 = scmp.eq.s32.totalorder %s10, 0
      %p30 = por %p28, %p29
      %p31 = scmp.ne.s32.totalorder %s20, %s23
      %p32 = scmp.eq.s32.totalorder %s15, 1
      %p33 = por %p31, %p32
      %p34 = scmp.ne.s32.totalorder %s23, %s24
      %p35 = scmp.eq.s32.totalorder %s15, 0
      %p36 = por %p34, %p35
      %p37 = scmp.ne.s32.totalorder %s23, %s24
      %p38 = scmp.eq.s32.totalorder %s16, 1
      %p39 = por %p37, %p38
      %p41 = scmp.ne.s32.totalorder %s24, %s40
      %p42 = scmp.eq.s32.totalorder %s16, 0
      %p43 = por %p41, %p42
      %s44 = ssub.s32 %s10, %s17
      %p45 = scmp.eq.s32.totalorder %s44, 0
      %s47 = sadd.s32 %s46, 1
      %s48 = scalar_select %p45, %s46, %s47
      %p51 = pneg %p45
      %p52 = scmp.eq.s32.totalorder %s10, 1
      %p53 = por %p51, %p52
      %p54 = scmp.ne.s32.totalorder %s46, %s49
      %p55 = scmp.eq.s32.totalorder %s10, 0
      %p56 = por %p54, %p55
      %p57 = scmp.ne.s32.totalorder %s46, %s49
      %p58 = scmp.eq.s32.totalorder %s15, 1
      %p59 = por %p57, %p58
      %p60 = scmp.ne.s32.totalorder %s49, %s50
      %p61 = scmp.eq.s32.totalorder %s15, 0
      %p62 = por %p60, %p61
      %p63 = scmp.ne.s32.totalorder %s49, %s50
      %p64 = scmp.eq.s32.totalorder %s16, 1
      %p65 = por %p63, %p64
      %p67 = scmp.ne.s32.totalorder %s50, %s66
      %p68 = scmp.eq.s32.totalorder %s16, 0
      %p69 = por %p67, %p68
      %s71 = sadd.s32 %s70, 1
      %p74 = scmp.eq.s32.totalorder %s10, 1
      %p75 = scmp.ne.s32.totalorder %s70, %s72
      %p76 = scmp.eq.s32.totalorder %s10, 0
      %p77 = por %p75, %p76
      %p78 = scmp.ne.s32.totalorder %s70, %s72
      %p79 = scmp.eq.s32.totalorder %s15, 1
      %p80 = por %p78, %p79
      %p81 = scmp.ne.s32.totalorder %s72, %s73
      %p82 = scmp.eq.s32.totalorder %s15, 0
      %p83 = por %p81, %p82
      %p84 = scmp.ne.s32.totalorder %s72, %s73
      %p85 = scmp.eq.s32.totalorder %s16, 1
      %p86 = por %p84, %p85
      %p88 = scmp.ne.s32.totalorder %s73, %s87
      %p89 = scmp.eq.s32.totalorder %s16, 0
      %p90 = por %p88, %p89
      %s92 = sadd.s32 %s91, 1
      %p95 = scmp.eq.s32.totalorder %s10, 1
      %p96 = scmp.ne.s32.totalorder %s91, %s93
      %p97 = scmp.eq.s32.totalorder %s10, 0
      %p98 = por %p96, %p97
      %p99 = scmp.ne.s32.totalorder %s91, %s93
      %p100 = scmp.eq.s32.totalorder %s15, 1
      %p101 = por %p99, %p100
      %p102 = scmp.ne.s32.totalorder %s93, %s94
      %p103 = scmp.eq.s32.totalorder %s15, 0
      %p104 = por %p102, %p103
      %p105 = scmp.ne.s32.totalorder %s93, %s94
      %p106 = scmp.eq.s32.totalorder %s16, 1
      %p107 = por %p105, %p106
      %p109 = scmp.ne.s32.totalorder %s94, %s108
      %p110 = scmp.eq.s32.totalorder %s16, 0
      %p111 = por %p109, %p110
      %s112 = ssub.s32 %s10, %s17
      %p113 = scmp.eq.s32.totalorder %s112, 0
      %s115 = sadd.s32 %s114, 1
      %s116 = scalar_select %p113, %s114, %s115
      %p119 = pneg %p113
      %p120 = scmp.eq.s32.totalorder %s10, 1
      %p121 = por %p119, %p120
      %p122 = scmp.ne.s32.totalorder %s114, %s117
      %p123 = scmp.eq.s32.totalorder %s10, 0
      %p124 = por %p122, %p123
      %p125 = scmp.ne.s32.totalorder %s114, %s117
      %p126 = scmp.eq.s32.totalorder %s15, 1
      %p127 = por %p125, %p126
      %p128 = scmp.ne.s32.totalorder %s117, %s118
      %p129 = scmp.eq.s32.totalorder %s15, 0
      %p130 = por %p128, %p129
      %p131 = scmp.ne.s32.totalorder %s117, %s118
      %p132 = scmp.eq.s32.totalorder %s16, 1
      %p133 = por %p131, %p132
      %p135 = scmp.ne.s32.totalorder %s118, %s134
      %p136 = scmp.eq.s32.totalorder %s16, 0
      %p137 = por %p135, %p136
      %p138 = scmp.le.s32.totalorder 1, %s10
      %p139 = scmp.lt.s32.totalorder %s10, 3
      %p140 = pnand %p138, %p139
      %p141 = pneg %p140
      // Predicated region
      $region9: #{feature_aggregation.1} parent=5 // pred_check
        _
      $region10: #{feature_aggregation.1} parent=5 // pred_check_branch
        %143 = sbr.rel (%p140) target = $region12
      $region11: #{feature_aggregation.1} parent=5 // pred_region
        %s144 = ssub.s32 %s10, 1
        // Predicated region
        $region13: #{feature_aggregation.1} parent=11 // pred_check
          %p145 = pneg %p83
        $region14: #{feature_aggregation.1} parent=11 // pred_check_branch
          %147 = sbr.rel (%p145) target = $region16
        $region15: #{feature_aggregation.1} parent=11 // pred_region
          _
        $region16: #{feature_aggregation.1} parent=11 // pred_fallthru
          _
        // Predicated region
        $region17: #{feature_aggregation.1} parent=11 // pred_check
          %p148 = pneg %p104
        $region18: #{feature_aggregation.1} parent=11 // pred_check_branch
          %150 = sbr.rel (%p148) target = $region20
        $region19: #{feature_aggregation.1} parent=11 // pred_region
          _
        $region20: #{feature_aggregation.1} parent=11 // pred_fallthru
          _
      $region12: #{feature_aggregation.1} parent=5 // pred_fallthru
        _
      %p151 = scmp.lt.s32.totalorder %s10, 2
      // Predicated region
      $region21: #{feature_aggregation.1} parent=5 // pred_check
        %p152 = pneg %p151
      $region22: #{feature_aggregation.1} parent=5 // pred_check_branch
        %154 = sbr.rel (%p152) target = $region24
      $region23: #{feature_aggregation.1} parent=5 // pred_region
        // Predicated region
        $region25: #{feature_aggregation.1} parent=23 // pred_check
          %p155 = pneg %p30
        $region26: #{feature_aggregation.1} parent=23 // pred_check_branch
          %157 = sbr.rel (%p155) target = $region28
        $region27: #{feature_aggregation.1} parent=23 // pred_region
          %p158 = scmp.lt.s32.totalorder %s10, 1
          %s159 = scalar_select %p158, %s10, 1
          %s160 = smul.addr %s159, 2
          %s161 = smul.addr %s160, 4
          %s162 = scalar_lea.vmem %s0, %s161
        $region28: #{feature_aggregation.1} parent=23 // pred_fallthru
          _
        // Predicated region
        $region29: #{feature_aggregation.1} parent=23 // pred_check
          %p163 = pneg %p56
        $region30: #{feature_aggregation.1} parent=23 // pred_check_branch
          %165 = sbr.rel (%p163) target = $region32
        $region31: #{feature_aggregation.1} parent=23 // pred_region
          %s166 = sand.u32 %s46, 1
          %s167 = sand.u32 %s46, 1
          %s168 = smul.addr %s167, 24
          %s169 = scalar_lea.vmem [#allocation5], %s168
          %s170 = smul.addr %s10, 2
          %s171 = smul.addr %s170, 4
          %s172 = scalar_lea.vmem %s1, %s171
          // Predicated region
          $region33: #{feature_aggregation.1} parent=31 // pred_check
            _
          $region34: #{feature_aggregation.1} parent=31 // pred_check_branch
            %174 = sbr.rel (0) target = $region36
          $region35: #{feature_aggregation.1} parent=31 // pred_region
            // Predicated region
            $region37: #{feature_aggregation.1} parent=35 // pred_check
              _
            $region38: #{feature_aggregation.1} parent=35 // pred_check_branch
              %176 = sbr.rel (0) target = $region40
            $region39: #{feature_aggregation.1} parent=35 // pred_region
              // Predicated region
              $region52: #{feature_aggregation.1} parent=39 // pred_check
                _
              $region53: #{feature_aggregation.1} parent=39 // pred_check_branch
                %196 = sbr.rel (0) target = $region55
              $region54: #{feature_aggregation.1} parent=39 // pred_region
                loop: start=0, step=1, limit=1
                $region56: #{feature_aggregation.1} parent=54 // loop_pre_header
                  _
                $region57: #{feature_aggregation.1} parent=54 // loop_header
                  %s198 = sphi 0, %s202
                  %p199 = scmp.ge.s32.totalorder %s198, 1
                  %s203 = sphi %s172, %s172
                  %s204 = sphi %s169, %s169
                $region58: #{feature_aggregation.1} parent=54 // loop_header_branch
                  %201 = sbr.rel (%p199) target = $region62
                $region59: #{feature_aggregation.1} parent=54 // loop_body
                  %v205 = vld [vmem:[%s203] sm:$0xff]
                  %206 = vst [vmem:[%s204] sm:$0xff] %v205
                  %v207 = vld [vmem:[%s203 + $0x10] sm:$0xff]
                  %208 = vst [vmem:[%s204 + $0x8] sm:$0xff] %v207
                  %v209 = vld [vmem:[%s203 + $0x20] sm:$0xff]
                  %210 = vst [vmem:[%s204 + $0x10] sm:$0xff] %v209
                $region60: #{feature_aggregation.1} parent=54 // loop_footer
                  %s202 = sadd.s32 1, %s198
                $region61: #{feature_aggregation.1} parent=54 // loop_footer_branch
                  %197 = sbr.rel target = $region57
                $region62: #{feature_aggregation.1} parent=54 // loop_exit
                  _
              $region55: #{feature_aggregation.1} parent=39 // pred_fallthru
                _
              // Predicated region
              $region63: #{feature_aggregation.1} parent=39 // pred_check
                _
              $region64: #{feature_aggregation.1} parent=39 // pred_check_branch
                %212 = sbr.rel target = $region66
              $region65: #{feature_aggregation.1} parent=39 // pred_region
                _
              $region66: #{feature_aggregation.1} parent=39 // pred_fallthru
                _
            $region40: #{feature_aggregation.1} parent=35 // pred_fallthru
              _
            // Predicated region
            $region41: #{feature_aggregation.1} parent=35 // pred_check
              _
            $region42: #{feature_aggregation.1} parent=35 // pred_check_branch
              %178 = sbr.rel target = $region44
            $region43: #{feature_aggregation.1} parent=35 // pred_region
              %s180 = ssub.s32 256, 1
              loop: start=0, step=1, limit=1
              $region45: #{feature_aggregation.1} parent=43 // loop_pre_header
                _
              $region46: #{feature_aggregation.1} parent=43 // loop_header
                %s182 = sphi 0, %s186
                %p183 = scmp.ge.s32.totalorder %s182, 1
                %s187 = sphi %s172, %s172
                %s188 = sphi %s169, %s169
              $region47: #{feature_aggregation.1} parent=43 // loop_header_branch
                %185 = sbr.rel (%p183) target = $region51
              $region48: #{feature_aggregation.1} parent=43 // loop_body
                %v189 = vld [vmem:[%s187] sm:%s180]
                %190 = vst [vmem:[%s188] sm:%s180] %v189
                %v191 = vld [vmem:[%s187 + $0x10] sm:%s180]
                %192 = vst [vmem:[%s188 + $0x8] sm:%s180] %v191
                %v193 = vld [vmem:[%s187 + $0x20] sm:%s180]
                %194 = vst [vmem:[%s188 + $0x10] sm:%s180] %v193
              $region49: #{feature_aggregation.1} parent=43 // loop_footer
                %s186 = sadd.s32 1, %s182
              $region50: #{feature_aggregation.1} parent=43 // loop_footer_branch
                %181 = sbr.rel target = $region46
              $region51: #{feature_aggregation.1} parent=43 // loop_exit
                _
            $region44: #{feature_aggregation.1} parent=35 // pred_fallthru
              _
          $region36: #{feature_aggregation.1} parent=31 // pred_fallthru
            _
          %213 = vnop
        $region32: #{feature_aggregation.1} parent=23 // pred_fallthru
          _
      $region24: #{feature_aggregation.1} parent=5 // pred_fallthru
        _
      %p214 = scmp.le.s32.totalorder 1, %s10
      %p215 = scmp.lt.s32.totalorder %s10, 3
      %p216 = pnand %p214, %p215
      %p217 = pneg %p216
      // Predicated region
      $region67: #{feature_aggregation.1} parent=5 // pred_check
        _
      $region68: #{feature_aggregation.1} parent=5 // pred_check_branch
        %219 = sbr.rel (%p216) target = $region70
      $region69: #{feature_aggregation.1} parent=5 // pred_region
        %s220 = ssub.s32 %s10, 1
        %s221 = sand.u32 %s49, 1
        %s222 = sand.u32 %s49, 1
        %s223 = smul.addr %s222, 24
        %s224 = scalar_lea.vmem [#allocation5], %s223
        // Predicated region
        $region71: #{feature_aggregation.1} parent=69 // pred_check
          %p225 = pneg %p62
        $region72: #{feature_aggregation.1} parent=69 // pred_check_branch
          %227 = sbr.rel (%p225) target = $region74
        $region73: #{feature_aggregation.1} parent=69 // pred_region
          _
        $region74: #{feature_aggregation.1} parent=69 // pred_fallthru
          _
        %p228 = scmp.lt.s32.totalorder %s15, 1
        %s229 = scalar_select %p228, %s15, 1
        %s230 = smul.addr %s229, 2
        %s231 = smul.addr %s230, 4
        %s232 = scalar_lea.vmem %s0, %s231
        %p233 = pneg %p36
        %p234 = pneg %p33
        %s235 = sand.u32 %s49, 1
        %s236 = sand.u32 %s49, 1
        %s237 = smul.addr %s236, 24
        %s238 = scalar_lea.vmem [#allocation5], %s237
        %p239 = pneg %p62
        %p240 = pneg %p59
        %p241 = pneg %p83
        %p242 = pneg %p80
        %p243 = pneg %p104
        %p244 = pneg %p101
        %p245 = pneg %p130
        %p246 = pneg %p127
        %p247 = scmp.lt.s32.totalorder %s15, 1
        %s248 = scalar_select %p247, %s15, 1
        %s249 = smul.addr %s248, 2
        %s250 = smul.addr %s249, 4
        %s251 = scalar_lea.vmem %s4, %s250
        %p252 = scmp.lt.s32.totalorder %s15, 1
        %s253 = scalar_select %p252, %s15, 1
        %s254 = smul.addr %s253, 2
        %s255 = smul.addr %s254, 4
        %s256 = scalar_lea.vmem %s0, %s255
        %p257 = scmp.lt.s32.totalorder %s15, 1
        %s258 = scalar_select %p257, %s15, 1
        %s259 = smul.addr %s258, 2
        %s260 = smul.addr %s259, 4
        %s261 = scalar_lea.vmem %s4, %s260
        %v262 = vlaneseq
        %v263 = vand.u32 %v262, 127
        %v264 = vadd.s32 %v263, 128
        %vm265 = vcmp.lt.s32.totalorder %v263, 0
        %v266 = vsub.s32 0, %v263
        %v267 = vsel %vm265, %v266, %v263
        %v268 = vshrl.u32 %v267, 4
        %v269 = vand.u32 %v267, 15
        %v270 = vsub.s32 0, %v269
        %v271 = vsel %vm265, %v270, %v269
        %vm272 = vcmp.lt.s32.totalorder %v264, 0
        %v273 = vsub.s32 0, %v264
        %v274 = vsel %vm272, %v273, %v264
        %v275 = vshrl.u32 %v274, 4
        %v276 = vand.u32 %v274, 15
        %v277 = vsub.s32 0, %v276
        %v278 = vsel %vm272, %v277, %v276
        %vm279 = vcmp.ne.s32.totalorder %v271, 0
        %vm280 = vcmp.ne.s32.totalorder %v278, 0
        %vm281 = vcmp.lt.s32.totalorder %v271, 0
        %vm282 = vcmp.lt.s32.totalorder %v278, 0
        %vm283 = vmand %vm281, %vm279
        %vm284 = vmand %vm282, %vm280
        %v285 = vadd.s32 %v271, 16
        %v286 = vadd.s32 %v278, 16
        %v287 = vsel %vm283, %v285, %v271
        %v288 = vsel %vm284, %v286, %v278
        %vm289 = vcmp.ge.s32.totalorder %v287, 1
        %vm290 = vcmp.ge.s32.totalorder %v288, 1
        %vm291 = vcmp.le.s32.totalorder %v287, 14
        %vm292 = vcmp.le.s32.totalorder %v288, 14
        %v293 = vld [vmem:[%s2] sm:$0xff]
        %v294 = vld [vmem:[%s2 + $0x8] sm:$0xff]
        %v295 = vld [vmem:[%s2 + $0x10] sm:$0xff]
        %v296 = vld [vmem:[%s2 + $0x18] sm:$0xff]
        %v297 = vld [vmem:[%s2 + $0x20] sm:$0xff]
        %v298 = vld [vmem:[%s2 + $0x28] sm:$0xff]
        %v299 = vld [vmem:[%s2 + $0x30] sm:$0xff]
        %v300 = vld [vmem:[%s2 + $0x38] sm:$0xff]
        %v301 = vld [vmem:[%s2 + $0x40] sm:$0xff]
        %v302 = vld [vmem:[%s2 + $0x48] sm:$0xff]
        %v303 = vld [vmem:[%s2 + $0x50] sm:$0xff]
        %v304 = vld [vmem:[%s2 + $0x58] sm:$0xff]
        %v305 = vld [vmem:[%s2 + $0x60] sm:$0xff]
        %v306 = vld [vmem:[%s2 + $0x68] sm:$0xff]
        %v307 = vld [vmem:[%s2 + $0x70] sm:$0xff]
        %v308 = vld [vmem:[%s2 + $0x78] sm:$0xff]
        %v309 = vld [vmem:[%s2 + $0x80] sm:$0xff]
        %v310 = vld [vmem:[%s2 + $0x88] sm:$0xff]
        %v311 = vld [vmem:[%s3] sm:$0xff]
        %v312 = vld [vmem:[%s3 + $0x8] sm:$0xff]
        %v313 = vld [vmem:[%s256] sm:$0xff]
        %v314 = vld [vmem:[%s224] sm:$0xff]
        %v315 = vld [vmem:[%s224 + $0x8] sm:$0xff]
        %v316 = vld [vmem:[%s224 + $0x10] sm:$0xff]
        %317 = vst [vmem:[#allocation2] sm:$0xff] 0.0
        %318 = vst [vmem:[#allocation2 + $0x8] sm:$0xff] 0.0
        %vm319 = vcmask 277504
        %320 = vst.msk [vmem:[#allocation2 + $0x10] sm:$0xff] %vm319, 0.0
        %321 = vst [vmem:[#allocation2 + $0x18] sm:$0xff] 0.0
        %322 = vst [vmem:[#allocation2 + $0x20] sm:$0xff] 0.0
        %323 = vst.msk [vmem:[#allocation2 + $0x28] sm:$0xff] %vm319, 0.0
        %325 = vst [vmem:[#allocation1] ss:$2 sm:$0xff] %v313
        %v326 = vld.sshfl [vmem:[#allocation1] sm:$0xff pattern:$0x75316420]
        %v327 = vld.sshfl [vmem:[#allocation1 + $0x8] sm:$0xff pattern:$0x75316420]
        %328 = vrot.lane.b32.xlu0 %v326, 17
        %v329 = vpop.permute.xlu0 %328
        %330 = vrot.lane.b32.xlu0 %v327, 17
        %v331 = vpop.permute.xlu0 %330
        %vm332 = vcmask 138240
        %v333 = vsel %vm332, %v329, %v331
        %vm337 = vcmask 1043592
        %338 = vst.msk [vmem:[#allocation2] sm:$0xf] %vm337, %v329
        %339 = vst [vmem:[#allocation2 + $0x8] sm:$0xf] %v333
        %vm340 = vcmask 134144
        %341 = vst.msk [vmem:[#allocation2 + $0x10] sm:$0xf] %vm340, %v331
        %s343 = scalar_lea.vmem [#allocation1], 1
        %344 = vst [vmem:[%s343] ss:$2 sm:$0xff] %v314
        %v345 = vld.sshfl [vmem:[#allocation1] sm:$0xff pattern:$0x75316420]
        %v346 = vld.sshfl [vmem:[#allocation1 + $0x8] sm:$0xff pattern:$0x75316420]
        %347 = vrot.lane.b32.xlu0 %v345, 17
        %v348 = vpop.permute.xlu0 %347
        %349 = vrot.lane.b32.xlu0 %v346, 17
        %v350 = vpop.permute.xlu0 %349
        %v351 = vsel %vm332, %v348, %v350
        %vm355 = vcmask 1047692
        %356 = vst.msk [vmem:[#allocation2] sm:$0xf0] %vm355, %v348
        %357 = vst [vmem:[#allocation2 + $0x8] sm:$0xf0] %v351
        %vm358 = vcmask 138244
        %359 = vst.msk [vmem:[#allocation2 + $0x10] sm:$0xf0] %vm358, %v350
        %361 = vst [vmem:[#allocation1] ss:$2 sm:$0xff] %v315
        %v362 = vld.sshfl [vmem:[#allocation1] sm:$0xff pattern:$0x75316420]
        %v363 = vld.sshfl [vmem:[#allocation1 + $0x8] sm:$0xff pattern:$0x75316420]
        %364 = vrot.lane.b32.xlu0 %v362, 17
        %v365 = vpop.permute.xlu0 %364
        %366 = vrot.lane.b32.xlu0 %v363, 17
        %v367 = vpop.permute.xlu0 %366
        %v368 = vsel %vm332, %v365, %v367
        %372 = vst.msk [vmem:[#allocation2 + $0x18] sm:$0xf] %vm337, %v365
        %373 = vst [vmem:[#allocation2 + $0x20] sm:$0xf] %v368
        %374 = vst.msk [vmem:[#allocation2 + $0x28] sm:$0xf] %vm340, %v367
        %s376 = scalar_lea.vmem [#allocation1], 1
        %377 = vst [vmem:[%s376] ss:$2 sm:$0xff] %v316
        %v378 = vld.sshfl [vmem:[#allocation1] sm:$0xff pattern:$0x75316420]
        %v379 = vld.sshfl [vmem:[#allocation1 + $0x8] sm:$0xff pattern:$0x75316420]
        %380 = vrot.lane.b32.xlu0 %v378, 17
        %v381 = vpop.permute.xlu0 %380
        %382 = vrot.lane.b32.xlu0 %v379, 17
        %v383 = vpop.permute.xlu0 %382
        %v384 = vsel %vm332, %v381, %v383
        %388 = vst.msk [vmem:[#allocation2 + $0x18] sm:$0xf0] %vm355, %v381
        %389 = vst [vmem:[#allocation2 + $0x20] sm:$0xf0] %v384
        %390 = vst.msk [vmem:[#allocation2 + $0x28] sm:$0xf0] %vm358, %v383
        %v391 = vld [vmem:[#allocation2] sm:$0xff]
        %v392 = vld [vmem:[#allocation2 + $0x8] sm:$0xff]
        %v393 = vld [vmem:[#allocation2 + $0x18] sm:$0xff]
        %v394 = vld [vmem:[#allocation2 + $0x20] sm:$0xff]
        %v395 = vsel %vm289, %v391, 0.0
        %v396 = vsel %vm290, %v392, 0.0
        %v397 = vsel %vm289, %v393, 0.0
        %v398 = vsel %vm290, %v394, 0.0
        %v399 = vld [vmem:[#allocation2 + $0x10] sm:$0xff]
        %v400 = vld [vmem:[#allocation2 + $0x28] sm:$0xff]
        %407 = vrot.lane.b32.xlu0 %v391, 127
        %v408 = vpop.permute.xlu0 %407
        %409 = vrot.lane.b32.xlu0 %v392, 127
        %v410 = vpop.permute.xlu0 %409
        %411 = vrot.lane.b32.xlu0 %v399, 127
        %v412 = vpop.permute.xlu0 %411
        %413 = vrot.lane.b32.xlu0 %v393, 127
        %v414 = vpop.permute.xlu0 %413
        %415 = vrot.lane.b32.xlu0 %v394, 127
        %v416 = vpop.permute.xlu0 %415
        %417 = vrot.lane.b32.xlu0 %v400, 127
        %v418 = vpop.permute.xlu0 %417
        %vm419 = vcmask 1039360
        %v420 = vsel %vm419, %v408, %v410
        %v421 = vsel %vm419, %v410, %v412
        %v422 = vsel %vm419, %v414, %v416
        %v423 = vsel %vm419, %v416, %v418
        %vm428 = vcmask 130048
        %v430 = vsel %vm428, %v295, 0
        %v433 = vsel %vm428, %v296, 0
        %435 = vmatpush.msra.mxu0 0.0
        %436 = vmatpush.msra.mxu0 0.0
        %437 = vmatpush.msra.mxu0 0.0
        %438 = vmatpush.msra.mxu0 0.0
        %439 = vmatpush.msra.mxu0 0.0
        %440 = vmatpush.msra.mxu0 0.0
        %441 = vmatpush.msra.mxu0 0.0
        %442 = vmatpush.msra.mxu0 0.0
        %443 = vmatpush.msra.mxu0 0.0
        %444 = vmatpush.msra.mxu0 0.0
        %445 = vmatpush.msra.mxu0 0.0
        %446 = vmatpush.msra.mxu0 0.0
        %447 = vmatpush.msra.mxu0 0.0
        %448 = vmatpush.msra.mxu0 0.0
        %449 = vmatpush.msra.mxu0 %v422
        %450 = vmatpush.msra.mxu0 %v420
        %451 = vmatmul.f32.gmra.mxu0 %v430
        %v452 = vpop.f32.mrf.mxu0
        %v453 = vadd.f32 0.0, %v452
        %454 = vmatmul.f32.gmra.mxu0 %v433
        %v455 = vpop.f32.mrf.mxu0
        %v456 = vadd.f32 0.0, %v455
        %457 = vdwg.mxu0
        %458 = vmatpush.msra.mxu0 0.0
        %459 = vmatpush.msra.mxu0 0.0
        %460 = vmatpush.msra.mxu0 0.0
        %461 = vmatpush.msra.mxu0 0.0
        %462 = vmatpush.msra.mxu0 0.0
        %463 = vmatpush.msra.mxu0 0.0
        %464 = vmatpush.msra.mxu0 0.0
        %465 = vmatpush.msra.mxu0 0.0
        %466 = vmatpush.msra.mxu0 0.0
        %467 = vmatpush.msra.mxu0 0.0
        %468 = vmatpush.msra.mxu0 0.0
        %469 = vmatpush.msra.mxu0 0.0
        %470 = vmatpush.msra.mxu0 0.0
        %471 = vmatpush.msra.mxu0 0.0
        %472 = vmatpush.msra.mxu0 %v423
        %473 = vmatpush.msra.mxu0 %v421
        %474 = vmatmul.f32.gmra.mxu0 %v430
        %v475 = vpop.f32.mrf.mxu0
        %v476 = vadd.f32 0.0, %v475
        %477 = vmatmul.f32.gmra.mxu0 %v433
        %v478 = vpop.f32.mrf.mxu0
        %v479 = vadd.f32 0.0, %v478
        %480 = vdwg.mxu0
        %v482 = vsel %vm428, %v293, 0
        %v485 = vsel %vm428, %v294, 0
        %487 = vmatpush.msra.mxu0 0.0
        %488 = vmatpush.msra.mxu0 0.0
        %489 = vmatpush.msra.mxu0 0.0
        %490 = vmatpush.msra.mxu0 0.0
        %491 = vmatpush.msra.mxu0 0.0
        %492 = vmatpush.msra.mxu0 0.0
        %493 = vmatpush.msra.mxu0 0.0
        %494 = vmatpush.msra.mxu0 0.0
        %495 = vmatpush.msra.mxu0 0.0
        %496 = vmatpush.msra.mxu0 0.0
        %497 = vmatpush.msra.mxu0 0.0
        %498 = vmatpush.msra.mxu0 0.0
        %499 = vmatpush.msra.mxu0 0.0
        %500 = vmatpush.msra.mxu0 0.0
        %501 = vmatpush.msra.mxu0 %v397
        %502 = vmatpush.msra.mxu0 %v395
        %503 = vmatmul.f32.gmra.mxu0 %v482
        %v504 = vpop.f32.mrf.mxu0
        %v505 = vadd.f32 %v453, %v504
        %506 = vmatmul.f32.gmra.mxu0 %v485
        %v507 = vpop.f32.mrf.mxu0
        %v508 = vadd.f32 %v456, %v507
        %509 = vdwg.mxu0
        %510 = vmatpush.msra.mxu0 0.0
        %511 = vmatpush.msra.mxu0 0.0
        %512 = vmatpush.msra.mxu0 0.0
        %513 = vmatpush.msra.mxu0 0.0
        %514 = vmatpush.msra.mxu0 0.0
        %515 = vmatpush.msra.mxu0 0.0
        %516 = vmatpush.msra.mxu0 0.0
        %517 = vmatpush.msra.mxu0 0.0
        %518 = vmatpush.msra.mxu0 0.0
        %519 = vmatpush.msra.mxu0 0.0
        %520 = vmatpush.msra.mxu0 0.0
        %521 = vmatpush.msra.mxu0 0.0
        %522 = vmatpush.msra.mxu0 0.0
        %523 = vmatpush.msra.mxu0 0.0
        %524 = vmatpush.msra.mxu0 %v398
        %525 = vmatpush.msra.mxu0 %v396
        %526 = vmatmul.f32.gmra.mxu0 %v482
        %v527 = vpop.f32.mrf.mxu0
        %v528 = vadd.f32 %v476, %v527
        %529 = vmatmul.f32.gmra.mxu0 %v485
        %v530 = vpop.f32.mrf.mxu0
        %v531 = vadd.f32 %v479, %v530
        %532 = vdwg.mxu0
        %533 = vrot.lane.b32.xlu0 %v391, 126
        %v534 = vpop.permute.xlu0 %533
        %535 = vrot.lane.b32.xlu0 %v392, 126
        %v536 = vpop.permute.xlu0 %535
        %537 = vrot.lane.b32.xlu0 %v399, 126
        %v538 = vpop.permute.xlu0 %537
        %539 = vrot.lane.b32.xlu0 %v393, 126
        %v540 = vpop.permute.xlu0 %539
        %541 = vrot.lane.b32.xlu0 %v394, 126
        %v542 = vpop.permute.xlu0 %541
        %543 = vrot.lane.b32.xlu0 %v400, 126
        %v544 = vpop.permute.xlu0 %543
        %vm545 = vcmask 1031168
        %v546 = vsel %vm545, %v534, %v536
        %v547 = vsel %vm545, %v536, %v538
        %v548 = vsel %vm545, %v540, %v542
        %v549 = vsel %vm545, %v542, %v544
        %v554 = vsel %vm291, %v546, 0.0
        %v555 = vsel %vm292, %v547, 0.0
        %v556 = vsel %vm291, %v548, 0.0
        %v557 = vsel %vm292, %v549, 0.0
        %v559 = vsel %vm428, %v297, 0
        %v562 = vsel %vm428, %v298, 0
        %564 = vmatpush.msra.mxu0 0.0
        %565 = vmatpush.msra.mxu0 0.0
        %566 = vmatpush.msra.mxu0 0.0
        %567 = vmatpush.msra.mxu0 0.0
        %568 = vmatpush.msra.mxu0 0.0
        %569 = vmatpush.msra.mxu0 0.0
        %570 = vmatpush.msra.mxu0 0.0
        %571 = vmatpush.msra.mxu0 0.0
        %572 = vmatpush.msra.mxu0 0.0
        %573 = vmatpush.msra.mxu0 0.0
        %574 = vmatpush.msra.mxu0 0.0
        %575 = vmatpush.msra.mxu0 0.0
        %576 = vmatpush.msra.mxu0 0.0
        %577 = vmatpush.msra.mxu0 0.0
        %578 = vmatpush.msra.mxu0 %v556
        %579 = vmatpush.msra.mxu0 %v554
        %580 = vmatmul.f32.gmra.mxu0 %v559
        %v581 = vpop.f32.mrf.mxu0
        %v582 = vadd.f32 0.0, %v581
        %583 = vmatmul.f32.gmra.mxu0 %v562
        %v584 = vpop.f32.mrf.mxu0
        %v585 = vadd.f32 0.0, %v584
        %586 = vdwg.mxu0
        %587 = vmatpush.msra.mxu0 0.0
        %588 = vmatpush.msra.mxu0 0.0
        %589 = vmatpush.msra.mxu0 0.0
        %590 = vmatpush.msra.mxu0 0.0
        %591 = vmatpush.msra.mxu0 0.0
        %592 = vmatpush.msra.mxu0 0.0
        %593 = vmatpush.msra.mxu0 0.0
        %594 = vmatpush.msra.mxu0 0.0
        %595 = vmatpush.msra.mxu0 0.0
        %596 = vmatpush.msra.mxu0 0.0
        %597 = vmatpush.msra.mxu0 0.0
        %598 = vmatpush.msra.mxu0 0.0
        %599 = vmatpush.msra.mxu0 0.0
        %600 = vmatpush.msra.mxu0 0.0
        %601 = vmatpush.msra.mxu0 %v557
        %602 = vmatpush.msra.mxu0 %v555
        %603 = vmatmul.f32.gmra.mxu0 %v559
        %v604 = vpop.f32.mrf.mxu0
        %v605 = vadd.f32 0.0, %v604
        %606 = vmatmul.f32.gmra.mxu0 %v562
        %v607 = vpop.f32.mrf.mxu0
        %v608 = vadd.f32 0.0, %v607
        %609 = vdwg.mxu0
        %v610 = vadd.f32 %v505, %v582
        %v611 = vadd.f32 %v528, %v605
        %v612 = vadd.f32 %v508, %v585
        %v613 = vadd.f32 %v531, %v608
        %614 = vrot.lane.b32.xlu0 %v391, 112
        %v615 = vpop.permute.xlu0 %614
        %616 = vrot.lane.b32.xlu0 %v392, 112
        %v617 = vpop.permute.xlu0 %616
        %618 = vrot.lane.b32.xlu0 %v399, 112
        %v619 = vpop.permute.xlu0 %618
        %620 = vrot.lane.b32.xlu0 %v393, 112
        %v621 = vpop.permute.xlu0 %620
        %622 = vrot.lane.b32.xlu0 %v394, 112
        %v623 = vpop.permute.xlu0 %622
        %624 = vrot.lane.b32.xlu0 %v400, 112
        %v625 = vpop.permute.xlu0 %624
        %vm626 = vcmask 916480
        %v627 = vsel %vm626, %v615, %v617
        %v628 = vsel %vm626, %v617, %v619
        %v629 = vsel %vm626, %v621, %v623
        %v630 = vsel %vm626, %v623, %v625
        %v635 = vsel %vm289, %v627, 0.0
        %v636 = vsel %vm290, %v628, 0.0
        %v637 = vsel %vm289, %v629, 0.0
        %v638 = vsel %vm290, %v630, 0.0
        %v640 = vsel %vm428, %v299, 0
        %v643 = vsel %vm428, %v300, 0
        %645 = vmatpush.msra.mxu0 0.0
        %646 = vmatpush.msra.mxu0 0.0
        %647 = vmatpush.msra.mxu0 0.0
        %648 = vmatpush.msra.mxu0 0.0
        %649 = vmatpush.msra.mxu0 0.0
        %650 = vmatpush.msra.mxu0 0.0
        %651 = vmatpush.msra.mxu0 0.0
        %652 = vmatpush.msra.mxu0 0.0
        %653 = vmatpush.msra.mxu0 0.0
        %654 = vmatpush.msra.mxu0 0.0
        %655 = vmatpush.msra.mxu0 0.0
        %656 = vmatpush.msra.mxu0 0.0
        %657 = vmatpush.msra.mxu0 0.0
        %658 = vmatpush.msra.mxu0 0.0
        %659 = vmatpush.msra.mxu0 %v637
        %660 = vmatpush.msra.mxu0 %v635
        %661 = vmatmul.f32.gmra.mxu0 %v640
        %v662 = vpop.f32.mrf.mxu0
        %v663 = vadd.f32 0.0, %v662
        %664 = vmatmul.f32.gmra.mxu0 %v643
        %v665 = vpop.f32.mrf.mxu0
        %v666 = vadd.f32 0.0, %v665
        %667 = vdwg.mxu0
        %668 = vmatpush.msra.mxu0 0.0
        %669 = vmatpush.msra.mxu0 0.0
        %670 = vmatpush.msra.mxu0 0.0
        %671 = vmatpush.msra.mxu0 0.0
        %672 = vmatpush.msra.mxu0 0.0
        %673 = vmatpush.msra.mxu0 0.0
        %674 = vmatpush.msra.mxu0 0.0
        %675 = vmatpush.msra.mxu0 0.0
        %676 = vmatpush.msra.mxu0 0.0
        %677 = vmatpush.msra.mxu0 0.0
        %678 = vmatpush.msra.mxu0 0.0
        %679 = vmatpush.msra.mxu0 0.0
        %680 = vmatpush.msra.mxu0 0.0
        %681 = vmatpush.msra.mxu0 0.0
        %682 = vmatpush.msra.mxu0 %v638
        %683 = vmatpush.msra.mxu0 %v636
        %684 = vmatmul.f32.gmra.mxu0 %v640
        %v685 = vpop.f32.mrf.mxu0
        %v686 = vadd.f32 0.0, %v685
        %687 = vmatmul.f32.gmra.mxu0 %v643
        %v688 = vpop.f32.mrf.mxu0
        %v689 = vadd.f32 0.0, %v688
        %690 = vdwg.mxu0
        %v691 = vadd.f32 %v610, %v663
        %v692 = vadd.f32 %v611, %v686
        %v693 = vadd.f32 %v612, %v666
        %v694 = vadd.f32 %v613, %v689
        %695 = vrot.lane.b32.xlu0 %v391, 111
        %v696 = vpop.permute.xlu0 %695
        %697 = vrot.lane.b32.xlu0 %v392, 111
        %v698 = vpop.permute.xlu0 %697
        %699 = vrot.lane.b32.xlu0 %v399, 111
        %v700 = vpop.permute.xlu0 %699
        %701 = vrot.lane.b32.xlu0 %v393, 111
        %v702 = vpop.permute.xlu0 %701
        %703 = vrot.lane.b32.xlu0 %v394, 111
        %v704 = vpop.permute.xlu0 %703
        %705 = vrot.lane.b32.xlu0 %v400, 111
        %v706 = vpop.permute.xlu0 %705
        %vm707 = vcmask 908288
        %v708 = vsel %vm707, %v696, %v698
        %v709 = vsel %vm707, %v698, %v700
        %v710 = vsel %vm707, %v702, %v704
        %v711 = vsel %vm707, %v704, %v706
        %v717 = vsel %vm428, %v301, 0
        %v720 = vsel %vm428, %v302, 0
        %722 = vmatpush.msra.mxu0 0.0
        %723 = vmatpush.msra.mxu0 0.0
        %724 = vmatpush.msra.mxu0 0.0
        %725 = vmatpush.msra.mxu0 0.0
        %726 = vmatpush.msra.mxu0 0.0
        %727 = vmatpush.msra.mxu0 0.0
        %728 = vmatpush.msra.mxu0 0.0
        %729 = vmatpush.msra.mxu0 0.0
        %730 = vmatpush.msra.mxu0 0.0
        %731 = vmatpush.msra.mxu0 0.0
        %732 = vmatpush.msra.mxu0 0.0
        %733 = vmatpush.msra.mxu0 0.0
        %734 = vmatpush.msra.mxu0 0.0
        %735 = vmatpush.msra.mxu0 0.0
        %736 = vmatpush.msra.mxu0 %v710
        %737 = vmatpush.msra.mxu0 %v708
        %738 = vmatmul.f32.gmra.mxu0 %v717
        %v739 = vpop.f32.mrf.mxu0
        %v740 = vadd.f32 0.0, %v739
        %741 = vmatmul.f32.gmra.mxu0 %v720
        %v742 = vpop.f32.mrf.mxu0
        %v743 = vadd.f32 0.0, %v742
        %744 = vdwg.mxu0
        %745 = vmatpush.msra.mxu0 0.0
        %746 = vmatpush.msra.mxu0 0.0
        %747 = vmatpush.msra.mxu0 0.0
        %748 = vmatpush.msra.mxu0 0.0
        %749 = vmatpush.msra.mxu0 0.0
        %750 = vmatpush.msra.mxu0 0.0
        %751 = vmatpush.msra.mxu0 0.0
        %752 = vmatpush.msra.mxu0 0.0
        %753 = vmatpush.msra.mxu0 0.0
        %754 = vmatpush.msra.mxu0 0.0
        %755 = vmatpush.msra.mxu0 0.0
        %756 = vmatpush.msra.mxu0 0.0
        %757 = vmatpush.msra.mxu0 0.0
        %758 = vmatpush.msra.mxu0 0.0
        %759 = vmatpush.msra.mxu0 %v711
        %760 = vmatpush.msra.mxu0 %v709
        %761 = vmatmul.f32.gmra.mxu0 %v717
        %v762 = vpop.f32.mrf.mxu0
        %v763 = vadd.f32 0.0, %v762
        %764 = vmatmul.f32.gmra.mxu0 %v720
        %v765 = vpop.f32.mrf.mxu0
        %v766 = vadd.f32 0.0, %v765
        %767 = vdwg.mxu0
        %v768 = vadd.f32 %v691, %v740
        %v769 = vadd.f32 %v692, %v763
        %v770 = vadd.f32 %v693, %v743
        %v771 = vadd.f32 %v694, %v766
        %772 = vrot.lane.b32.xlu0 %v391, 110
        %v773 = vpop.permute.xlu0 %772
        %774 = vrot.lane.b32.xlu0 %v392, 110
        %v775 = vpop.permute.xlu0 %774
        %776 = vrot.lane.b32.xlu0 %v399, 110
        %v777 = vpop.permute.xlu0 %776
        %778 = vrot.lane.b32.xlu0 %v393, 110
        %v779 = vpop.permute.xlu0 %778
        %780 = vrot.lane.b32.xlu0 %v394, 110
        %v781 = vpop.permute.xlu0 %780
        %782 = vrot.lane.b32.xlu0 %v400, 110
        %v783 = vpop.permute.xlu0 %782
        %vm784 = vcmask 900096
        %v785 = vsel %vm784, %v773, %v775
        %v786 = vsel %vm784, %v775, %v777
        %v787 = vsel %vm784, %v779, %v781
        %v788 = vsel %vm784, %v781, %v783
        %v793 = vsel %vm291, %v785, 0.0
        %v794 = vsel %vm292, %v786, 0.0
        %v795 = vsel %vm291, %v787, 0.0
        %v796 = vsel %vm292, %v788, 0.0
        %v798 = vsel %vm428, %v303, 0
        %v801 = vsel %vm428, %v304, 0
        %803 = vmatpush.msra.mxu0 0.0
        %804 = vmatpush.msra.mxu0 0.0
        %805 = vmatpush.msra.mxu0 0.0
        %806 = vmatpush.msra.mxu0 0.0
        %807 = vmatpush.msra.mxu0 0.0
        %808 = vmatpush.msra.mxu0 0.0
        %809 = vmatpush.msra.mxu0 0.0
        %810 = vmatpush.msra.mxu0 0.0
        %811 = vmatpush.msra.mxu0 0.0
        %812 = vmatpush.msra.mxu0 0.0
        %813 = vmatpush.msra.mxu0 0.0
        %814 = vmatpush.msra.mxu0 0.0
        %815 = vmatpush.msra.mxu0 0.0
        %816 = vmatpush.msra.mxu0 0.0
        %817 = vmatpush.msra.mxu0 %v795
        %818 = vmatpush.msra.mxu0 %v793
        %819 = vmatmul.f32.gmra.mxu0 %v798
        %v820 = vpop.f32.mrf.mxu0
        %v821 = vadd.f32 0.0, %v820
        %822 = vmatmul.f32.gmra.mxu0 %v801
        %v823 = vpop.f32.mrf.mxu0
        %v824 = vadd.f32 0.0, %v823
        %825 = vdwg.mxu0
        %826 = vmatpush.msra.mxu0 0.0
        %827 = vmatpush.msra.mxu0 0.0
        %828 = vmatpush.msra.mxu0 0.0
        %829 = vmatpush.msra.mxu0 0.0
        %830 = vmatpush.msra.mxu0 0.0
        %831 = vmatpush.msra.mxu0 0.0
        %832 = vmatpush.msra.mxu0 0.0
        %833 = vmatpush.msra.mxu0 0.0
        %834 = vmatpush.msra.mxu0 0.0
        %835 = vmatpush.msra.mxu0 0.0
        %836 = vmatpush.msra.mxu0 0.0
        %837 = vmatpush.msra.mxu0 0.0
        %838 = vmatpush.msra.mxu0 0.0
        %839 = vmatpush.msra.mxu0 0.0
        %840 = vmatpush.msra.mxu0 %v796
        %841 = vmatpush.msra.mxu0 %v794
        %842 = vmatmul.f32.gmra.mxu0 %v798
        %v843 = vpop.f32.mrf.mxu0
        %v844 = vadd.f32 0.0, %v843
        %845 = vmatmul.f32.gmra.mxu0 %v801
        %v846 = vpop.f32.mrf.mxu0
        %v847 = vadd.f32 0.0, %v846
        %848 = vdwg.mxu0
        %v849 = vadd.f32 %v768, %v821
        %v850 = vadd.f32 %v769, %v844
        %v851 = vadd.f32 %v770, %v824
        %v852 = vadd.f32 %v771, %v847
        %853 = vrot.lane.b32.xlu0 %v391, 96
        %v854 = vpop.permute.xlu0 %853
        %855 = vrot.lane.b32.xlu0 %v392, 96
        %v856 = vpop.permute.xlu0 %855
        %857 = vrot.lane.b32.xlu0 %v399, 96
        %v858 = vpop.permute.xlu0 %857
        %859 = vrot.lane.b32.xlu0 %v393, 96
        %v860 = vpop.permute.xlu0 %859
        %861 = vrot.lane.b32.xlu0 %v394, 96
        %v862 = vpop.permute.xlu0 %861
        %863 = vrot.lane.b32.xlu0 %v400, 96
        %v864 = vpop.permute.xlu0 %863
        %vm865 = vcmask 785408
        %v866 = vsel %vm865, %v854, %v856
        %v867 = vsel %vm865, %v856, %v858
        %v868 = vsel %vm865, %v860, %v862
        %v869 = vsel %vm865, %v862, %v864
        %v874 = vsel %vm289, %v866, 0.0
        %v875 = vsel %vm290, %v867, 0.0
        %v876 = vsel %vm289, %v868, 0.0
        %v877 = vsel %vm290, %v869, 0.0
        %v879 = vsel %vm428, %v305, 0
        %v882 = vsel %vm428, %v306, 0
        %884 = vmatpush.msra.mxu0 0.0
        %885 = vmatpush.msra.mxu0 0.0
        %886 = vmatpush.msra.mxu0 0.0
        %887 = vmatpush.msra.mxu0 0.0
        %888 = vmatpush.msra.mxu0 0.0
        %889 = vmatpush.msra.mxu0 0.0
        %890 = vmatpush.msra.mxu0 0.0
        %891 = vmatpush.msra.mxu0 0.0
        %892 = vmatpush.msra.mxu0 0.0
        %893 = vmatpush.msra.mxu0 0.0
        %894 = vmatpush.msra.mxu0 0.0
        %895 = vmatpush.msra.mxu0 0.0
        %896 = vmatpush.msra.mxu0 0.0
        %897 = vmatpush.msra.mxu0 0.0
        %898 = vmatpush.msra.mxu0 %v876
        %899 = vmatpush.msra.mxu0 %v874
        %900 = vmatmul.f32.gmra.mxu0 %v879
        %v901 = vpop.f32.mrf.mxu0
        %v902 = vadd.f32 0.0, %v901
        %903 = vmatmul.f32.gmra.mxu0 %v882
        %v904 = vpop.f32.mrf.mxu0
        %v905 = vadd.f32 0.0, %v904
        %906 = vdwg.mxu0
        %907 = vmatpush.msra.mxu0 0.0
        %908 = vmatpush.msra.mxu0 0.0
        %909 = vmatpush.msra.mxu0 0.0
        %910 = vmatpush.msra.mxu0 0.0
        %911 = vmatpush.msra.mxu0 0.0
        %912 = vmatpush.msra.mxu0 0.0
        %913 = vmatpush.msra.mxu0 0.0
        %914 = vmatpush.msra.mxu0 0.0
        %915 = vmatpush.msra.mxu0 0.0
        %916 = vmatpush.msra.mxu0 0.0
        %917 = vmatpush.msra.mxu0 0.0
        %918 = vmatpush.msra.mxu0 0.0
        %919 = vmatpush.msra.mxu0 0.0
        %920 = vmatpush.msra.mxu0 0.0
        %921 = vmatpush.msra.mxu0 %v877
        %922 = vmatpush.msra.mxu0 %v875
        %923 = vmatmul.f32.gmra.mxu0 %v879
        %v924 = vpop.f32.mrf.mxu0
        %v925 = vadd.f32 0.0, %v924
        %926 = vmatmul.f32.gmra.mxu0 %v882
        %v927 = vpop.f32.mrf.mxu0
        %v928 = vadd.f32 0.0, %v927
        %929 = vdwg.mxu0
        %v930 = vadd.f32 %v849, %v902
        %v931 = vadd.f32 %v850, %v925
        %v932 = vadd.f32 %v851, %v905
        %v933 = vadd.f32 %v852, %v928
        %934 = vrot.lane.b32.xlu0 %v391, 95
        %v935 = vpop.permute.xlu0 %934
        %936 = vrot.lane.b32.xlu0 %v392, 95
        %v937 = vpop.permute.xlu0 %936
        %938 = vrot.lane.b32.xlu0 %v399, 95
        %v939 = vpop.permute.xlu0 %938
        %940 = vrot.lane.b32.xlu0 %v393, 95
        %v941 = vpop.permute.xlu0 %940
        %942 = vrot.lane.b32.xlu0 %v394, 95
        %v943 = vpop.permute.xlu0 %942
        %944 = vrot.lane.b32.xlu0 %v400, 95
        %v945 = vpop.permute.xlu0 %944
        %vm946 = vcmask 777216
        %v947 = vsel %vm946, %v935, %v937
        %v948 = vsel %vm946, %v937, %v939
        %v949 = vsel %vm946, %v941, %v943
        %v950 = vsel %vm946, %v943, %v945
        %v956 = vsel %vm428, %v307, 0
        %v959 = vsel %vm428, %v308, 0
        %961 = vmatpush.msra.mxu0 0.0
        %962 = vmatpush.msra.mxu0 0.0
        %963 = vmatpush.msra.mxu0 0.0
        %964 = vmatpush.msra.mxu0 0.0
        %965 = vmatpush.msra.mxu0 0.0
        %966 = vmatpush.msra.mxu0 0.0
        %967 = vmatpush.msra.mxu0 0.0
        %968 = vmatpush.msra.mxu0 0.0
        %969 = vmatpush.msra.mxu0 0.0
        %970 = vmatpush.msra.mxu0 0.0
        %971 = vmatpush.msra.mxu0 0.0
        %972 = vmatpush.msra.mxu0 0.0
        %973 = vmatpush.msra.mxu0 0.0
        %974 = vmatpush.msra.mxu0 0.0
        %975 = vmatpush.msra.mxu0 %v949
        %976 = vmatpush.msra.mxu0 %v947
        %977 = vmatmul.f32.gmra.mxu0 %v956
        %v978 = vpop.f32.mrf.mxu0
        %v979 = vadd.f32 0.0, %v978
        %980 = vmatmul.f32.gmra.mxu0 %v959
        %v981 = vpop.f32.mrf.mxu0
        %v982 = vadd.f32 0.0, %v981
        %983 = vdwg.mxu0
        %984 = vmatpush.msra.mxu0 0.0
        %985 = vmatpush.msra.mxu0 0.0
        %986 = vmatpush.msra.mxu0 0.0
        %987 = vmatpush.msra.mxu0 0.0
        %988 = vmatpush.msra.mxu0 0.0
        %989 = vmatpush.msra.mxu0 0.0
        %990 = vmatpush.msra.mxu0 0.0
        %991 = vmatpush.msra.mxu0 0.0
        %992 = vmatpush.msra.mxu0 0.0
        %993 = vmatpush.msra.mxu0 0.0
        %994 = vmatpush.msra.mxu0 0.0
        %995 = vmatpush.msra.mxu0 0.0
        %996 = vmatpush.msra.mxu0 0.0
        %997 = vmatpush.msra.mxu0 0.0
        %998 = vmatpush.msra.mxu0 %v950
        %999 = vmatpush.msra.mxu0 %v948
        %1000 = vmatmul.f32.gmra.mxu0 %v956
        %v1001 = vpop.f32.mrf.mxu0
        %v1002 = vadd.f32 0.0, %v1001
        %1003 = vmatmul.f32.gmra.mxu0 %v959
        %v1004 = vpop.f32.mrf.mxu0
        %v1005 = vadd.f32 0.0, %v1004
        %1006 = vdwg.mxu0
        %v1007 = vadd.f32 %v930, %v979
        %v1008 = vadd.f32 %v931, %v1002
        %v1009 = vadd.f32 %v932, %v982
        %v1010 = vadd.f32 %v933, %v1005
        %1011 = vrot.lane.b32.xlu0 %v391, 94
        %v1012 = vpop.permute.xlu0 %1011
        %1013 = vrot.lane.b32.xlu0 %v392, 94
        %v1014 = vpop.permute.xlu0 %1013
        %1015 = vrot.lane.b32.xlu0 %v399, 94
        %v1016 = vpop.permute.xlu0 %1015
        %1017 = vrot.lane.b32.xlu0 %v393, 94
        %v1018 = vpop.permute.xlu0 %1017
        %1019 = vrot.lane.b32.xlu0 %v394, 94
        %v1020 = vpop.permute.xlu0 %1019
        %1021 = vrot.lane.b32.xlu0 %v400, 94
        %v1022 = vpop.permute.xlu0 %1021
        %vm1023 = vcmask 769024
        %v1024 = vsel %vm1023, %v1012, %v1014
        %v1025 = vsel %vm1023, %v1014, %v1016
        %v1026 = vsel %vm1023, %v1018, %v1020
        %v1027 = vsel %vm1023, %v1020, %v1022
        %v1032 = vsel %vm291, %v1024, 0.0
        %v1033 = vsel %vm292, %v1025, 0.0
        %v1034 = vsel %vm291, %v1026, 0.0
        %v1035 = vsel %vm292, %v1027, 0.0
        %v1037 = vsel %vm428, %v309, 0
        %v1040 = vsel %vm428, %v310, 0
        %1042 = vmatpush.msra.mxu0 0.0
        %1043 = vmatpush.msra.mxu0 0.0
        %1044 = vmatpush.msra.mxu0 0.0
        %1045 = vmatpush.msra.mxu0 0.0
        %1046 = vmatpush.msra.mxu0 0.0
        %1047 = vmatpush.msra.mxu0 0.0
        %1048 = vmatpush.msra.mxu0 0.0
        %1049 = vmatpush.msra.mxu0 0.0
        %1050 = vmatpush.msra.mxu0 0.0
        %1051 = vmatpush.msra.mxu0 0.0
        %1052 = vmatpush.msra.mxu0 0.0
        %1053 = vmatpush.msra.mxu0 0.0
        %1054 = vmatpush.msra.mxu0 0.0
        %1055 = vmatpush.msra.mxu0 0.0
        %1056 = vmatpush.msra.mxu0 %v1034
        %1057 = vmatpush.msra.mxu0 %v1032
        %1058 = vmatmul.f32.gmra.mxu0 %v1037
        %v1059 = vpop.f32.mrf.mxu0
        %v1060 = vadd.f32 0.0, %v1059
        %1061 = vmatmul.f32.gmra.mxu0 %v1040
        %v1062 = vpop.f32.mrf.mxu0
        %v1063 = vadd.f32 0.0, %v1062
        %1064 = vdwg.mxu0
        %1065 = vmatpush.msra.mxu0 0.0
        %1066 = vmatpush.msra.mxu0 0.0
        %1067 = vmatpush.msra.mxu0 0.0
        %1068 = vmatpush.msra.mxu0 0.0
        %1069 = vmatpush.msra.mxu0 0.0
        %1070 = vmatpush.msra.mxu0 0.0
        %1071 = vmatpush.msra.mxu0 0.0
        %1072 = vmatpush.msra.mxu0 0.0
        %1073 = vmatpush.msra.mxu0 0.0
        %1074 = vmatpush.msra.mxu0 0.0
        %1075 = vmatpush.msra.mxu0 0.0
        %1076 = vmatpush.msra.mxu0 0.0
        %1077 = vmatpush.msra.mxu0 0.0
        %1078 = vmatpush.msra.mxu0 0.0
        %1079 = vmatpush.msra.mxu0 %v1035
        %1080 = vmatpush.msra.mxu0 %v1033
        %1081 = vmatmul.f32.gmra.mxu0 %v1037
        %v1082 = vpop.f32.mrf.mxu0
        %v1083 = vadd.f32 0.0, %v1082
        %1084 = vmatmul.f32.gmra.mxu0 %v1040
        %v1085 = vpop.f32.mrf.mxu0
        %v1086 = vadd.f32 0.0, %v1085
        %1087 = vdwg.mxu0
        %v1088 = vadd.f32 %v1007, %v1060
        %v1089 = vadd.f32 %v1008, %v1083
        %v1090 = vadd.f32 %v1009, %v1063
        %v1091 = vadd.f32 %v1010, %v1086
        %1093 = vset.pattern.permute.xlu0 0
        %1094 = vperm.xlu0 %1093, %v311
        %v1095 = vpop.permute.xlu0 %1094
        %1098 = vset.pattern.permute.xlu0 0
        %1099 = vperm.xlu0 %1098, %v312
        %v1100 = vpop.permute.xlu0 %1099
        %v1102 = vadd.f32 %v1088, %v1095
        %v1103 = vadd.f32 %v1089, %v1095
        %v1104 = vadd.f32 %v1090, %v1100
        %v1105 = vadd.f32 %v1091, %v1100
        %v1108 = vrot.slane %v1102, 1
        %v1109 = vrot.slane %v1102, 2
        %v1110 = vrot.slane %v1102, 3
        %v1111 = vrot.slane %v1102, 4
        %v1112 = vrot.slane %v1102, 5
        %v1113 = vrot.slane %v1102, 6
        %v1114 = vrot.slane %v1102, 7
        %v1115 = vrot.slane %v1104, 1
        %v1116 = vrot.slane %v1104, 2
        %v1117 = vrot.slane %v1104, 3
        %v1118 = vrot.slane %v1104, 4
        %v1119 = vrot.slane %v1104, 5
        %v1120 = vrot.slane %v1104, 6
        %v1121 = vrot.slane %v1104, 7
        %vm1136 = vcmask 122880
        %1137 = vst.msk [vmem:[#allocation3] sm:$0x1] %vm1136, %v1102
        %1138 = vst.msk [vmem:[#allocation3 + $0x10] sm:$0x1] %vm1136, %v1108
        %1139 = vst.msk [vmem:[#allocation3 + $0x20] sm:$0x1] %vm1136, %v1109
        %1140 = vst.msk [vmem:[#allocation3 + $0x30] sm:$0x1] %vm1136, %v1110
        %1141 = vst.msk [vmem:[#allocation3 + $0x40] sm:$0x1] %vm1136, %v1111
        %1142 = vst.msk [vmem:[#allocation3 + $0x50] sm:$0x1] %vm1136, %v1112
        %1143 = vst.msk [vmem:[#allocation3 + $0x60] sm:$0x1] %vm1136, %v1113
        %1144 = vst.msk [vmem:[#allocation3 + $0x70] sm:$0x1] %vm1136, %v1114
        %1145 = vst.msk [vmem:[#allocation3 + $0x80] sm:$0x1] %vm1136, %v1104
        %1146 = vst.msk [vmem:[#allocation3 + $0x90] sm:$0x1] %vm1136, %v1115
        %1147 = vst.msk [vmem:[#allocation3 + $0xa0] sm:$0x1] %vm1136, %v1116
        %1148 = vst.msk [vmem:[#allocation3 + $0xb0] sm:$0x1] %vm1136, %v1117
        %1149 = vst.msk [vmem:[#allocation3 + $0xc0] sm:$0x1] %vm1136, %v1118
        %1150 = vst.msk [vmem:[#allocation3 + $0xd0] sm:$0x1] %vm1136, %v1119
        %1151 = vst.msk [vmem:[#allocation3 + $0xe0] sm:$0x1] %vm1136, %v1120
        %1152 = vst.msk [vmem:[#allocation3 + $0xf0] sm:$0x1] %vm1136, %v1121
        %v1153 = vperm.slane %v1102, 0
        %v1154 = vperm.slane %v1108, 0
        %v1155 = vperm.slane %v1109, 0
        %v1156 = vperm.slane %v1110, 0
        %v1157 = vperm.slane %v1111, 0
        %v1158 = vperm.slane %v1112, 0
        %v1159 = vperm.slane %v1113, 0
        %v1160 = vperm.slane %v1114, 0
        %v1161 = vperm.slane %v1104, 0
        %v1162 = vperm.slane %v1115, 0
        %v1163 = vperm.slane %v1116, 0
        %v1164 = vperm.slane %v1117, 0
        %v1165 = vperm.slane %v1118, 0
        %v1166 = vperm.slane %v1119, 0
        %v1167 = vperm.slane %v1120, 0
        %v1168 = vperm.slane %v1121, 0
        %1169 = vrot.lane.b32.xlu0 %v1153, 112
        %v1170 = vpop.permute.xlu0 %1169
        %1171 = vrot.lane.b32.xlu0 %v1154, 112
        %v1172 = vpop.permute.xlu0 %1171
        %1173 = vrot.lane.b32.xlu0 %v1155, 112
        %v1174 = vpop.permute.xlu0 %1173
        %1175 = vrot.lane.b32.xlu0 %v1156, 112
        %v1176 = vpop.permute.xlu0 %1175
        %1177 = vrot.lane.b32.xlu0 %v1157, 112
        %v1178 = vpop.permute.xlu0 %1177
        %1179 = vrot.lane.b32.xlu0 %v1158, 112
        %v1180 = vpop.permute.xlu0 %1179
        %1181 = vrot.lane.b32.xlu0 %v1159, 112
        %v1182 = vpop.permute.xlu0 %1181
        %1183 = vrot.lane.b32.xlu0 %v1160, 112
        %v1184 = vpop.permute.xlu0 %1183
        %1185 = vrot.lane.b32.xlu0 %v1161, 112
        %v1186 = vpop.permute.xlu0 %1185
        %1187 = vrot.lane.b32.xlu0 %v1162, 112
        %v1188 = vpop.permute.xlu0 %1187
        %1189 = vrot.lane.b32.xlu0 %v1163, 112
        %v1190 = vpop.permute.xlu0 %1189
        %1191 = vrot.lane.b32.xlu0 %v1164, 112
        %v1192 = vpop.permute.xlu0 %1191
        %1193 = vrot.lane.b32.xlu0 %v1165, 112
        %v1194 = vpop.permute.xlu0 %1193
        %1195 = vrot.lane.b32.xlu0 %v1166, 112
        %v1196 = vpop.permute.xlu0 %1195
        %1197 = vrot.lane.b32.xlu0 %v1167, 112
        %v1198 = vpop.permute.xlu0 %1197
        %1199 = vrot.lane.b32.xlu0 %v1168, 112
        %v1200 = vpop.permute.xlu0 %1199
        %1217 = vst.msk [vmem:[#allocation3 + $0x1] sm:$0x1] %vm1136, %v1170
        %1218 = vst.msk [vmem:[#allocation3 + $0x11] sm:$0x1] %vm1136, %v1172
        %1219 = vst.msk [vmem:[#allocation3 + $0x21] sm:$0x1] %vm1136, %v1174
        %1220 = vst.msk [vmem:[#allocation3 + $0x31] sm:$0x1] %vm1136, %v1176
        %1221 = vst.msk [vmem:[#allocation3 + $0x41] sm:$0x1] %vm1136, %v1178
        %1222 = vst.msk [vmem:[#allocation3 + $0x51] sm:$0x1] %vm1136, %v1180
        %1223 = vst.msk [vmem:[#allocation3 + $0x61] sm:$0x1] %vm1136, %v1182
        %1224 = vst.msk [vmem:[#allocation3 + $0x71] sm:$0x1] %vm1136, %v1184
        %1225 = vst.msk [vmem:[#allocation3 + $0x81] sm:$0x1] %vm1136, %v1186
        %1226 = vst.msk [vmem:[#allocation3 + $0x91] sm:$0x1] %vm1136, %v1188
        %1227 = vst.msk [vmem:[#allocation3 + $0xa1] sm:$0x1] %vm1136, %v1190
        %1228 = vst.msk [vmem:[#allocation3 + $0xb1] sm:$0x1] %vm1136, %v1192
        %1229 = vst.msk [vmem:[#allocation3 + $0xc1] sm:$0x1] %vm1136, %v1194
        %1230 = vst.msk [vmem:[#allocation3 + $0xd1] sm:$0x1] %vm1136, %v1196
        %1231 = vst.msk [vmem:[#allocation3 + $0xe1] sm:$0x1] %vm1136, %v1198
        %1232 = vst.msk [vmem:[#allocation3 + $0xf1] sm:$0x1] %vm1136, %v1200
        %1233 = vrot.lane.b32.xlu0 %v1153, 96
        %v1234 = vpop.permute.xlu0 %1233
        %1235 = vrot.lane.b32.xlu0 %v1154, 96
        %v1236 = vpop.permute.xlu0 %1235
        %1237 = vrot.lane.b32.xlu0 %v1155, 96
        %v1238 = vpop.permute.xlu0 %1237
        %1239 = vrot.lane.b32.xlu0 %v1156, 96
        %v1240 = vpop.permute.xlu0 %1239
        %1241 = vrot.lane.b32.xlu0 %v1157, 96
        %v1242 = vpop.permute.xlu0 %1241
        %1243 = vrot.lane.b32.xlu0 %v1158, 96
        %v1244 = vpop.permute.xlu0 %1243
        %1245 = vrot.lane.b32.xlu0 %v1159, 96
        %v1246 = vpop.permute.xlu0 %1245
        %1247 = vrot.lane.b32.xlu0 %v1160, 96
        %v1248 = vpop.permute.xlu0 %1247
        %1249 = vrot.lane.b32.xlu0 %v1161, 96
        %v1250 = vpop.permute.xlu0 %1249
        %1251 = vrot.lane.b32.xlu0 %v1162, 96
        %v1252 = vpop.permute.xlu0 %1251
        %1253 = vrot.lane.b32.xlu0 %v1163, 96
        %v1254 = vpop.permute.xlu0 %1253
        %1255 = vrot.lane.b32.xlu0 %v1164, 96
        %v1256 = vpop.permute.xlu0 %1255
        %1257 = vrot.lane.b32.xlu0 %v1165, 96
        %v1258 = vpop.permute.xlu0 %1257
        %1259 = vrot.lane.b32.xlu0 %v1166, 96
        %v1260 = vpop.permute.xlu0 %1259
        %1261 = vrot.lane.b32.xlu0 %v1167, 96
        %v1262 = vpop.permute.xlu0 %1261
        %1263 = vrot.lane.b32.xlu0 %v1168, 96
        %v1264 = vpop.permute.xlu0 %1263
        %1281 = vst.msk [vmem:[#allocation3 + $0x2] sm:$0x1] %vm1136, %v1234
        %1282 = vst.msk [vmem:[#allocation3 + $0x12] sm:$0x1] %vm1136, %v1236
        %1283 = vst.msk [vmem:[#allocation3 + $0x22] sm:$0x1] %vm1136, %v1238
        %1284 = vst.msk [vmem:[#allocation3 + $0x32] sm:$0x1] %vm1136, %v1240
        %1285 = vst.msk [vmem:[#allocation3 + $0x42] sm:$0x1] %vm1136, %v1242
        %1286 = vst.msk [vmem:[#allocation3 + $0x52] sm:$0x1] %vm1136, %v1244
        %1287 = vst.msk [vmem:[#allocation3 + $0x62] sm:$0x1] %vm1136, %v1246
        %1288 = vst.msk [vmem:[#allocation3 + $0x72] sm:$0x1] %vm1136, %v1248
        %1289 = vst.msk [vmem:[#allocation3 + $0x82] sm:$0x1] %vm1136, %v1250
        %1290 = vst.msk [vmem:[#allocation3 + $0x92] sm:$0x1] %vm1136, %v1252
        %1291 = vst.msk [vmem:[#allocation3 + $0xa2] sm:$0x1] %vm1136, %v1254
        %1292 = vst.msk [vmem:[#allocation3 + $0xb2] sm:$0x1] %vm1136, %v1256
        %1293 = vst.msk [vmem:[#allocation3 + $0xc2] sm:$0x1] %vm1136, %v1258
        %1294 = vst.msk [vmem:[#allocation3 + $0xd2] sm:$0x1] %vm1136, %v1260
        %1295 = vst.msk [vmem:[#allocation3 + $0xe2] sm:$0x1] %vm1136, %v1262
        %1296 = vst.msk [vmem:[#allocation3 + $0xf2] sm:$0x1] %vm1136, %v1264
        %1297 = vrot.lane.b32.xlu0 %v1153, 80
        %v1298 = vpop.permute.xlu0 %1297
        %1299 = vrot.lane.b32.xlu0 %v1154, 80
        %v1300 = vpop.permute.xlu0 %1299
        %1301 = vrot.lane.b32.xlu0 %v1155, 80
        %v1302 = vpop.permute.xlu0 %1301
        %1303 = vrot.lane.b32.xlu0 %v1156, 80
        %v1304 = vpop.permute.xlu0 %1303
        %1305 = vrot.lane.b32.xlu0 %v1157, 80
        %v1306 = vpop.permute.xlu0 %1305
        %1307 = vrot.lane.b32.xlu0 %v1158, 80
        %v1308 = vpop.permute.xlu0 %1307
        %1309 = vrot.lane.b32.xlu0 %v1159, 80
        %v1310 = vpop.permute.xlu0 %1309
        %1311 = vrot.lane.b32.xlu0 %v1160, 80
        %v1312 = vpop.permute.xlu0 %1311
        %1313 = vrot.lane.b32.xlu0 %v1161, 80
        %v1314 = vpop.permute.xlu0 %1313
        %1315 = vrot.lane.b32.xlu0 %v1162, 80
        %v1316 = vpop.permute.xlu0 %1315
        %1317 = vrot.lane.b32.xlu0 %v1163, 80
        %v1318 = vpop.permute.xlu0 %1317
        %1319 = vrot.lane.b32.xlu0 %v1164, 80
        %v1320 = vpop.permute.xlu0 %1319
        %1321 = vrot.lane.b32.xlu0 %v1165, 80
        %v1322 = vpop.permute.xlu0 %1321
        %1323 = vrot.lane.b32.xlu0 %v1166, 80
        %v1324 = vpop.permute.xlu0 %1323
        %1325 = vrot.lane.b32.xlu0 %v1167, 80
        %v1326 = vpop.permute.xlu0 %1325
        %1327 = vrot.lane.b32.xlu0 %v1168, 80
        %v1328 = vpop.permute.xlu0 %1327
        %1345 = vst.msk [vmem:[#allocation3 + $0x3] sm:$0x1] %vm1136, %v1298
        %1346 = vst.msk [vmem:[#allocation3 + $0x13] sm:$0x1] %vm1136, %v1300
        %1347 = vst.msk [vmem:[#allocation3 + $0x23] sm:$0x1] %vm1136, %v1302
        %1348 = vst.msk [vmem:[#allocation3 + $0x33] sm:$0x1] %vm1136, %v1304
        %1349 = vst.msk [vmem:[#allocation3 + $0x43] sm:$0x1] %vm1136, %v1306
        %1350 = vst.msk [vmem:[#allocation3 + $0x53] sm:$0x1] %vm1136, %v1308
        %1351 = vst.msk [vmem:[#allocation3 + $0x63] sm:$0x1] %vm1136, %v1310
        %1352 = vst.msk [vmem:[#allocation3 + $0x73] sm:$0x1] %vm1136, %v1312
        %1353 = vst.msk [vmem:[#allocation3 + $0x83] sm:$0x1] %vm1136, %v1314
        %1354 = vst.msk [vmem:[#allocation3 + $0x93] sm:$0x1] %vm1136, %v1316
        %1355 = vst.msk [vmem:[#allocation3 + $0xa3] sm:$0x1] %vm1136, %v1318
        %1356 = vst.msk [vmem:[#allocation3 + $0xb3] sm:$0x1] %vm1136, %v1320
        %1357 = vst.msk [vmem:[#allocation3 + $0xc3] sm:$0x1] %vm1136, %v1322
        %1358 = vst.msk [vmem:[#allocation3 + $0xd3] sm:$0x1] %vm1136, %v1324
        %1359 = vst.msk [vmem:[#allocation3 + $0xe3] sm:$0x1] %vm1136, %v1326
        %1360 = vst.msk [vmem:[#allocation3 + $0xf3] sm:$0x1] %vm1136, %v1328
        %1361 = vrot.lane.b32.xlu0 %v1153, 64
        %v1362 = vpop.permute.xlu0 %1361
        %1363 = vrot.lane.b32.xlu0 %v1154, 64
        %v1364 = vpop.permute.xlu0 %1363
        %1365 = vrot.lane.b32.xlu0 %v1155, 64
        %v1366 = vpop.permute.xlu0 %1365
        %1367 = vrot.lane.b32.xlu0 %v1156, 64
        %v1368 = vpop.permute.xlu0 %1367
        %1369 = vrot.lane.b32.xlu0 %v1157, 64
        %v1370 = vpop.permute.xlu0 %1369
        %1371 = vrot.lane.b32.xlu0 %v1158, 64
        %v1372 = vpop.permute.xlu0 %1371
        %1373 = vrot.lane.b32.xlu0 %v1159, 64
        %v1374 = vpop.permute.xlu0 %1373
        %1375 = vrot.lane.b32.xlu0 %v1160, 64
        %v1376 = vpop.permute.xlu0 %1375
        %1377 = vrot.lane.b32.xlu0 %v1161, 64
        %v1378 = vpop.permute.xlu0 %1377
        %1379 = vrot.lane.b32.xlu0 %v1162, 64
        %v1380 = vpop.permute.xlu0 %1379
        %1381 = vrot.lane.b32.xlu0 %v1163, 64
        %v1382 = vpop.permute.xlu0 %1381
        %1383 = vrot.lane.b32.xlu0 %v1164, 64
        %v1384 = vpop.permute.xlu0 %1383
        %1385 = vrot.lane.b32.xlu0 %v1165, 64
        %v1386 = vpop.permute.xlu0 %1385
        %1387 = vrot.lane.b32.xlu0 %v1166, 64
        %v1388 = vpop.permute.xlu0 %1387
        %1389 = vrot.lane.b32.xlu0 %v1167, 64
        %v1390 = vpop.permute.xlu0 %1389
        %1391 = vrot.lane.b32.xlu0 %v1168, 64
        %v1392 = vpop.permute.xlu0 %1391
        %1409 = vst.msk [vmem:[#allocation3 + $0x4] sm:$0x1] %vm1136, %v1362
        %1410 = vst.msk [vmem:[#allocation3 + $0x14] sm:$0x1] %vm1136, %v1364
        %1411 = vst.msk [vmem:[#allocation3 + $0x24] sm:$0x1] %vm1136, %v1366
        %1412 = vst.msk [vmem:[#allocation3 + $0x34] sm:$0x1] %vm1136, %v1368
        %1413 = vst.msk [vmem:[#allocation3 + $0x44] sm:$0x1] %vm1136, %v1370
        %1414 = vst.msk [vmem:[#allocation3 + $0x54] sm:$0x1] %vm1136, %v1372
        %1415 = vst.msk [vmem:[#allocation3 + $0x64] sm:$0x1] %vm1136, %v1374
        %1416 = vst.msk [vmem:[#allocation3 + $0x74] sm:$0x1] %vm1136, %v1376
        %1417 = vst.msk [vmem:[#allocation3 + $0x84] sm:$0x1] %vm1136, %v1378
        %1418 = vst.msk [vmem:[#allocation3 + $0x94] sm:$0x1] %vm1136, %v1380
        %1419 = vst.msk [vmem:[#allocation3 + $0xa4] sm:$0x1] %vm1136, %v1382
        %1420 = vst.msk [vmem:[#allocation3 + $0xb4] sm:$0x1] %vm1136, %v1384
        %1421 = vst.msk [vmem:[#allocation3 + $0xc4] sm:$0x1] %vm1136, %v1386
        %1422 = vst.msk [vmem:[#allocation3 + $0xd4] sm:$0x1] %vm1136, %v1388
        %1423 = vst.msk [vmem:[#allocation3 + $0xe4] sm:$0x1] %vm1136, %v1390
        %1424 = vst.msk [vmem:[#allocation3 + $0xf4] sm:$0x1] %vm1136, %v1392
        %1425 = vrot.lane.b32.xlu0 %v1153, 48
        %v1426 = vpop.permute.xlu0 %1425
        %1427 = vrot.lane.b32.xlu0 %v1154, 48
        %v1428 = vpop.permute.xlu0 %1427
        %1429 = vrot.lane.b32.xlu0 %v1155, 48
        %v1430 = vpop.permute.xlu0 %1429
        %1431 = vrot.lane.b32.xlu0 %v1156, 48
        %v1432 = vpop.permute.xlu0 %1431
        %1433 = vrot.lane.b32.xlu0 %v1157, 48
        %v1434 = vpop.permute.xlu0 %1433
        %1435 = vrot.lane.b32.xlu0 %v1158, 48
        %v1436 = vpop.permute.xlu0 %1435
        %1437 = vrot.lane.b32.xlu0 %v1159, 48
        %v1438 = vpop.permute.xlu0 %1437
        %1439 = vrot.lane.b32.xlu0 %v1160, 48
        %v1440 = vpop.permute.xlu0 %1439
        %1441 = vrot.lane.b32.xlu0 %v1161, 48
        %v1442 = vpop.permute.xlu0 %1441
        %1443 = vrot.lane.b32.xlu0 %v1162, 48
        %v1444 = vpop.permute.xlu0 %1443
        %1445 = vrot.lane.b32.xlu0 %v1163, 48
        %v1446 = vpop.permute.xlu0 %1445
        %1447 = vrot.lane.b32.xlu0 %v1164, 48
        %v1448 = vpop.permute.xlu0 %1447
        %1449 = vrot.lane.b32.xlu0 %v1165, 48
        %v1450 = vpop.permute.xlu0 %1449
        %1451 = vrot.lane.b32.xlu0 %v1166, 48
        %v1452 = vpop.permute.xlu0 %1451
        %1453 = vrot.lane.b32.xlu0 %v1167, 48
        %v1454 = vpop.permute.xlu0 %1453
        %1455 = vrot.lane.b32.xlu0 %v1168, 48
        %v1456 = vpop.permute.xlu0 %1455
        %1473 = vst.msk [vmem:[#allocation3 + $0x5] sm:$0x1] %vm1136, %v1426
        %1474 = vst.msk [vmem:[#allocation3 + $0x15] sm:$0x1] %vm1136, %v1428
        %1475 = vst.msk [vmem:[#allocation3 + $0x25] sm:$0x1] %vm1136, %v1430
        %1476 = vst.msk [vmem:[#allocation3 + $0x35] sm:$0x1] %vm1136, %v1432
        %1477 = vst.msk [vmem:[#allocation3 + $0x45] sm:$0x1] %vm1136, %v1434
        %1478 = vst.msk [vmem:[#allocation3 + $0x55] sm:$0x1] %vm1136, %v1436
        %1479 = vst.msk [vmem:[#allocation3 + $0x65] sm:$0x1] %vm1136, %v1438
        %1480 = vst.msk [vmem:[#allocation3 + $0x75] sm:$0x1] %vm1136, %v1440
        %1481 = vst.msk [vmem:[#allocation3 + $0x85] sm:$0x1] %vm1136, %v1442
        %1482 = vst.msk [vmem:[#allocation3 + $0x95] sm:$0x1] %vm1136, %v1444
        %1483 = vst.msk [vmem:[#allocation3 + $0xa5] sm:$0x1] %vm1136, %v1446
        %1484 = vst.msk [vmem:[#allocation3 + $0xb5] sm:$0x1] %vm1136, %v1448
        %1485 = vst.msk [vmem:[#allocation3 + $0xc5] sm:$0x1] %vm1136, %v1450
        %1486 = vst.msk [vmem:[#allocation3 + $0xd5] sm:$0x1] %vm1136, %v1452
        %1487 = vst.msk [vmem:[#allocation3 + $0xe5] sm:$0x1] %vm1136, %v1454
        %1488 = vst.msk [vmem:[#allocation3 + $0xf5] sm:$0x1] %vm1136, %v1456
        %1489 = vrot.lane.b32.xlu0 %v1153, 32
        %v1490 = vpop.permute.xlu0 %1489
        %1491 = vrot.lane.b32.xlu0 %v1154, 32
        %v1492 = vpop.permute.xlu0 %1491
        %1493 = vrot.lane.b32.xlu0 %v1155, 32
        %v1494 = vpop.permute.xlu0 %1493
        %1495 = vrot.lane.b32.xlu0 %v1156, 32
        %v1496 = vpop.permute.xlu0 %1495
        %1497 = vrot.lane.b32.xlu0 %v1157, 32
        %v1498 = vpop.permute.xlu0 %1497
        %1499 = vrot.lane.b32.xlu0 %v1158, 32
        %v1500 = vpop.permute.xlu0 %1499
        %1501 = vrot.lane.b32.xlu0 %v1159, 32
        %v1502 = vpop.permute.xlu0 %1501
        %1503 = vrot.lane.b32.xlu0 %v1160, 32
        %v1504 = vpop.permute.xlu0 %1503
        %1505 = vrot.lane.b32.xlu0 %v1161, 32
        %v1506 = vpop.permute.xlu0 %1505
        %1507 = vrot.lane.b32.xlu0 %v1162, 32
        %v1508 = vpop.permute.xlu0 %1507
        %1509 = vrot.lane.b32.xlu0 %v1163, 32
        %v1510 = vpop.permute.xlu0 %1509
        %1511 = vrot.lane.b32.xlu0 %v1164, 32
        %v1512 = vpop.permute.xlu0 %1511
        %1513 = vrot.lane.b32.xlu0 %v1165, 32
        %v1514 = vpop.permute.xlu0 %1513
        %1515 = vrot.lane.b32.xlu0 %v1166, 32
        %v1516 = vpop.permute.xlu0 %1515
        %1517 = vrot.lane.b32.xlu0 %v1167, 32
        %v1518 = vpop.permute.xlu0 %1517
        %1519 = vrot.lane.b32.xlu0 %v1168, 32
        %v1520 = vpop.permute.xlu0 %1519
        %1537 = vst.msk [vmem:[#allocation3 + $0x6] sm:$0x1] %vm1136, %v1490
        %1538 = vst.msk [vmem:[#allocation3 + $0x16] sm:$0x1] %vm1136, %v1492
        %1539 = vst.msk [vmem:[#allocation3 + $0x26] sm:$0x1] %vm1136, %v1494
        %1540 = vst.msk [vmem:[#allocation3 + $0x36] sm:$0x1] %vm1136, %v1496
        %1541 = vst.msk [vmem:[#allocation3 + $0x46] sm:$0x1] %vm1136, %v1498
        %1542 = vst.msk [vmem:[#allocation3 + $0x56] sm:$0x1] %vm1136, %v1500
        %1543 = vst.msk [vmem:[#allocation3 + $0x66] sm:$0x1] %vm1136, %v1502
        %1544 = vst.msk [vmem:[#allocation3 + $0x76] sm:$0x1] %vm1136, %v1504
        %1545 = vst.msk [vmem:[#allocation3 + $0x86] sm:$0x1] %vm1136, %v1506
        %1546 = vst.msk [vmem:[#allocation3 + $0x96] sm:$0x1] %vm1136, %v1508
        %1547 = vst.msk [vmem:[#allocation3 + $0xa6] sm:$0x1] %vm1136, %v1510
        %1548 = vst.msk [vmem:[#allocation3 + $0xb6] sm:$0x1] %vm1136, %v1512
        %1549 = vst.msk [vmem:[#allocation3 + $0xc6] sm:$0x1] %vm1136, %v1514
        %1550 = vst.msk [vmem:[#allocation3 + $0xd6] sm:$0x1] %vm1136, %v1516
        %1551 = vst.msk [vmem:[#allocation3 + $0xe6] sm:$0x1] %vm1136, %v1518
        %1552 = vst.msk [vmem:[#allocation3 + $0xf6] sm:$0x1] %vm1136, %v1520
        %1553 = vrot.lane.b32.xlu0 %v1153, 16
        %v1554 = vpop.permute.xlu0 %1553
        %1555 = vrot.lane.b32.xlu0 %v1154, 16
        %v1556 = vpop.permute.xlu0 %1555
        %1557 = vrot.lane.b32.xlu0 %v1155, 16
        %v1558 = vpop.permute.xlu0 %1557
        %1559 = vrot.lane.b32.xlu0 %v1156, 16
        %v1560 = vpop.permute.xlu0 %1559
        %1561 = vrot.lane.b32.xlu0 %v1157, 16
        %v1562 = vpop.permute.xlu0 %1561
        %1563 = vrot.lane.b32.xlu0 %v1158, 16
        %v1564 = vpop.permute.xlu0 %1563
        %1565 = vrot.lane.b32.xlu0 %v1159, 16
        %v1566 = vpop.permute.xlu0 %1565
        %1567 = vrot.lane.b32.xlu0 %v1160, 16
        %v1568 = vpop.permute.xlu0 %1567
        %1569 = vrot.lane.b32.xlu0 %v1161, 16
        %v1570 = vpop.permute.xlu0 %1569
        %1571 = vrot.lane.b32.xlu0 %v1162, 16
        %v1572 = vpop.permute.xlu0 %1571
        %1573 = vrot.lane.b32.xlu0 %v1163, 16
        %v1574 = vpop.permute.xlu0 %1573
        %1575 = vrot.lane.b32.xlu0 %v1164, 16
        %v1576 = vpop.permute.xlu0 %1575
        %1577 = vrot.lane.b32.xlu0 %v1165, 16
        %v1578 = vpop.permute.xlu0 %1577
        %1579 = vrot.lane.b32.xlu0 %v1166, 16
        %v1580 = vpop.permute.xlu0 %1579
        %1581 = vrot.lane.b32.xlu0 %v1167, 16
        %v1582 = vpop.permute.xlu0 %1581
        %1583 = vrot.lane.b32.xlu0 %v1168, 16
        %v1584 = vpop.permute.xlu0 %1583
        %1601 = vst.msk [vmem:[#allocation3 + $0x7] sm:$0x1] %vm1136, %v1554
        %1602 = vst.msk [vmem:[#allocation3 + $0x17] sm:$0x1] %vm1136, %v1556
        %1603 = vst.msk [vmem:[#allocation3 + $0x27] sm:$0x1] %vm1136, %v1558
        %1604 = vst.msk [vmem:[#allocation3 + $0x37] sm:$0x1] %vm1136, %v1560
        %1605 = vst.msk [vmem:[#allocation3 + $0x47] sm:$0x1] %vm1136, %v1562
        %1606 = vst.msk [vmem:[#allocation3 + $0x57] sm:$0x1] %vm1136, %v1564
        %1607 = vst.msk [vmem:[#allocation3 + $0x67] sm:$0x1] %vm1136, %v1566
        %1608 = vst.msk [vmem:[#allocation3 + $0x77] sm:$0x1] %vm1136, %v1568
        %1609 = vst.msk [vmem:[#allocation3 + $0x87] sm:$0x1] %vm1136, %v1570
        %1610 = vst.msk [vmem:[#allocation3 + $0x97] sm:$0x1] %vm1136, %v1572
        %1611 = vst.msk [vmem:[#allocation3 + $0xa7] sm:$0x1] %vm1136, %v1574
        %1612 = vst.msk [vmem:[#allocation3 + $0xb7] sm:$0x1] %vm1136, %v1576
        %1613 = vst.msk [vmem:[#allocation3 + $0xc7] sm:$0x1] %vm1136, %v1578
        %1614 = vst.msk [vmem:[#allocation3 + $0xd7] sm:$0x1] %vm1136, %v1580
        %1615 = vst.msk [vmem:[#allocation3 + $0xe7] sm:$0x1] %vm1136, %v1582
        %1616 = vst.msk [vmem:[#allocation3 + $0xf7] sm:$0x1] %vm1136, %v1584
        %v1619 = vrot.slane %v1103, 1
        %v1620 = vrot.slane %v1103, 2
        %v1621 = vrot.slane %v1103, 3
        %v1622 = vrot.slane %v1103, 4
        %v1623 = vrot.slane %v1103, 5
        %v1624 = vrot.slane %v1103, 6
        %v1625 = vrot.slane %v1103, 7
        %v1626 = vrot.slane %v1105, 1
        %v1627 = vrot.slane %v1105, 2
        %v1628 = vrot.slane %v1105, 3
        %v1629 = vrot.slane %v1105, 4
        %v1630 = vrot.slane %v1105, 5
        %v1631 = vrot.slane %v1105, 6
        %v1632 = vrot.slane %v1105, 7
        %1647 = vst.msk [vmem:[#allocation3 + $0x8] sm:$0x1] %vm1136, %v1103
        %1648 = vst.msk [vmem:[#allocation3 + $0x18] sm:$0x1] %vm1136, %v1619
        %1649 = vst.msk [vmem:[#allocation3 + $0x28] sm:$0x1] %vm1136, %v1620
        %1650 = vst.msk [vmem:[#allocation3 + $0x38] sm:$0x1] %vm1136, %v1621
        %1651 = vst.msk [vmem:[#allocation3 + $0x48] sm:$0x1] %vm1136, %v1622
        %1652 = vst.msk [vmem:[#allocation3 + $0x58] sm:$0x1] %vm1136, %v1623
        %1653 = vst.msk [vmem:[#allocation3 + $0x68] sm:$0x1] %vm1136, %v1624
        %1654 = vst.msk [vmem:[#allocation3 + $0x78] sm:$0x1] %vm1136, %v1625
        %1655 = vst.msk [vmem:[#allocation3 + $0x88] sm:$0x1] %vm1136, %v1105
        %1656 = vst.msk [vmem:[#allocation3 + $0x98] sm:$0x1] %vm1136, %v1626
        %1657 = vst.msk [vmem:[#allocation3 + $0xa8] sm:$0x1] %vm1136, %v1627
        %1658 = vst.msk [vmem:[#allocation3 + $0xb8] sm:$0x1] %vm1136, %v1628
        %1659 = vst.msk [vmem:[#allocation3 + $0xc8] sm:$0x1] %vm1136, %v1629
        %1660 = vst.msk [vmem:[#allocation3 + $0xd8] sm:$0x1] %vm1136, %v1630
        %1661 = vst.msk [vmem:[#allocation3 + $0xe8] sm:$0x1] %vm1136, %v1631
        %1662 = vst.msk [vmem:[#allocation3 + $0xf8] sm:$0x1] %vm1136, %v1632
        %v1663 = vperm.slane %v1103, 0
        %v1664 = vperm.slane %v1619, 0
        %v1665 = vperm.slane %v1620, 0
        %v1666 = vperm.slane %v1621, 0
        %v1667 = vperm.slane %v1622, 0
        %v1668 = vperm.slane %v1623, 0
        %v1669 = vperm.slane %v1624, 0
        %v1670 = vperm.slane %v1625, 0
        %v1671 = vperm.slane %v1105, 0
        %v1672 = vperm.slane %v1626, 0
        %v1673 = vperm.slane %v1627, 0
        %v1674 = vperm.slane %v1628, 0
        %v1675 = vperm.slane %v1629, 0
        %v1676 = vperm.slane %v1630, 0
        %v1677 = vperm.slane %v1631, 0
        %v1678 = vperm.slane %v1632, 0
        %1679 = vrot.lane.b32.xlu0 %v1663, 112
        %v1680 = vpop.permute.xlu0 %1679
        %1681 = vrot.lane.b32.xlu0 %v1664, 112
        %v1682 = vpop.permute.xlu0 %1681
        %1683 = vrot.lane.b32.xlu0 %v1665, 112
        %v1684 = vpop.permute.xlu0 %1683
        %1685 = vrot.lane.b32.xlu0 %v1666, 112
        %v1686 = vpop.permute.xlu0 %1685
        %1687 = vrot.lane.b32.xlu0 %v1667, 112
        %v1688 = vpop.permute.xlu0 %1687
        %1689 = vrot.lane.b32.xlu0 %v1668, 112
        %v1690 = vpop.permute.xlu0 %1689
        %1691 = vrot.lane.b32.xlu0 %v1669, 112
        %v1692 = vpop.permute.xlu0 %1691
        %1693 = vrot.lane.b32.xlu0 %v1670, 112
        %v1694 = vpop.permute.xlu0 %1693
        %1695 = vrot.lane.b32.xlu0 %v1671, 112
        %v1696 = vpop.permute.xlu0 %1695
        %1697 = vrot.lane.b32.xlu0 %v1672, 112
        %v1698 = vpop.permute.xlu0 %1697
        %1699 = vrot.lane.b32.xlu0 %v1673, 112
        %v1700 = vpop.permute.xlu0 %1699
        %1701 = vrot.lane.b32.xlu0 %v1674, 112
        %v1702 = vpop.permute.xlu0 %1701
        %1703 = vrot.lane.b32.xlu0 %v1675, 112
        %v1704 = vpop.permute.xlu0 %1703
        %1705 = vrot.lane.b32.xlu0 %v1676, 112
        %v1706 = vpop.permute.xlu0 %1705
        %1707 = vrot.lane.b32.xlu0 %v1677, 112
        %v1708 = vpop.permute.xlu0 %1707
        %1709 = vrot.lane.b32.xlu0 %v1678, 112
        %v1710 = vpop.permute.xlu0 %1709
        %1727 = vst.msk [vmem:[#allocation3 + $0x9] sm:$0x1] %vm1136, %v1680
        %1728 = vst.msk [vmem:[#allocation3 + $0x19] sm:$0x1] %vm1136, %v1682
        %1729 = vst.msk [vmem:[#allocation3 + $0x29] sm:$0x1] %vm1136, %v1684
        %1730 = vst.msk [vmem:[#allocation3 + $0x39] sm:$0x1] %vm1136, %v1686
        %1731 = vst.msk [vmem:[#allocation3 + $0x49] sm:$0x1] %vm1136, %v1688
        %1732 = vst.msk [vmem:[#allocation3 + $0x59] sm:$0x1] %vm1136, %v1690
        %1733 = vst.msk [vmem:[#allocation3 + $0x69] sm:$0x1] %vm1136, %v1692
        %1734 = vst.msk [vmem:[#allocation3 + $0x79] sm:$0x1] %vm1136, %v1694
        %1735 = vst.msk [vmem:[#allocation3 + $0x89] sm:$0x1] %vm1136, %v1696
        %1736 = vst.msk [vmem:[#allocation3 + $0x99] sm:$0x1] %vm1136, %v1698
        %1737 = vst.msk [vmem:[#allocation3 + $0xa9] sm:$0x1] %vm1136, %v1700
        %1738 = vst.msk [vmem:[#allocation3 + $0xb9] sm:$0x1] %vm1136, %v1702
        %1739 = vst.msk [vmem:[#allocation3 + $0xc9] sm:$0x1] %vm1136, %v1704
        %1740 = vst.msk [vmem:[#allocation3 + $0xd9] sm:$0x1] %vm1136, %v1706
        %1741 = vst.msk [vmem:[#allocation3 + $0xe9] sm:$0x1] %vm1136, %v1708
        %1742 = vst.msk [vmem:[#allocation3 + $0xf9] sm:$0x1] %vm1136, %v1710
        %1743 = vrot.lane.b32.xlu0 %v1663, 96
        %v1744 = vpop.permute.xlu0 %1743
        %1745 = vrot.lane.b32.xlu0 %v1664, 96
        %v1746 = vpop.permute.xlu0 %1745
        %1747 = vrot.lane.b32.xlu0 %v1665, 96
        %v1748 = vpop.permute.xlu0 %1747
        %1749 = vrot.lane.b32.xlu0 %v1666, 96
        %v1750 = vpop.permute.xlu0 %1749
        %1751 = vrot.lane.b32.xlu0 %v1667, 96
        %v1752 = vpop.permute.xlu0 %1751
        %1753 = vrot.lane.b32.xlu0 %v1668, 96
        %v1754 = vpop.permute.xlu0 %1753
        %1755 = vrot.lane.b32.xlu0 %v1669, 96
        %v1756 = vpop.permute.xlu0 %1755
        %1757 = vrot.lane.b32.xlu0 %v1670, 96
        %v1758 = vpop.permute.xlu0 %1757
        %1759 = vrot.lane.b32.xlu0 %v1671, 96
        %v1760 = vpop.permute.xlu0 %1759
        %1761 = vrot.lane.b32.xlu0 %v1672, 96
        %v1762 = vpop.permute.xlu0 %1761
        %1763 = vrot.lane.b32.xlu0 %v1673, 96
        %v1764 = vpop.permute.xlu0 %1763
        %1765 = vrot.lane.b32.xlu0 %v1674, 96
        %v1766 = vpop.permute.xlu0 %1765
        %1767 = vrot.lane.b32.xlu0 %v1675, 96
        %v1768 = vpop.permute.xlu0 %1767
        %1769 = vrot.lane.b32.xlu0 %v1676, 96
        %v1770 = vpop.permute.xlu0 %1769
        %1771 = vrot.lane.b32.xlu0 %v1677, 96
        %v1772 = vpop.permute.xlu0 %1771
        %1773 = vrot.lane.b32.xlu0 %v1678, 96
        %v1774 = vpop.permute.xlu0 %1773
        %1791 = vst.msk [vmem:[#allocation3 + $0xa] sm:$0x1] %vm1136, %v1744
        %1792 = vst.msk [vmem:[#allocation3 + $0x1a] sm:$0x1] %vm1136, %v1746
        %1793 = vst.msk [vmem:[#allocation3 + $0x2a] sm:$0x1] %vm1136, %v1748
        %1794 = vst.msk [vmem:[#allocation3 + $0x3a] sm:$0x1] %vm1136, %v1750
        %1795 = vst.msk [vmem:[#allocation3 + $0x4a] sm:$0x1] %vm1136, %v1752
        %1796 = vst.msk [vmem:[#allocation3 + $0x5a] sm:$0x1] %vm1136, %v1754
        %1797 = vst.msk [vmem:[#allocation3 + $0x6a] sm:$0x1] %vm1136, %v1756
        %1798 = vst.msk [vmem:[#allocation3 + $0x7a] sm:$0x1] %vm1136, %v1758
        %1799 = vst.msk [vmem:[#allocation3 + $0x8a] sm:$0x1] %vm1136, %v1760
        %1800 = vst.msk [vmem:[#allocation3 + $0x9a] sm:$0x1] %vm1136, %v1762
        %1801 = vst.msk [vmem:[#allocation3 + $0xaa] sm:$0x1] %vm1136, %v1764
        %1802 = vst.msk [vmem:[#allocation3 + $0xba] sm:$0x1] %vm1136, %v1766
        %1803 = vst.msk [vmem:[#allocation3 + $0xca] sm:$0x1] %vm1136, %v1768
        %1804 = vst.msk [vmem:[#allocation3 + $0xda] sm:$0x1] %vm1136, %v1770
        %1805 = vst.msk [vmem:[#allocation3 + $0xea] sm:$0x1] %vm1136, %v1772
        %1806 = vst.msk [vmem:[#allocation3 + $0xfa] sm:$0x1] %vm1136, %v1774
        %1807 = vrot.lane.b32.xlu0 %v1663, 80
        %v1808 = vpop.permute.xlu0 %1807
        %1809 = vrot.lane.b32.xlu0 %v1664, 80
        %v1810 = vpop.permute.xlu0 %1809
        %1811 = vrot.lane.b32.xlu0 %v1665, 80
        %v1812 = vpop.permute.xlu0 %1811
        %1813 = vrot.lane.b32.xlu0 %v1666, 80
        %v1814 = vpop.permute.xlu0 %1813
        %1815 = vrot.lane.b32.xlu0 %v1667, 80
        %v1816 = vpop.permute.xlu0 %1815
        %1817 = vrot.lane.b32.xlu0 %v1668, 80
        %v1818 = vpop.permute.xlu0 %1817
        %1819 = vrot.lane.b32.xlu0 %v1669, 80
        %v1820 = vpop.permute.xlu0 %1819
        %1821 = vrot.lane.b32.xlu0 %v1670, 80
        %v1822 = vpop.permute.xlu0 %1821
        %1823 = vrot.lane.b32.xlu0 %v1671, 80
        %v1824 = vpop.permute.xlu0 %1823
        %1825 = vrot.lane.b32.xlu0 %v1672, 80
        %v1826 = vpop.permute.xlu0 %1825
        %1827 = vrot.lane.b32.xlu0 %v1673, 80
        %v1828 = vpop.permute.xlu0 %1827
        %1829 = vrot.lane.b32.xlu0 %v1674, 80
        %v1830 = vpop.permute.xlu0 %1829
        %1831 = vrot.lane.b32.xlu0 %v1675, 80
        %v1832 = vpop.permute.xlu0 %1831
        %1833 = vrot.lane.b32.xlu0 %v1676, 80
        %v1834 = vpop.permute.xlu0 %1833
        %1835 = vrot.lane.b32.xlu0 %v1677, 80
        %v1836 = vpop.permute.xlu0 %1835
        %1837 = vrot.lane.b32.xlu0 %v1678, 80
        %v1838 = vpop.permute.xlu0 %1837
        %1855 = vst.msk [vmem:[#allocation3 + $0xb] sm:$0x1] %vm1136, %v1808
        %1856 = vst.msk [vmem:[#allocation3 + $0x1b] sm:$0x1] %vm1136, %v1810
        %1857 = vst.msk [vmem:[#allocation3 + $0x2b] sm:$0x1] %vm1136, %v1812
        %1858 = vst.msk [vmem:[#allocation3 + $0x3b] sm:$0x1] %vm1136, %v1814
        %1859 = vst.msk [vmem:[#allocation3 + $0x4b] sm:$0x1] %vm1136, %v1816
        %1860 = vst.msk [vmem:[#allocation3 + $0x5b] sm:$0x1] %vm1136, %v1818
        %1861 = vst.msk [vmem:[#allocation3 + $0x6b] sm:$0x1] %vm1136, %v1820
        %1862 = vst.msk [vmem:[#allocation3 + $0x7b] sm:$0x1] %vm1136, %v1822
        %1863 = vst.msk [vmem:[#allocation3 + $0x8b] sm:$0x1] %vm1136, %v1824
        %1864 = vst.msk [vmem:[#allocation3 + $0x9b] sm:$0x1] %vm1136, %v1826
        %1865 = vst.msk [vmem:[#allocation3 + $0xab] sm:$0x1] %vm1136, %v1828
        %1866 = vst.msk [vmem:[#allocation3 + $0xbb] sm:$0x1] %vm1136, %v1830
        %1867 = vst.msk [vmem:[#allocation3 + $0xcb] sm:$0x1] %vm1136, %v1832
        %1868 = vst.msk [vmem:[#allocation3 + $0xdb] sm:$0x1] %vm1136, %v1834
        %1869 = vst.msk [vmem:[#allocation3 + $0xeb] sm:$0x1] %vm1136, %v1836
        %1870 = vst.msk [vmem:[#allocation3 + $0xfb] sm:$0x1] %vm1136, %v1838
        %1871 = vrot.lane.b32.xlu0 %v1663, 64
        %v1872 = vpop.permute.xlu0 %1871
        %1873 = vrot.lane.b32.xlu0 %v1664, 64
        %v1874 = vpop.permute.xlu0 %1873
        %1875 = vrot.lane.b32.xlu0 %v1665, 64
        %v1876 = vpop.permute.xlu0 %1875
        %1877 = vrot.lane.b32.xlu0 %v1666, 64
        %v1878 = vpop.permute.xlu0 %1877
        %1879 = vrot.lane.b32.xlu0 %v1667, 64
        %v1880 = vpop.permute.xlu0 %1879
        %1881 = vrot.lane.b32.xlu0 %v1668, 64
        %v1882 = vpop.permute.xlu0 %1881
        %1883 = vrot.lane.b32.xlu0 %v1669, 64
        %v1884 = vpop.permute.xlu0 %1883
        %1885 = vrot.lane.b32.xlu0 %v1670, 64
        %v1886 = vpop.permute.xlu0 %1885
        %1887 = vrot.lane.b32.xlu0 %v1671, 64
        %v1888 = vpop.permute.xlu0 %1887
        %1889 = vrot.lane.b32.xlu0 %v1672, 64
        %v1890 = vpop.permute.xlu0 %1889
        %1891 = vrot.lane.b32.xlu0 %v1673, 64
        %v1892 = vpop.permute.xlu0 %1891
        %1893 = vrot.lane.b32.xlu0 %v1674, 64
        %v1894 = vpop.permute.xlu0 %1893
        %1895 = vrot.lane.b32.xlu0 %v1675, 64
        %v1896 = vpop.permute.xlu0 %1895
        %1897 = vrot.lane.b32.xlu0 %v1676, 64
        %v1898 = vpop.permute.xlu0 %1897
        %1899 = vrot.lane.b32.xlu0 %v1677, 64
        %v1900 = vpop.permute.xlu0 %1899
        %1901 = vrot.lane.b32.xlu0 %v1678, 64
        %v1902 = vpop.permute.xlu0 %1901
        %1919 = vst.msk [vmem:[#allocation3 + $0xc] sm:$0x1] %vm1136, %v1872
        %1920 = vst.msk [vmem:[#allocation3 + $0x1c] sm:$0x1] %vm1136, %v1874
        %1921 = vst.msk [vmem:[#allocation3 + $0x2c] sm:$0x1] %vm1136, %v1876
        %1922 = vst.msk [vmem:[#allocation3 + $0x3c] sm:$0x1] %vm1136, %v1878
        %1923 = vst.msk [vmem:[#allocation3 + $0x4c] sm:$0x1] %vm1136, %v1880
        %1924 = vst.msk [vmem:[#allocation3 + $0x5c] sm:$0x1] %vm1136, %v1882
        %1925 = vst.msk [vmem:[#allocation3 + $0x6c] sm:$0x1] %vm1136, %v1884
        %1926 = vst.msk [vmem:[#allocation3 + $0x7c] sm:$0x1] %vm1136, %v1886
        %1927 = vst.msk [vmem:[#allocation3 + $0x8c] sm:$0x1] %vm1136, %v1888
        %1928 = vst.msk [vmem:[#allocation3 + $0x9c] sm:$0x1] %vm1136, %v1890
        %1929 = vst.msk [vmem:[#allocation3 + $0xac] sm:$0x1] %vm1136, %v1892
        %1930 = vst.msk [vmem:[#allocation3 + $0xbc] sm:$0x1] %vm1136, %v1894
        %1931 = vst.msk [vmem:[#allocation3 + $0xcc] sm:$0x1] %vm1136, %v1896
        %1932 = vst.msk [vmem:[#allocation3 + $0xdc] sm:$0x1] %vm1136, %v1898
        %1933 = vst.msk [vmem:[#allocation3 + $0xec] sm:$0x1] %vm1136, %v1900
        %1934 = vst.msk [vmem:[#allocation3 + $0xfc] sm:$0x1] %vm1136, %v1902
        %1935 = vrot.lane.b32.xlu0 %v1663, 48
        %v1936 = vpop.permute.xlu0 %1935
        %1937 = vrot.lane.b32.xlu0 %v1664, 48
        %v1938 = vpop.permute.xlu0 %1937
        %1939 = vrot.lane.b32.xlu0 %v1665, 48
        %v1940 = vpop.permute.xlu0 %1939
        %1941 = vrot.lane.b32.xlu0 %v1666, 48
        %v1942 = vpop.permute.xlu0 %1941
        %1943 = vrot.lane.b32.xlu0 %v1667, 48
        %v1944 = vpop.permute.xlu0 %1943
        %1945 = vrot.lane.b32.xlu0 %v1668, 48
        %v1946 = vpop.permute.xlu0 %1945
        %1947 = vrot.lane.b32.xlu0 %v1669, 48
        %v1948 = vpop.permute.xlu0 %1947
        %1949 = vrot.lane.b32.xlu0 %v1670, 48
        %v1950 = vpop.permute.xlu0 %1949
        %1951 = vrot.lane.b32.xlu0 %v1671, 48
        %v1952 = vpop.permute.xlu0 %1951
        %1953 = vrot.lane.b32.xlu0 %v1672, 48
        %v1954 = vpop.permute.xlu0 %1953
        %1955 = vrot.lane.b32.xlu0 %v1673, 48
        %v1956 = vpop.permute.xlu0 %1955
        %1957 = vrot.lane.b32.xlu0 %v1674, 48
        %v1958 = vpop.permute.xlu0 %1957
        %1959 = vrot.lane.b32.xlu0 %v1675, 48
        %v1960 = vpop.permute.xlu0 %1959
        %1961 = vrot.lane.b32.xlu0 %v1676, 48
        %v1962 = vpop.permute.xlu0 %1961
        %1963 = vrot.lane.b32.xlu0 %v1677, 48
        %v1964 = vpop.permute.xlu0 %1963
        %1965 = vrot.lane.b32.xlu0 %v1678, 48
        %v1966 = vpop.permute.xlu0 %1965
        %1983 = vst.msk [vmem:[#allocation3 + $0xd] sm:$0x1] %vm1136, %v1936
        %1984 = vst.msk [vmem:[#allocation3 + $0x1d] sm:$0x1] %vm1136, %v1938
        %1985 = vst.msk [vmem:[#allocation3 + $0x2d] sm:$0x1] %vm1136, %v1940
        %1986 = vst.msk [vmem:[#allocation3 + $0x3d] sm:$0x1] %vm1136, %v1942
        %1987 = vst.msk [vmem:[#allocation3 + $0x4d] sm:$0x1] %vm1136, %v1944
        %1988 = vst.msk [vmem:[#allocation3 + $0x5d] sm:$0x1] %vm1136, %v1946
        %1989 = vst.msk [vmem:[#allocation3 + $0x6d] sm:$0x1] %vm1136, %v1948
        %1990 = vst.msk [vmem:[#allocation3 + $0x7d] sm:$0x1] %vm1136, %v1950
        %1991 = vst.msk [vmem:[#allocation3 + $0x8d] sm:$0x1] %vm1136, %v1952
        %1992 = vst.msk [vmem:[#allocation3 + $0x9d] sm:$0x1] %vm1136, %v1954
        %1993 = vst.msk [vmem:[#allocation3 + $0xad] sm:$0x1] %vm1136, %v1956
        %1994 = vst.msk [vmem:[#allocation3 + $0xbd] sm:$0x1] %vm1136, %v1958
        %1995 = vst.msk [vmem:[#allocation3 + $0xcd] sm:$0x1] %vm1136, %v1960
        %1996 = vst.msk [vmem:[#allocation3 + $0xdd] sm:$0x1] %vm1136, %v1962
        %1997 = vst.msk [vmem:[#allocation3 + $0xed] sm:$0x1] %vm1136, %v1964
        %1998 = vst.msk [vmem:[#allocation3 + $0xfd] sm:$0x1] %vm1136, %v1966
        %1999 = vrot.lane.b32.xlu0 %v1663, 32
        %v2000 = vpop.permute.xlu0 %1999
        %2001 = vrot.lane.b32.xlu0 %v1664, 32
        %v2002 = vpop.permute.xlu0 %2001
        %2003 = vrot.lane.b32.xlu0 %v1665, 32
        %v2004 = vpop.permute.xlu0 %2003
        %2005 = vrot.lane.b32.xlu0 %v1666, 32
        %v2006 = vpop.permute.xlu0 %2005
        %2007 = vrot.lane.b32.xlu0 %v1667, 32
        %v2008 = vpop.permute.xlu0 %2007
        %2009 = vrot.lane.b32.xlu0 %v1668, 32
        %v2010 = vpop.permute.xlu0 %2009
        %2011 = vrot.lane.b32.xlu0 %v1669, 32
        %v2012 = vpop.permute.xlu0 %2011
        %2013 = vrot.lane.b32.xlu0 %v1670, 32
        %v2014 = vpop.permute.xlu0 %2013
        %2015 = vrot.lane.b32.xlu0 %v1671, 32
        %v2016 = vpop.permute.xlu0 %2015
        %2017 = vrot.lane.b32.xlu0 %v1672, 32
        %v2018 = vpop.permute.xlu0 %2017
        %2019 = vrot.lane.b32.xlu0 %v1673, 32
        %v2020 = vpop.permute.xlu0 %2019
        %2021 = vrot.lane.b32.xlu0 %v1674, 32
        %v2022 = vpop.permute.xlu0 %2021
        %2023 = vrot.lane.b32.xlu0 %v1675, 32
        %v2024 = vpop.permute.xlu0 %2023
        %2025 = vrot.lane.b32.xlu0 %v1676, 32
        %v2026 = vpop.permute.xlu0 %2025
        %2027 = vrot.lane.b32.xlu0 %v1677, 32
        %v2028 = vpop.permute.xlu0 %2027
        %2029 = vrot.lane.b32.xlu0 %v1678, 32
        %v2030 = vpop.permute.xlu0 %2029
        %2047 = vst.msk [vmem:[#allocation3 + $0xe] sm:$0x1] %vm1136, %v2000
        %2048 = vst.msk [vmem:[#allocation3 + $0x1e] sm:$0x1] %vm1136, %v2002
        %2049 = vst.msk [vmem:[#allocation3 + $0x2e] sm:$0x1] %vm1136, %v2004
        %2050 = vst.msk [vmem:[#allocation3 + $0x3e] sm:$0x1] %vm1136, %v2006
        %2051 = vst.msk [vmem:[#allocation3 + $0x4e] sm:$0x1] %vm1136, %v2008
        %2052 = vst.msk [vmem:[#allocation3 + $0x5e] sm:$0x1] %vm1136, %v2010
        %2053 = vst.msk [vmem:[#allocation3 + $0x6e] sm:$0x1] %vm1136, %v2012
        %2054 = vst.msk [vmem:[#allocation3 + $0x7e] sm:$0x1] %vm1136, %v2014
        %2055 = vst.msk [vmem:[#allocation3 + $0x8e] sm:$0x1] %vm1136, %v2016
        %2056 = vst.msk [vmem:[#allocation3 + $0x9e] sm:$0x1] %vm1136, %v2018
        %2057 = vst.msk [vmem:[#allocation3 + $0xae] sm:$0x1] %vm1136, %v2020
        %2058 = vst.msk [vmem:[#allocation3 + $0xbe] sm:$0x1] %vm1136, %v2022
        %2059 = vst.msk [vmem:[#allocation3 + $0xce] sm:$0x1] %vm1136, %v2024
        %2060 = vst.msk [vmem:[#allocation3 + $0xde] sm:$0x1] %vm1136, %v2026
        %2061 = vst.msk [vmem:[#allocation3 + $0xee] sm:$0x1] %vm1136, %v2028
        %2062 = vst.msk [vmem:[#allocation3 + $0xfe] sm:$0x1] %vm1136, %v2030
        %2063 = vrot.lane.b32.xlu0 %v1663, 16
        %v2064 = vpop.permute.xlu0 %2063
        %2065 = vrot.lane.b32.xlu0 %v1664, 16
        %v2066 = vpop.permute.xlu0 %2065
        %2067 = vrot.lane.b32.xlu0 %v1665, 16
        %v2068 = vpop.permute.xlu0 %2067
        %2069 = vrot.lane.b32.xlu0 %v1666, 16
        %v2070 = vpop.permute.xlu0 %2069
        %2071 = vrot.lane.b32.xlu0 %v1667, 16
        %v2072 = vpop.permute.xlu0 %2071
        %2073 = vrot.lane.b32.xlu0 %v1668, 16
        %v2074 = vpop.permute.xlu0 %2073
        %2075 = vrot.lane.b32.xlu0 %v1669, 16
        %v2076 = vpop.permute.xlu0 %2075
        %2077 = vrot.lane.b32.xlu0 %v1670, 16
        %v2078 = vpop.permute.xlu0 %2077
        %2079 = vrot.lane.b32.xlu0 %v1671, 16
        %v2080 = vpop.permute.xlu0 %2079
        %2081 = vrot.lane.b32.xlu0 %v1672, 16
        %v2082 = vpop.permute.xlu0 %2081
        %2083 = vrot.lane.b32.xlu0 %v1673, 16
        %v2084 = vpop.permute.xlu0 %2083
        %2085 = vrot.lane.b32.xlu0 %v1674, 16
        %v2086 = vpop.permute.xlu0 %2085
        %2087 = vrot.lane.b32.xlu0 %v1675, 16
        %v2088 = vpop.permute.xlu0 %2087
        %2089 = vrot.lane.b32.xlu0 %v1676, 16
        %v2090 = vpop.permute.xlu0 %2089
        %2091 = vrot.lane.b32.xlu0 %v1677, 16
        %v2092 = vpop.permute.xlu0 %2091
        %2093 = vrot.lane.b32.xlu0 %v1678, 16
        %v2094 = vpop.permute.xlu0 %2093
        %2111 = vst.msk [vmem:[#allocation3 + $0xf] sm:$0x1] %vm1136, %v2064
        %2112 = vst.msk [vmem:[#allocation3 + $0x1f] sm:$0x1] %vm1136, %v2066
        %2113 = vst.msk [vmem:[#allocation3 + $0x2f] sm:$0x1] %vm1136, %v2068
        %2114 = vst.msk [vmem:[#allocation3 + $0x3f] sm:$0x1] %vm1136, %v2070
        %2115 = vst.msk [vmem:[#allocation3 + $0x4f] sm:$0x1] %vm1136, %v2072
        %2116 = vst.msk [vmem:[#allocation3 + $0x5f] sm:$0x1] %vm1136, %v2074
        %2117 = vst.msk [vmem:[#allocation3 + $0x6f] sm:$0x1] %vm1136, %v2076
        %2118 = vst.msk [vmem:[#allocation3 + $0x7f] sm:$0x1] %vm1136, %v2078
        %2119 = vst.msk [vmem:[#allocation3 + $0x8f] sm:$0x1] %vm1136, %v2080
        %2120 = vst.msk [vmem:[#allocation3 + $0x9f] sm:$0x1] %vm1136, %v2082
        %2121 = vst.msk [vmem:[#allocation3 + $0xaf] sm:$0x1] %vm1136, %v2084
        %2122 = vst.msk [vmem:[#allocation3 + $0xbf] sm:$0x1] %vm1136, %v2086
        %2123 = vst.msk [vmem:[#allocation3 + $0xcf] sm:$0x1] %vm1136, %v2088
        %2124 = vst.msk [vmem:[#allocation3 + $0xdf] sm:$0x1] %vm1136, %v2090
        %2125 = vst.msk [vmem:[#allocation3 + $0xef] sm:$0x1] %vm1136, %v2092
        %2126 = vst.msk [vmem:[#allocation3 + $0xff] sm:$0x1] %vm1136, %v2094
        %v2127 = vld [vmem:[#allocation3] sm:$0xff]
        %v2128 = vld [vmem:[#allocation3 + $0x8] sm:$0xff]
        %v2129 = vld [vmem:[#allocation3 + $0x10] sm:$0xff]
        %v2130 = vld [vmem:[#allocation3 + $0x18] sm:$0xff]
        %v2131 = vld [vmem:[#allocation3 + $0x20] sm:$0xff]
        %v2132 = vld [vmem:[#allocation3 + $0x28] sm:$0xff]
        %v2133 = vld [vmem:[#allocation3 + $0x30] sm:$0xff]
        %v2134 = vld [vmem:[#allocation3 + $0x38] sm:$0xff]
        %v2135 = vld [vmem:[#allocation3 + $0x40] sm:$0xff]
        %v2136 = vld [vmem:[#allocation3 + $0x48] sm:$0xff]
        %v2137 = vld [vmem:[#allocation3 + $0x50] sm:$0xff]
        %v2138 = vld [vmem:[#allocation3 + $0x58] sm:$0xff]
        %v2139 = vld [vmem:[#allocation3 + $0x60] sm:$0xff]
        %v2140 = vld [vmem:[#allocation3 + $0x68] sm:$0xff]
        %v2141 = vld [vmem:[#allocation3 + $0x70] sm:$0xff]
        %v2142 = vld [vmem:[#allocation3 + $0x78] sm:$0xff]
        %v2143 = vld [vmem:[#allocation3 + $0x80] sm:$0xff]
        %v2144 = vld [vmem:[#allocation3 + $0x88] sm:$0xff]
        %v2145 = vld [vmem:[#allocation3 + $0x90] sm:$0xff]
        %v2146 = vld [vmem:[#allocation3 + $0x98] sm:$0xff]
        %v2147 = vld [vmem:[#allocation3 + $0xa0] sm:$0xff]
        %v2148 = vld [vmem:[#allocation3 + $0xa8] sm:$0xff]
        %v2149 = vld [vmem:[#allocation3 + $0xb0] sm:$0xff]
        %v2150 = vld [vmem:[#allocation3 + $0xb8] sm:$0xff]
        %v2151 = vld [vmem:[#allocation3 + $0xc0] sm:$0xff]
        %v2152 = vld [vmem:[#allocation3 + $0xc8] sm:$0xff]
        %v2153 = vld [vmem:[#allocation3 + $0xd0] sm:$0xff]
        %v2154 = vld [vmem:[#allocation3 + $0xd8] sm:$0xff]
        %v2155 = vld [vmem:[#allocation3 + $0xe0] sm:$0xff]
        %v2156 = vld [vmem:[#allocation3 + $0xe8] sm:$0xff]
        %v2157 = vld [vmem:[#allocation3 + $0xf0] sm:$0xff]
        %v2158 = vld [vmem:[#allocation3 + $0xf8] sm:$0xff]
        %2159 = vxpose.xlu0.b32.start [1/16] %v2135, 128
        %2160 = vxpose.xlu0.b32.cont [2/16] %v2136, 128
        %2161 = vxpose.xlu0.b32.cont [3/16] 0.0, 128
        %2162 = vxpose.xlu0.b32.cont [4/16] 0.0, 128
        %2163 = vxpose.xlu0.b32.cont [5/16] 0.0, 128
        %2164 = vxpose.xlu0.b32.cont [6/16] 0.0, 128
        %2165 = vxpose.xlu0.b32.cont [7/16] 0.0, 128
        %2166 = vxpose.xlu0.b32.cont [8/16] 0.0, 128
        %2167 = vxpose.xlu0.b32.cont [9/16] 0.0, 128
        %2168 = vxpose.xlu0.b32.cont [10/16] 0.0, 128
        %2169 = vxpose.xlu0.b32.cont [11/16] 0.0, 128
        %2170 = vxpose.xlu0.b32.cont [12/16] 0.0, 128
        %2171 = vxpose.xlu0.b32.cont [13/16] 0.0, 128
        %2172 = vxpose.xlu0.b32.cont [14/16] 0.0, 128
        %2173 = vxpose.xlu0.b32.cont [15/16] 0.0, 128
        %2174 = vxpose.xlu0.b32.end [16/16] 0.0, 128
        %v2175 = vpop.trf.xlu0
        %v2176 = vpop.trf.xlu0
        %v2177 = vpop.trf.xlu0
        %v2178 = vpop.trf.xlu0
        %v2179 = vpop.trf.xlu0
        %v2180 = vpop.trf.xlu0
        %v2181 = vpop.trf.xlu0
        %v2182 = vpop.trf.xlu0
        %v2183 = vpop.trf.xlu0
        %v2184 = vpop.trf.xlu0
        %v2185 = vpop.trf.xlu0
        %v2186 = vpop.trf.xlu0
        %v2187 = vpop.trf.xlu0
        %v2188 = vpop.trf.xlu0
        %v2189 = vpop.trf.xlu0
        %v2190 = vpop.trf.xlu0
        %v2192 = vsel %vm428, %v2175, 0
        %v2195 = vsel %vm428, %v2176, 0
        %2197 = vmatpush.msra.mxu0 0.0
        %2198 = vmatpush.msra.mxu0 0.0
        %2199 = vmatpush.msra.mxu0 0.0
        %2200 = vmatpush.msra.mxu0 0.0
        %2201 = vmatpush.msra.mxu0 0.0
        %2202 = vmatpush.msra.mxu0 0.0
        %2203 = vmatpush.msra.mxu0 0.0
        %2204 = vmatpush.msra.mxu0 0.0
        %2205 = vmatpush.msra.mxu0 0.0
        %2206 = vmatpush.msra.mxu0 0.0
        %2207 = vmatpush.msra.mxu0 0.0
        %2208 = vmatpush.msra.mxu0 0.0
        %2209 = vmatpush.msra.mxu0 0.0
        %2210 = vmatpush.msra.mxu0 0.0
        %2211 = vmatpush.msra.mxu0 %v2128
        %2212 = vmatpush.msra.mxu0 %v2127
        %2213 = vmatmul.f32.gmra.mxu0 %v2192
        %v2214 = vpop.f32.mrf.mxu0
        %v2215 = vadd.f32 0.0, %v2214
        %2216 = vmatmul.f32.gmra.mxu0 %v2195
        %v2217 = vpop.f32.mrf.mxu0
        %v2218 = vadd.f32 0.0, %v2217
        %2219 = vdwg.mxu0
        %2220 = vxpose.xlu0.b32.start [1/16] %v2137, 128
        %2221 = vxpose.xlu0.b32.cont [2/16] %v2138, 128
        %2222 = vxpose.xlu0.b32.cont [3/16] 0.0, 128
        %2223 = vxpose.xlu0.b32.cont [4/16] 0.0, 128
        %2224 = vxpose.xlu0.b32.cont [5/16] 0.0, 128
        %2225 = vxpose.xlu0.b32.cont [6/16] 0.0, 128
        %2226 = vxpose.xlu0.b32.cont [7/16] 0.0, 128
        %2227 = vxpose.xlu0.b32.cont [8/16] 0.0, 128
        %2228 = vxpose.xlu0.b32.cont [9/16] 0.0, 128
        %2229 = vxpose.xlu0.b32.cont [10/16] 0.0, 128
        %2230 = vxpose.xlu0.b32.cont [11/16] 0.0, 128
        %2231 = vxpose.xlu0.b32.cont [12/16] 0.0, 128
        %2232 = vxpose.xlu0.b32.cont [13/16] 0.0, 128
        %2233 = vxpose.xlu0.b32.cont [14/16] 0.0, 128
        %2234 = vxpose.xlu0.b32.cont [15/16] 0.0, 128
        %2235 = vxpose.xlu0.b32.end [16/16] 0.0, 128
        %v2236 = vpop.trf.xlu0
        %v2237 = vpop.trf.xlu0
        %v2238 = vpop.trf.xlu0
        %v2239 = vpop.trf.xlu0
        %v2240 = vpop.trf.xlu0
        %v2241 = vpop.trf.xlu0
        %v2242 = vpop.trf.xlu0
        %v2243 = vpop.trf.xlu0
        %v2244 = vpop.trf.xlu0
        %v2245 = vpop.trf.xlu0
        %v2246 = vpop.trf.xlu0
        %v2247 = vpop.trf.xlu0
        %v2248 = vpop.trf.xlu0
        %v2249 = vpop.trf.xlu0
        %v2250 = vpop.trf.xlu0
        %v2251 = vpop.trf.xlu0
        %v2253 = vsel %vm428, %v2236, 0
        %v2256 = vsel %vm428, %v2237, 0
        %2258 = vmatpush.msra.mxu0 0.0
        %2259 = vmatpush.msra.mxu0 0.0
        %2260 = vmatpush.msra.mxu0 0.0
        %2261 = vmatpush.msra.mxu0 0.0
        %2262 = vmatpush.msra.mxu0 0.0
        %2263 = vmatpush.msra.mxu0 0.0
        %2264 = vmatpush.msra.mxu0 0.0
        %2265 = vmatpush.msra.mxu0 0.0
        %2266 = vmatpush.msra.mxu0 0.0
        %2267 = vmatpush.msra.mxu0 0.0
        %2268 = vmatpush.msra.mxu0 0.0
        %2269 = vmatpush.msra.mxu0 0.0
        %2270 = vmatpush.msra.mxu0 0.0
        %2271 = vmatpush.msra.mxu0 0.0
        %2272 = vmatpush.msra.mxu0 %v2130
        %2273 = vmatpush.msra.mxu0 %v2129
        %2274 = vmatmul.f32.gmra.mxu0 %v2253
        %v2275 = vpop.f32.mrf.mxu0
        %v2276 = vadd.f32 0.0, %v2275
        %2277 = vmatmul.f32.gmra.mxu0 %v2256
        %v2278 = vpop.f32.mrf.mxu0
        %v2279 = vadd.f32 0.0, %v2278
        %2280 = vdwg.mxu0
        %2281 = vxpose.xlu0.b32.start [1/16] %v2139, 128
        %2282 = vxpose.xlu0.b32.cont [2/16] %v2140, 128
        %2283 = vxpose.xlu0.b32.cont [3/16] 0.0, 128
        %2284 = vxpose.xlu0.b32.cont [4/16] 0.0, 128
        %2285 = vxpose.xlu0.b32.cont [5/16] 0.0, 128
        %2286 = vxpose.xlu0.b32.cont [6/16] 0.0, 128
        %2287 = vxpose.xlu0.b32.cont [7/16] 0.0, 128
        %2288 = vxpose.xlu0.b32.cont [8/16] 0.0, 128
        %2289 = vxpose.xlu0.b32.cont [9/16] 0.0, 128
        %2290 = vxpose.xlu0.b32.cont [10/16] 0.0, 128
        %2291 = vxpose.xlu0.b32.cont [11/16] 0.0, 128
        %2292 = vxpose.xlu0.b32.cont [12/16] 0.0, 128
        %2293 = vxpose.xlu0.b32.cont [13/16] 0.0, 128
        %2294 = vxpose.xlu0.b32.cont [14/16] 0.0, 128
        %2295 = vxpose.xlu0.b32.cont [15/16] 0.0, 128
        %2296 = vxpose.xlu0.b32.end [16/16] 0.0, 128
        %v2297 = vpop.trf.xlu0
        %v2298 = vpop.trf.xlu0
        %v2299 = vpop.trf.xlu0
        %v2300 = vpop.trf.xlu0
        %v2301 = vpop.trf.xlu0
        %v2302 = vpop.trf.xlu0
        %v2303 = vpop.trf.xlu0
        %v2304 = vpop.trf.xlu0
        %v2305 = vpop.trf.xlu0
        %v2306 = vpop.trf.xlu0
        %v2307 = vpop.trf.xlu0
        %v2308 = vpop.trf.xlu0
        %v2309 = vpop.trf.xlu0
        %v2310 = vpop.trf.xlu0
        %v2311 = vpop.trf.xlu0
        %v2312 = vpop.trf.xlu0
        %v2314 = vsel %vm428, %v2297, 0
        %v2317 = vsel %vm428, %v2298, 0
        %2319 = vmatpush.msra.mxu0 0.0
        %2320 = vmatpush.msra.mxu0 0.0
        %2321 = vmatpush.msra.mxu0 0.0
        %2322 = vmatpush.msra.mxu0 0.0
        %2323 = vmatpush.msra.mxu0 0.0
        %2324 = vmatpush.msra.mxu0 0.0
        %2325 = vmatpush.msra.mxu0 0.0
        %2326 = vmatpush.msra.mxu0 0.0
        %2327 = vmatpush.msra.mxu0 0.0
        %2328 = vmatpush.msra.mxu0 0.0
        %2329 = vmatpush.msra.mxu0 0.0
        %2330 = vmatpush.msra.mxu0 0.0
        %2331 = vmatpush.msra.mxu0 0.0
        %2332 = vmatpush.msra.mxu0 0.0
        %2333 = vmatpush.msra.mxu0 %v2132
        %2334 = vmatpush.msra.mxu0 %v2131
        %2335 = vmatmul.f32.gmra.mxu0 %v2314
        %v2336 = vpop.f32.mrf.mxu0
        %v2337 = vadd.f32 0.0, %v2336
        %2338 = vmatmul.f32.gmra.mxu0 %v2317
        %v2339 = vpop.f32.mrf.mxu0
        %v2340 = vadd.f32 0.0, %v2339
        %2341 = vdwg.mxu0
        %2342 = vxpose.xlu0.b32.start [1/16] %v2141, 128
        %2343 = vxpose.xlu0.b32.cont [2/16] %v2142, 128
        %2344 = vxpose.xlu0.b32.cont [3/16] 0.0, 128
        %2345 = vxpose.xlu0.b32.cont [4/16] 0.0, 128
        %2346 = vxpose.xlu0.b32.cont [5/16] 0.0, 128
        %2347 = vxpose.xlu0.b32.cont [6/16] 0.0, 128
        %2348 = vxpose.xlu0.b32.cont [7/16] 0.0, 128
        %2349 = vxpose.xlu0.b32.cont [8/16] 0.0, 128
        %2350 = vxpose.xlu0.b32.cont [9/16] 0.0, 128
        %2351 = vxpose.xlu0.b32.cont [10/16] 0.0, 128
        %2352 = vxpose.xlu0.b32.cont [11/16] 0.0, 128
        %2353 = vxpose.xlu0.b32.cont [12/16] 0.0, 128
        %2354 = vxpose.xlu0.b32.cont [13/16] 0.0, 128
        %2355 = vxpose.xlu0.b32.cont [14/16] 0.0, 128
        %2356 = vxpose.xlu0.b32.cont [15/16] 0.0, 128
        %2357 = vxpose.xlu0.b32.end [16/16] 0.0, 128
        %v2358 = vpop.trf.xlu0
        %v2359 = vpop.trf.xlu0
        %v2360 = vpop.trf.xlu0
        %v2361 = vpop.trf.xlu0
        %v2362 = vpop.trf.xlu0
        %v2363 = vpop.trf.xlu0
        %v2364 = vpop.trf.xlu0
        %v2365 = vpop.trf.xlu0
        %v2366 = vpop.trf.xlu0
        %v2367 = vpop.trf.xlu0
        %v2368 = vpop.trf.xlu0
        %v2369 = vpop.trf.xlu0
        %v2370 = vpop.trf.xlu0
        %v2371 = vpop.trf.xlu0
        %v2372 = vpop.trf.xlu0
        %v2373 = vpop.trf.xlu0
        %v2375 = vsel %vm428, %v2358, 0
        %v2378 = vsel %vm428, %v2359, 0
        %2380 = vmatpush.msra.mxu0 0.0
        %2381 = vmatpush.msra.mxu0 0.0
        %2382 = vmatpush.msra.mxu0 0.0
        %2383 = vmatpush.msra.mxu0 0.0
        %2384 = vmatpush.msra.mxu0 0.0
        %2385 = vmatpush.msra.mxu0 0.0
        %2386 = vmatpush.msra.mxu0 0.0
        %2387 = vmatpush.msra.mxu0 0.0
        %2388 = vmatpush.msra.mxu0 0.0
        %2389 = vmatpush.msra.mxu0 0.0
        %2390 = vmatpush.msra.mxu0 0.0
        %2391 = vmatpush.msra.mxu0 0.0
        %2392 = vmatpush.msra.mxu0 0.0
        %2393 = vmatpush.msra.mxu0 0.0
        %2394 = vmatpush.msra.mxu0 %v2134
        %2395 = vmatpush.msra.mxu0 %v2133
        %2396 = vmatmul.f32.gmra.mxu0 %v2375
        %v2397 = vpop.f32.mrf.mxu0
        %v2398 = vadd.f32 0.0, %v2397
        %2399 = vmatmul.f32.gmra.mxu0 %v2378
        %v2400 = vpop.f32.mrf.mxu0
        %v2401 = vadd.f32 0.0, %v2400
        %2402 = vdwg.mxu0
        %2403 = vxpose.xlu0.b32.start [1/16] %v2143, 128
        %2404 = vxpose.xlu0.b32.cont [2/16] %v2144, 128
        %2405 = vxpose.xlu0.b32.cont [3/16] 0.0, 128
        %2406 = vxpose.xlu0.b32.cont [4/16] 0.0, 128
        %2407 = vxpose.xlu0.b32.cont [5/16] 0.0, 128
        %2408 = vxpose.xlu0.b32.cont [6/16] 0.0, 128
        %2409 = vxpose.xlu0.b32.cont [7/16] 0.0, 128
        %2410 = vxpose.xlu0.b32.cont [8/16] 0.0, 128
        %2411 = vxpose.xlu0.b32.cont [9/16] 0.0, 128
        %2412 = vxpose.xlu0.b32.cont [10/16] 0.0, 128
        %2413 = vxpose.xlu0.b32.cont [11/16] 0.0, 128
        %2414 = vxpose.xlu0.b32.cont [12/16] 0.0, 128
        %2415 = vxpose.xlu0.b32.cont [13/16] 0.0, 128
        %2416 = vxpose.xlu0.b32.cont [14/16] 0.0, 128
        %2417 = vxpose.xlu0.b32.cont [15/16] 0.0, 128
        %2418 = vxpose.xlu0.b32.end [16/16] 0.0, 128
        %v2419 = vpop.trf.xlu0
        %v2420 = vpop.trf.xlu0
        %v2421 = vpop.trf.xlu0
        %v2422 = vpop.trf.xlu0
        %v2423 = vpop.trf.xlu0
        %v2424 = vpop.trf.xlu0
        %v2425 = vpop.trf.xlu0
        %v2426 = vpop.trf.xlu0
        %v2427 = vpop.trf.xlu0
        %v2428 = vpop.trf.xlu0
        %v2429 = vpop.trf.xlu0
        %v2430 = vpop.trf.xlu0
        %v2431 = vpop.trf.xlu0
        %v2432 = vpop.trf.xlu0
        %v2433 = vpop.trf.xlu0
        %v2434 = vpop.trf.xlu0
        %v2436 = vsel %vm428, %v2419, 0
        %v2439 = vsel %vm428, %v2420, 0
        %2441 = vmatpush.msra.mxu0 0.0
        %2442 = vmatpush.msra.mxu0 0.0
        %2443 = vmatpush.msra.mxu0 0.0
        %2444 = vmatpush.msra.mxu0 0.0
        %2445 = vmatpush.msra.mxu0 0.0
        %2446 = vmatpush.msra.mxu0 0.0
        %2447 = vmatpush.msra.mxu0 0.0
        %2448 = vmatpush.msra.mxu0 0.0
        %2449 = vmatpush.msra.mxu0 0.0
        %2450 = vmatpush.msra.mxu0 0.0
        %2451 = vmatpush.msra.mxu0 0.0
        %2452 = vmatpush.msra.mxu0 0.0
        %2453 = vmatpush.msra.mxu0 0.0
        %2454 = vmatpush.msra.mxu0 0.0
        %2455 = vmatpush.msra.mxu0 %v2128
        %2456 = vmatpush.msra.mxu0 %v2127
        %2457 = vmatmul.f32.gmra.mxu0 %v2436
        %v2458 = vpop.f32.mrf.mxu0
        %v2459 = vadd.f32 0.0, %v2458
        %2460 = vmatmul.f32.gmra.mxu0 %v2439
        %v2461 = vpop.f32.mrf.mxu0
        %v2462 = vadd.f32 0.0, %v2461
        %2463 = vdwg.mxu0
        %2464 = vxpose.xlu0.b32.start [1/16] %v2145, 128
        %2465 = vxpose.xlu0.b32.cont [2/16] %v2146, 128
        %2466 = vxpose.xlu0.b32.cont [3/16] 0.0, 128
        %2467 = vxpose.xlu0.b32.cont [4/16] 0.0, 128
        %2468 = vxpose.xlu0.b32.cont [5/16] 0.0, 128
        %2469 = vxpose.xlu0.b32.cont [6/16] 0.0, 128
        %2470 = vxpose.xlu0.b32.cont [7/16] 0.0, 128
        %2471 = vxpose.xlu0.b32.cont [8/16] 0.0, 128
        %2472 = vxpose.xlu0.b32.cont [9/16] 0.0, 128
        %2473 = vxpose.xlu0.b32.cont [10/16] 0.0, 128
        %2474 = vxpose.xlu0.b32.cont [11/16] 0.0, 128
        %2475 = vxpose.xlu0.b32.cont [12/16] 0.0, 128
        %2476 = vxpose.xlu0.b32.cont [13/16] 0.0, 128
        %2477 = vxpose.xlu0.b32.cont [14/16] 0.0, 128
        %2478 = vxpose.xlu0.b32.cont [15/16] 0.0, 128
        %2479 = vxpose.xlu0.b32.end [16/16] 0.0, 128
        %v2480 = vpop.trf.xlu0
        %v2481 = vpop.trf.xlu0
        %v2482 = vpop.trf.xlu0
        %v2483 = vpop.trf.xlu0
        %v2484 = vpop.trf.xlu0
        %v2485 = vpop.trf.xlu0
        %v2486 = vpop.trf.xlu0
        %v2487 = vpop.trf.xlu0
        %v2488 = vpop.trf.xlu0
        %v2489 = vpop.trf.xlu0
        %v2490 = vpop.trf.xlu0
        %v2491 = vpop.trf.xlu0
        %v2492 = vpop.trf.xlu0
        %v2493 = vpop.trf.xlu0
        %v2494 = vpop.trf.xlu0
        %v2495 = vpop.trf.xlu0
        %v2497 = vsel %vm428, %v2480, 0
        %v2500 = vsel %vm428, %v2481, 0
        %2502 = vmatpush.msra.mxu0 0.0
        %2503 = vmatpush.msra.mxu0 0.0
        %2504 = vmatpush.msra.mxu0 0.0
        %2505 = vmatpush.msra.mxu0 0.0
        %2506 = vmatpush.msra.mxu0 0.0
        %2507 = vmatpush.msra.mxu0 0.0
        %2508 = vmatpush.msra.mxu0 0.0
        %2509 = vmatpush.msra.mxu0 0.0
        %2510 = vmatpush.msra.mxu0 0.0
        %2511 = vmatpush.msra.mxu0 0.0
        %2512 = vmatpush.msra.mxu0 0.0
        %2513 = vmatpush.msra.mxu0 0.0
        %2514 = vmatpush.msra.mxu0 0.0
        %2515 = vmatpush.msra.mxu0 0.0
        %2516 = vmatpush.msra.mxu0 %v2130
        %2517 = vmatpush.msra.mxu0 %v2129
        %2518 = vmatmul.f32.gmra.mxu0 %v2497
        %v2519 = vpop.f32.mrf.mxu0
        %v2520 = vadd.f32 0.0, %v2519
        %2521 = vmatmul.f32.gmra.mxu0 %v2500
        %v2522 = vpop.f32.mrf.mxu0
        %v2523 = vadd.f32 0.0, %v2522
        %2524 = vdwg.mxu0
        %2525 = vxpose.xlu0.b32.start [1/16] %v2147, 128
        %2526 = vxpose.xlu0.b32.cont [2/16] %v2148, 128
        %2527 = vxpose.xlu0.b32.cont [3/16] 0.0, 128
        %2528 = vxpose.xlu0.b32.cont [4/16] 0.0, 128
        %2529 = vxpose.xlu0.b32.cont [5/16] 0.0, 128
        %2530 = vxpose.xlu0.b32.cont [6/16] 0.0, 128
        %2531 = vxpose.xlu0.b32.cont [7/16] 0.0, 128
        %2532 = vxpose.xlu0.b32.cont [8/16] 0.0, 128
        %2533 = vxpose.xlu0.b32.cont [9/16] 0.0, 128
        %2534 = vxpose.xlu0.b32.cont [10/16] 0.0, 128
        %2535 = vxpose.xlu0.b32.cont [11/16] 0.0, 128
        %2536 = vxpose.xlu0.b32.cont [12/16] 0.0, 128
        %2537 = vxpose.xlu0.b32.cont [13/16] 0.0, 128
        %2538 = vxpose.xlu0.b32.cont [14/16] 0.0, 128
        %2539 = vxpose.xlu0.b32.cont [15/16] 0.0, 128
        %2540 = vxpose.xlu0.b32.end [16/16] 0.0, 128
        %v2541 = vpop.trf.xlu0
        %v2542 = vpop.trf.xlu0
        %v2543 = vpop.trf.xlu0
        %v2544 = vpop.trf.xlu0
        %v2545 = vpop.trf.xlu0
        %v2546 = vpop.trf.xlu0
        %v2547 = vpop.trf.xlu0
        %v2548 = vpop.trf.xlu0
        %v2549 = vpop.trf.xlu0
        %v2550 = vpop.trf.xlu0
        %v2551 = vpop.trf.xlu0
        %v2552 = vpop.trf.xlu0
        %v2553 = vpop.trf.xlu0
        %v2554 = vpop.trf.xlu0
        %v2555 = vpop.trf.xlu0
        %v2556 = vpop.trf.xlu0
        %v2558 = vsel %vm428, %v2541, 0
        %v2561 = vsel %vm428, %v2542, 0
        %2563 = vmatpush.msra.mxu0 0.0
        %2564 = vmatpush.msra.mxu0 0.0
        %2565 = vmatpush.msra.mxu0 0.0
        %2566 = vmatpush.msra.mxu0 0.0
        %2567 = vmatpush.msra.mxu0 0.0
        %2568 = vmatpush.msra.mxu0 0.0
        %2569 = vmatpush.msra.mxu0 0.0
        %2570 = vmatpush.msra.mxu0 0.0
        %2571 = vmatpush.msra.mxu0 0.0
        %2572 = vmatpush.msra.mxu0 0.0
        %2573 = vmatpush.msra.mxu0 0.0
        %2574 = vmatpush.msra.mxu0 0.0
        %2575 = vmatpush.msra.mxu0 0.0
        %2576 = vmatpush.msra.mxu0 0.0
        %2577 = vmatpush.msra.mxu0 %v2132
        %2578 = vmatpush.msra.mxu0 %v2131
        %2579 = vmatmul.f32.gmra.mxu0 %v2558
        %v2580 = vpop.f32.mrf.mxu0
        %v2581 = vadd.f32 0.0, %v2580
        %2582 = vmatmul.f32.gmra.mxu0 %v2561
        %v2583 = vpop.f32.mrf.mxu0
        %v2584 = vadd.f32 0.0, %v2583
        %2585 = vdwg.mxu0
        %2586 = vxpose.xlu0.b32.start [1/16] %v2149, 128
        %2587 = vxpose.xlu0.b32.cont [2/16] %v2150, 128
        %2588 = vxpose.xlu0.b32.cont [3/16] 0.0, 128
        %2589 = vxpose.xlu0.b32.cont [4/16] 0.0, 128
        %2590 = vxpose.xlu0.b32.cont [5/16] 0.0, 128
        %2591 = vxpose.xlu0.b32.cont [6/16] 0.0, 128
        %2592 = vxpose.xlu0.b32.cont [7/16] 0.0, 128
        %2593 = vxpose.xlu0.b32.cont [8/16] 0.0, 128
        %2594 = vxpose.xlu0.b32.cont [9/16] 0.0, 128
        %2595 = vxpose.xlu0.b32.cont [10/16] 0.0, 128
        %2596 = vxpose.xlu0.b32.cont [11/16] 0.0, 128
        %2597 = vxpose.xlu0.b32.cont [12/16] 0.0, 128
        %2598 = vxpose.xlu0.b32.cont [13/16] 0.0, 128
        %2599 = vxpose.xlu0.b32.cont [14/16] 0.0, 128
        %2600 = vxpose.xlu0.b32.cont [15/16] 0.0, 128
        %2601 = vxpose.xlu0.b32.end [16/16] 0.0, 128
        %v2602 = vpop.trf.xlu0
        %v2603 = vpop.trf.xlu0
        %v2604 = vpop.trf.xlu0
        %v2605 = vpop.trf.xlu0
        %v2606 = vpop.trf.xlu0
        %v2607 = vpop.trf.xlu0
        %v2608 = vpop.trf.xlu0
        %v2609 = vpop.trf.xlu0
        %v2610 = vpop.trf.xlu0
        %v2611 = vpop.trf.xlu0
        %v2612 = vpop.trf.xlu0
        %v2613 = vpop.trf.xlu0
        %v2614 = vpop.trf.xlu0
        %v2615 = vpop.trf.xlu0
        %v2616 = vpop.trf.xlu0
        %v2617 = vpop.trf.xlu0
        %v2619 = vsel %vm428, %v2602, 0
        %v2622 = vsel %vm428, %v2603, 0
        %2624 = vmatpush.msra.mxu0 0.0
        %2625 = vmatpush.msra.mxu0 0.0
        %2626 = vmatpush.msra.mxu0 0.0
        %2627 = vmatpush.msra.mxu0 0.0
        %2628 = vmatpush.msra.mxu0 0.0
        %2629 = vmatpush.msra.mxu0 0.0
        %2630 = vmatpush.msra.mxu0 0.0
        %2631 = vmatpush.msra.mxu0 0.0
        %2632 = vmatpush.msra.mxu0 0.0
        %2633 = vmatpush.msra.mxu0 0.0
        %2634 = vmatpush.msra.mxu0 0.0
        %2635 = vmatpush.msra.mxu0 0.0
        %2636 = vmatpush.msra.mxu0 0.0
        %2637 = vmatpush.msra.mxu0 0.0
        %2638 = vmatpush.msra.mxu0 %v2134
        %2639 = vmatpush.msra.mxu0 %v2133
        %2640 = vmatmul.f32.gmra.mxu0 %v2619
        %v2641 = vpop.f32.mrf.mxu0
        %v2642 = vadd.f32 0.0, %v2641
        %2643 = vmatmul.f32.gmra.mxu0 %v2622
        %v2644 = vpop.f32.mrf.mxu0
        %v2645 = vadd.f32 0.0, %v2644
        %2646 = vdwg.mxu0
        %2647 = vxpose.xlu0.b32.start [1/16] %v2151, 128
        %2648 = vxpose.xlu0.b32.cont [2/16] %v2152, 128
        %2649 = vxpose.xlu0.b32.cont [3/16] 0.0, 128
        %2650 = vxpose.xlu0.b32.cont [4/16] 0.0, 128
        %2651 = vxpose.xlu0.b32.cont [5/16] 0.0, 128
        %2652 = vxpose.xlu0.b32.cont [6/16] 0.0, 128
        %2653 = vxpose.xlu0.b32.cont [7/16] 0.0, 128
        %2654 = vxpose.xlu0.b32.cont [8/16] 0.0, 128
        %2655 = vxpose.xlu0.b32.cont [9/16] 0.0, 128
        %2656 = vxpose.xlu0.b32.cont [10/16] 0.0, 128
        %2657 = vxpose.xlu0.b32.cont [11/16] 0.0, 128
        %2658 = vxpose.xlu0.b32.cont [12/16] 0.0, 128
        %2659 = vxpose.xlu0.b32.cont [13/16] 0.0, 128
        %2660 = vxpose.xlu0.b32.cont [14/16] 0.0, 128
        %2661 = vxpose.xlu0.b32.cont [15/16] 0.0, 128
        %2662 = vxpose.xlu0.b32.end [16/16] 0.0, 128
        %v2663 = vpop.trf.xlu0
        %v2664 = vpop.trf.xlu0
        %v2665 = vpop.trf.xlu0
        %v2666 = vpop.trf.xlu0
        %v2667 = vpop.trf.xlu0
        %v2668 = vpop.trf.xlu0
        %v2669 = vpop.trf.xlu0
        %v2670 = vpop.trf.xlu0
        %v2671 = vpop.trf.xlu0
        %v2672 = vpop.trf.xlu0
        %v2673 = vpop.trf.xlu0
        %v2674 = vpop.trf.xlu0
        %v2675 = vpop.trf.xlu0
        %v2676 = vpop.trf.xlu0
        %v2677 = vpop.trf.xlu0
        %v2678 = vpop.trf.xlu0
        %v2680 = vsel %vm428, %v2663, 0
        %v2683 = vsel %vm428, %v2664, 0
        %2685 = vmatpush.msra.mxu0 0.0
        %2686 = vmatpush.msra.mxu0 0.0
        %2687 = vmatpush.msra.mxu0 0.0
        %2688 = vmatpush.msra.mxu0 0.0
        %2689 = vmatpush.msra.mxu0 0.0
        %2690 = vmatpush.msra.mxu0 0.0
        %2691 = vmatpush.msra.mxu0 0.0
        %2692 = vmatpush.msra.mxu0 0.0
        %2693 = vmatpush.msra.mxu0 0.0
        %2694 = vmatpush.msra.mxu0 0.0
        %2695 = vmatpush.msra.mxu0 0.0
        %2696 = vmatpush.msra.mxu0 0.0
        %2697 = vmatpush.msra.mxu0 0.0
        %2698 = vmatpush.msra.mxu0 0.0
        %2699 = vmatpush.msra.mxu0 %v2128
        %2700 = vmatpush.msra.mxu0 %v2127
        %2701 = vmatmul.f32.gmra.mxu0 %v2680
        %v2702 = vpop.f32.mrf.mxu0
        %v2703 = vadd.f32 0.0, %v2702
        %2704 = vmatmul.f32.gmra.mxu0 %v2683
        %v2705 = vpop.f32.mrf.mxu0
        %v2706 = vadd.f32 0.0, %v2705
        %2707 = vdwg.mxu0
        %2708 = vxpose.xlu0.b32.start [1/16] %v2153, 128
        %2709 = vxpose.xlu0.b32.cont [2/16] %v2154, 128
        %2710 = vxpose.xlu0.b32.cont [3/16] 0.0, 128
        %2711 = vxpose.xlu0.b32.cont [4/16] 0.0, 128
        %2712 = vxpose.xlu0.b32.cont [5/16] 0.0, 128
        %2713 = vxpose.xlu0.b32.cont [6/16] 0.0, 128
        %2714 = vxpose.xlu0.b32.cont [7/16] 0.0, 128
        %2715 = vxpose.xlu0.b32.cont [8/16] 0.0, 128
        %2716 = vxpose.xlu0.b32.cont [9/16] 0.0, 128
        %2717 = vxpose.xlu0.b32.cont [10/16] 0.0, 128
        %2718 = vxpose.xlu0.b32.cont [11/16] 0.0, 128
        %2719 = vxpose.xlu0.b32.cont [12/16] 0.0, 128
        %2720 = vxpose.xlu0.b32.cont [13/16] 0.0, 128
        %2721 = vxpose.xlu0.b32.cont [14/16] 0.0, 128
        %2722 = vxpose.xlu0.b32.cont [15/16] 0.0, 128
        %2723 = vxpose.xlu0.b32.end [16/16] 0.0, 128
        %v2724 = vpop.trf.xlu0
        %v2725 = vpop.trf.xlu0
        %v2726 = vpop.trf.xlu0
        %v2727 = vpop.trf.xlu0
        %v2728 = vpop.trf.xlu0
        %v2729 = vpop.trf.xlu0
        %v2730 = vpop.trf.xlu0
        %v2731 = vpop.trf.xlu0
        %v2732 = vpop.trf.xlu0
        %v2733 = vpop.trf.xlu0
        %v2734 = vpop.trf.xlu0
        %v2735 = vpop.trf.xlu0
        %v2736 = vpop.trf.xlu0
        %v2737 = vpop.trf.xlu0
        %v2738 = vpop.trf.xlu0
        %v2739 = vpop.trf.xlu0
        %v2741 = vsel %vm428, %v2724, 0
        %v2744 = vsel %vm428, %v2725, 0
        %2746 = vmatpush.msra.mxu0 0.0
        %2747 = vmatpush.msra.mxu0 0.0
        %2748 = vmatpush.msra.mxu0 0.0
        %2749 = vmatpush.msra.mxu0 0.0
        %2750 = vmatpush.msra.mxu0 0.0
        %2751 = vmatpush.msra.mxu0 0.0
        %2752 = vmatpush.msra.mxu0 0.0
        %2753 = vmatpush.msra.mxu0 0.0
        %2754 = vmatpush.msra.mxu0 0.0
        %2755 = vmatpush.msra.mxu0 0.0
        %2756 = vmatpush.msra.mxu0 0.0
        %2757 = vmatpush.msra.mxu0 0.0
        %2758 = vmatpush.msra.mxu0 0.0
        %2759 = vmatpush.msra.mxu0 0.0
        %2760 = vmatpush.msra.mxu0 %v2130
        %2761 = vmatpush.msra.mxu0 %v2129
        %2762 = vmatmul.f32.gmra.mxu0 %v2741
        %v2763 = vpop.f32.mrf.mxu0
        %v2764 = vadd.f32 0.0, %v2763
        %2765 = vmatmul.f32.gmra.mxu0 %v2744
        %v2766 = vpop.f32.mrf.mxu0
        %v2767 = vadd.f32 0.0, %v2766
        %2768 = vdwg.mxu0
        %2769 = vxpose.xlu0.b32.start [1/16] %v2155, 128
        %2770 = vxpose.xlu0.b32.cont [2/16] %v2156, 128
        %2771 = vxpose.xlu0.b32.cont [3/16] 0.0, 128
        %2772 = vxpose.xlu0.b32.cont [4/16] 0.0, 128
        %2773 = vxpose.xlu0.b32.cont [5/16] 0.0, 128
        %2774 = vxpose.xlu0.b32.cont [6/16] 0.0, 128
        %2775 = vxpose.xlu0.b32.cont [7/16] 0.0, 128
        %2776 = vxpose.xlu0.b32.cont [8/16] 0.0, 128
        %2777 = vxpose.xlu0.b32.cont [9/16] 0.0, 128
        %2778 = vxpose.xlu0.b32.cont [10/16] 0.0, 128
        %2779 = vxpose.xlu0.b32.cont [11/16] 0.0, 128
        %2780 = vxpose.xlu0.b32.cont [12/16] 0.0, 128
        %2781 = vxpose.xlu0.b32.cont [13/16] 0.0, 128
        %2782 = vxpose.xlu0.b32.cont [14/16] 0.0, 128
        %2783 = vxpose.xlu0.b32.cont [15/16] 0.0, 128
        %2784 = vxpose.xlu0.b32.end [16/16] 0.0, 128
        %v2785 = vpop.trf.xlu0
        %v2786 = vpop.trf.xlu0
        %v2787 = vpop.trf.xlu0
        %v2788 = vpop.trf.xlu0
        %v2789 = vpop.trf.xlu0
        %v2790 = vpop.trf.xlu0
        %v2791 = vpop.trf.xlu0
        %v2792 = vpop.trf.xlu0
        %v2793 = vpop.trf.xlu0
        %v2794 = vpop.trf.xlu0
        %v2795 = vpop.trf.xlu0
        %v2796 = vpop.trf.xlu0
        %v2797 = vpop.trf.xlu0
        %v2798 = vpop.trf.xlu0
        %v2799 = vpop.trf.xlu0
        %v2800 = vpop.trf.xlu0
        %v2802 = vsel %vm428, %v2785, 0
        %v2805 = vsel %vm428, %v2786, 0
        %2807 = vmatpush.msra.mxu0 0.0
        %2808 = vmatpush.msra.mxu0 0.0
        %2809 = vmatpush.msra.mxu0 0.0
        %2810 = vmatpush.msra.mxu0 0.0
        %2811 = vmatpush.msra.mxu0 0.0
        %2812 = vmatpush.msra.mxu0 0.0
        %2813 = vmatpush.msra.mxu0 0.0
        %2814 = vmatpush.msra.mxu0 0.0
        %2815 = vmatpush.msra.mxu0 0.0
        %2816 = vmatpush.msra.mxu0 0.0
        %2817 = vmatpush.msra.mxu0 0.0
        %2818 = vmatpush.msra.mxu0 0.0
        %2819 = vmatpush.msra.mxu0 0.0
        %2820 = vmatpush.msra.mxu0 0.0
        %2821 = vmatpush.msra.mxu0 %v2132
        %2822 = vmatpush.msra.mxu0 %v2131
        %2823 = vmatmul.f32.gmra.mxu0 %v2802
        %v2824 = vpop.f32.mrf.mxu0
        %v2825 = vadd.f32 0.0, %v2824
        %2826 = vmatmul.f32.gmra.mxu0 %v2805
        %v2827 = vpop.f32.mrf.mxu0
        %v2828 = vadd.f32 0.0, %v2827
        %2829 = vdwg.mxu0
        %2830 = vxpose.xlu0.b32.start [1/16] %v2157, 128
        %2831 = vxpose.xlu0.b32.cont [2/16] %v2158, 128
        %2832 = vxpose.xlu0.b32.cont [3/16] 0.0, 128
        %2833 = vxpose.xlu0.b32.cont [4/16] 0.0, 128
        %2834 = vxpose.xlu0.b32.cont [5/16] 0.0, 128
        %2835 = vxpose.xlu0.b32.cont [6/16] 0.0, 128
        %2836 = vxpose.xlu0.b32.cont [7/16] 0.0, 128
        %2837 = vxpose.xlu0.b32.cont [8/16] 0.0, 128
        %2838 = vxpose.xlu0.b32.cont [9/16] 0.0, 128
        %2839 = vxpose.xlu0.b32.cont [10/16] 0.0, 128
        %2840 = vxpose.xlu0.b32.cont [11/16] 0.0, 128
        %2841 = vxpose.xlu0.b32.cont [12/16] 0.0, 128
        %2842 = vxpose.xlu0.b32.cont [13/16] 0.0, 128
        %2843 = vxpose.xlu0.b32.cont [14/16] 0.0, 128
        %2844 = vxpose.xlu0.b32.cont [15/16] 0.0, 128
        %2845 = vxpose.xlu0.b32.end [16/16] 0.0, 128
        %v2846 = vpop.trf.xlu0
        %v2847 = vpop.trf.xlu0
        %v2848 = vpop.trf.xlu0
        %v2849 = vpop.trf.xlu0
        %v2850 = vpop.trf.xlu0
        %v2851 = vpop.trf.xlu0
        %v2852 = vpop.trf.xlu0
        %v2853 = vpop.trf.xlu0
        %v2854 = vpop.trf.xlu0
        %v2855 = vpop.trf.xlu0
        %v2856 = vpop.trf.xlu0
        %v2857 = vpop.trf.xlu0
        %v2858 = vpop.trf.xlu0
        %v2859 = vpop.trf.xlu0
        %v2860 = vpop.trf.xlu0
        %v2861 = vpop.trf.xlu0
        %v2863 = vsel %vm428, %v2846, 0
        %v2866 = vsel %vm428, %v2847, 0
        %2868 = vmatpush.msra.mxu0 0.0
        %2869 = vmatpush.msra.mxu0 0.0
        %2870 = vmatpush.msra.mxu0 0.0
        %2871 = vmatpush.msra.mxu0 0.0
        %2872 = vmatpush.msra.mxu0 0.0
        %2873 = vmatpush.msra.mxu0 0.0
        %2874 = vmatpush.msra.mxu0 0.0
        %2875 = vmatpush.msra.mxu0 0.0
        %2876 = vmatpush.msra.mxu0 0.0
        %2877 = vmatpush.msra.mxu0 0.0
        %2878 = vmatpush.msra.mxu0 0.0
        %2879 = vmatpush.msra.mxu0 0.0
        %2880 = vmatpush.msra.mxu0 0.0
        %2881 = vmatpush.msra.mxu0 0.0
        %2882 = vmatpush.msra.mxu0 %v2134
        %2883 = vmatpush.msra.mxu0 %v2133
        %2884 = vmatmul.f32.gmra.mxu0 %v2863
        %v2885 = vpop.f32.mrf.mxu0
        %v2886 = vadd.f32 0.0, %v2885
        %2887 = vmatmul.f32.gmra.mxu0 %v2866
        %v2888 = vpop.f32.mrf.mxu0
        %v2889 = vadd.f32 0.0, %v2888
        %2890 = vdwg.mxu0
        %v2891 = vsub.f32 0.0, %v2215
        %v2892 = vsub.f32 0.0, %v2218
        %v2893 = vsub.f32 0.0, %v2276
        %v2894 = vsub.f32 0.0, %v2279
        %v2895 = vsub.f32 0.0, %v2337
        %v2896 = vsub.f32 0.0, %v2340
        %v2897 = vsub.f32 0.0, %v2398
        %v2898 = vsub.f32 0.0, %v2401
        %v2899 = vsub.f32 0.0, %v2459
        %v2900 = vsub.f32 0.0, %v2462
        %v2901 = vsub.f32 0.0, %v2520
        %v2902 = vsub.f32 0.0, %v2523
        %v2903 = vsub.f32 0.0, %v2581
        %v2904 = vsub.f32 0.0, %v2584
        %v2905 = vsub.f32 0.0, %v2642
        %v2906 = vsub.f32 0.0, %v2645
        %v2907 = vsub.f32 0.0, %v2703
        %v2908 = vsub.f32 0.0, %v2706
        %v2909 = vsub.f32 0.0, %v2764
        %v2910 = vsub.f32 0.0, %v2767
        %v2911 = vsub.f32 0.0, %v2825
        %v2912 = vsub.f32 0.0, %v2828
        %v2913 = vsub.f32 0.0, %v2886
        %v2914 = vsub.f32 0.0, %v2889
        %v2915 = vmul.f32 %v2891, 1.442695
        %v2916 = vpow.pop %v2915
        %v2917 = vmul.f32 %v2892, 1.442695
        %v2918 = vpow.pop %v2917
        %v2919 = vmul.f32 %v2893, 1.442695
        %v2920 = vpow.pop %v2919
        %v2921 = vmul.f32 %v2894, 1.442695
        %v2922 = vpow.pop %v2921
        %v2923 = vmul.f32 %v2895, 1.442695
        %v2924 = vpow.pop %v2923
        %v2925 = vmul.f32 %v2896, 1.442695
        %v2926 = vpow.pop %v2925
        %v2927 = vmul.f32 %v2897, 1.442695
        %v2928 = vpow.pop %v2927
        %v2929 = vmul.f32 %v2898, 1.442695
        %v2930 = vpow.pop %v2929
        %v2931 = vmul.f32 %v2899, 1.442695
        %v2932 = vpow.pop %v2931
        %v2933 = vmul.f32 %v2900, 1.442695
        %v2934 = vpow.pop %v2933
        %v2935 = vmul.f32 %v2901, 1.442695
        %v2936 = vpow.pop %v2935
        %v2937 = vmul.f32 %v2902, 1.442695
        %v2938 = vpow.pop %v2937
        %v2939 = vmul.f32 %v2903, 1.442695
        %v2940 = vpow.pop %v2939
        %v2941 = vmul.f32 %v2904, 1.442695
        %v2942 = vpow.pop %v2941
        %v2943 = vmul.f32 %v2905, 1.442695
        %v2944 = vpow.pop %v2943
        %v2945 = vmul.f32 %v2906, 1.442695
        %v2946 = vpow.pop %v2945
        %v2947 = vmul.f32 %v2907, 1.442695
        %v2948 = vpow.pop %v2947
        %v2949 = vmul.f32 %v2908, 1.442695
        %v2950 = vpow.pop %v2949
        %v2951 = vmul.f32 %v2909, 1.442695
        %v2952 = vpow.pop %v2951
        %v2953 = vmul.f32 %v2910, 1.442695
        %v2954 = vpow.pop %v2953
        %v2955 = vmul.f32 %v2911, 1.442695
        %v2956 = vpow.pop %v2955
        %v2957 = vmul.f32 %v2912, 1.442695
        %v2958 = vpow.pop %v2957
        %v2959 = vmul.f32 %v2913, 1.442695
        %v2960 = vpow.pop %v2959
        %v2961 = vmul.f32 %v2914, 1.442695
        %v2962 = vpow.pop %v2961
        %v2963 = vadd.f32 %v2916, 1.0
        %v2964 = vadd.f32 %v2918, 1.0
        %v2965 = vadd.f32 %v2920, 1.0
        %v2966 = vadd.f32 %v2922, 1.0
        %v2967 = vadd.f32 %v2924, 1.0
        %v2968 = vadd.f32 %v2926, 1.0
        %v2969 = vadd.f32 %v2928, 1.0
        %v2970 = vadd.f32 %v2930, 1.0
        %v2971 = vadd.f32 %v2932, 1.0
        %v2972 = vadd.f32 %v2934, 1.0
        %v2973 = vadd.f32 %v2936, 1.0
        %v2974 = vadd.f32 %v2938, 1.0
        %v2975 = vadd.f32 %v2940, 1.0
        %v2976 = vadd.f32 %v2942, 1.0
        %v2977 = vadd.f32 %v2944, 1.0
        %v2978 = vadd.f32 %v2946, 1.0
        %v2979 = vadd.f32 %v2948, 1.0
        %v2980 = vadd.f32 %v2950, 1.0
        %v2981 = vadd.f32 %v2952, 1.0
        %v2982 = vadd.f32 %v2954, 1.0
        %v2983 = vadd.f32 %v2956, 1.0
        %v2984 = vadd.f32 %v2958, 1.0
        %v2985 = vadd.f32 %v2960, 1.0
        %v2986 = vadd.f32 %v2962, 1.0
        %v2987 = vrcp.pop %v2963
        %v2988 = vrcp.pop %v2964
        %v2989 = vrcp.pop %v2965
        %v2990 = vrcp.pop %v2966
        %v2991 = vrcp.pop %v2967
        %v2992 = vrcp.pop %v2968
        %v2993 = vrcp.pop %v2969
        %v2994 = vrcp.pop %v2970
        %v2995 = vrcp.pop %v2971
        %v2996 = vrcp.pop %v2972
        %v2997 = vrcp.pop %v2973
        %v2998 = vrcp.pop %v2974
        %v2999 = vrcp.pop %v2975
        %v3000 = vrcp.pop %v2976
        %v3001 = vrcp.pop %v2977
        %v3002 = vrcp.pop %v2978
        %v3003 = vrcp.pop %v2979
        %v3004 = vrcp.pop %v2980
        %v3005 = vrcp.pop %v2981
        %v3006 = vrcp.pop %v2982
        %v3007 = vrcp.pop %v2983
        %v3008 = vrcp.pop %v2984
        %v3009 = vrcp.pop %v2985
        %v3010 = vrcp.pop %v2986
        %v3023 = vrot.slane %v2989, 7
        %vm3024 = vcmask 1041409
        %v3025 = vsel %vm3024, %v3023, %v2987
        %v3026 = vrot.slane %v2991, 6
        %vm3027 = vcmask 1042434
        %v3028 = vsel %vm3027, %v3026, %v3025
        %v3029 = vrot.slane %v2993, 5
        %vm3030 = vcmask 1043459
        %v3031 = vsel %vm3030, %v3029, %v3028
        %v3032 = vrot.slane %v2995, 4
        %vm3033 = vcmask 1044484
        %v3034 = vsel %vm3033, %v3032, %v3031
        %v3035 = vrot.slane %v2997, 3
        %vm3036 = vcmask 1045509
        %v3037 = vsel %vm3036, %v3035, %v3034
        %v3038 = vrot.slane %v2999, 2
        %vm3039 = vcmask 1046534
        %v3040 = vsel %vm3039, %v3038, %v3037
        %v3041 = vrot.slane %v3001, 1
        %vm3042 = vcmask 1047559
        %v3043 = vsel %vm3042, %v3041, %v3040
        %v3044 = vrot.slane %v3005, 7
        %v3045 = vsel %vm3024, %v3044, %v3003
        %v3046 = vrot.slane %v3007, 6
        %v3047 = vsel %vm3027, %v3046, %v3045
        %v3048 = vrot.slane %v3009, 5
        %v3049 = vsel %vm3030, %v3048, %v3047
        %3052 = vst.msk [vmem:[#allocation4] sm:$0xff] %vm428, %v3043
        %vm3053 = vcmask 125952
        %3054 = vst.msk [vmem:[#allocation4 + $0x10] sm:$0xf] %vm3053, %v3049
        %v3055 = vrot.slane %v2987, 1
        %v3056 = vsel %vm3024, %v2989, %v3055
        %v3057 = vrot.slane %v2991, 7
        %v3058 = vsel %vm3027, %v3057, %v3056
        %v3059 = vrot.slane %v2993, 6
        %v3060 = vsel %vm3030, %v3059, %v3058
        %v3061 = vrot.slane %v2995, 5
        %v3062 = vsel %vm3033, %v3061, %v3060
        %v3063 = vrot.slane %v2997, 4
        %v3064 = vsel %vm3036, %v3063, %v3062
        %v3065 = vrot.slane %v2999, 3
        %v3066 = vsel %vm3039, %v3065, %v3064
        %v3067 = vrot.slane %v3001, 2
        %v3068 = vsel %vm3042, %v3067, %v3066
        %v3069 = vrot.slane %v3003, 1
        %v3070 = vsel %vm3024, %v3005, %v3069
        %v3071 = vrot.slane %v3007, 7
        %v3072 = vsel %vm3027, %v3071, %v3070
        %v3073 = vrot.slane %v3009, 6
        %v3074 = vsel %vm3030, %v3073, %v3072
        %3075 = vrot.lane.b32.xlu0 %v3068, 16
        %v3076 = vpop.permute.xlu0 %3075
        %3077 = vrot.lane.b32.xlu0 %v3074, 16
        %v3078 = vpop.permute.xlu0 %3077
        %vm3081 = vcmask 261248
        %3082 = vst.msk [vmem:[#allocation4] sm:$0xff] %vm3081, %v3076
        %vm3083 = vcmask 257152
        %3084 = vst.msk [vmem:[#allocation4 + $0x10] sm:$0xf] %vm3083, %v3078
        %v3085 = vrot.slane %v2987, 2
        %v3086 = vrot.slane %v2989, 1
        %v3087 = vsel %vm3024, %v3086, %v3085
        %v3088 = vsel %vm3027, %v2991, %v3087
        %v3089 = vrot.slane %v2993, 7
        %v3090 = vsel %vm3030, %v3089, %v3088
        %v3091 = vrot.slane %v2995, 6
        %v3092 = vsel %vm3033, %v3091, %v3090
        %v3093 = vrot.slane %v2997, 5
        %v3094 = vsel %vm3036, %v3093, %v3092
        %v3095 = vrot.slane %v2999, 4
        %v3096 = vsel %vm3039, %v3095, %v3094
        %v3097 = vrot.slane %v3001, 3
        %v3098 = vsel %vm3042, %v3097, %v3096
        %v3099 = vrot.slane %v3003, 2
        %v3100 = vrot.slane %v3005, 1
        %v3101 = vsel %vm3024, %v3100, %v3099
        %v3102 = vsel %vm3027, %v3007, %v3101
        %v3103 = vrot.slane %v3009, 7
        %v3104 = vsel %vm3030, %v3103, %v3102
        %3105 = vrot.lane.b32.xlu0 %v3098, 32
        %v3106 = vpop.permute.xlu0 %3105
        %3107 = vrot.lane.b32.xlu0 %v3104, 32
        %v3108 = vpop.permute.xlu0 %3107
        %vm3111 = vcmask 392448
        %3112 = vst.msk [vmem:[#allocation4] sm:$0xff] %vm3111, %v3106
        %vm3113 = vcmask 388352
        %3114 = vst.msk [vmem:[#allocation4 + $0x10] sm:$0xf] %vm3113, %v3108
        %v3115 = vrot.slane %v2987, 3
        %v3116 = vrot.slane %v2989, 2
        %v3117 = vsel %vm3024, %v3116, %v3115
        %v3118 = vrot.slane %v2991, 1
        %v3119 = vsel %vm3027, %v3118, %v3117
        %v3120 = vsel %vm3030, %v2993, %v3119
        %v3121 = vrot.slane %v2995, 7
        %v3122 = vsel %vm3033, %v3121, %v3120
        %v3123 = vrot.slane %v2997, 6
        %v3124 = vsel %vm3036, %v3123, %v3122
        %v3125 = vrot.slane %v2999, 5
        %v3126 = vsel %vm3039, %v3125, %v3124
        %v3127 = vrot.slane %v3001, 4
        %v3128 = vsel %vm3042, %v3127, %v3126
        %v3129 = vrot.slane %v3003, 3
        %v3130 = vrot.slane %v3005, 2
        %v3131 = vsel %vm3024, %v3130, %v3129
        %v3132 = vrot.slane %v3007, 1
        %v3133 = vsel %vm3027, %v3132, %v3131
        %v3134 = vsel %vm3030, %v3009, %v3133
        %3135 = vrot.lane.b32.xlu0 %v3128, 48
        %v3136 = vpop.permute.xlu0 %3135
        %3137 = vrot.lane.b32.xlu0 %v3134, 48
        %v3138 = vpop.permute.xlu0 %3137
        %vm3141 = vcmask 523648
        %3142 = vst.msk [vmem:[#allocation4] sm:$0xff] %vm3141, %v3136
        %vm3143 = vcmask 519552
        %3144 = vst.msk [vmem:[#allocation4 + $0x10] sm:$0xf] %vm3143, %v3138
        %v3145 = vrot.slane %v2987, 4
        %v3146 = vrot.slane %v2989, 3
        %v3147 = vsel %vm3024, %v3146, %v3145
        %v3148 = vrot.slane %v2991, 2
        %v3149 = vsel %vm3027, %v3148, %v3147
        %v3150 = vrot.slane %v2993, 1
        %v3151 = vsel %vm3030, %v3150, %v3149
        %v3152 = vsel %vm3033, %v2995, %v3151
        %v3153 = vrot.slane %v2997, 7
        %v3154 = vsel %vm3036, %v3153, %v3152
        %v3155 = vrot.slane %v2999, 6
        %v3156 = vsel %vm3039, %v3155, %v3154
        %v3157 = vrot.slane %v3001, 5
        %v3158 = vsel %vm3042, %v3157, %v3156
        %v3159 = vrot.slane %v3003, 4
        %v3160 = vrot.slane %v3005, 3
        %v3161 = vsel %vm3024, %v3160, %v3159
        %v3162 = vrot.slane %v3007, 2
        %v3163 = vsel %vm3027, %v3162, %v3161
        %v3164 = vrot.slane %v3009, 1
        %v3165 = vsel %vm3030, %v3164, %v3163
        %3166 = vrot.lane.b32.xlu0 %v3158, 64
        %v3167 = vpop.permute.xlu0 %3166
        %3168 = vrot.lane.b32.xlu0 %v3165, 64
        %v3169 = vpop.permute.xlu0 %3168
        %vm3172 = vcmask 654848
        %3173 = vst.msk [vmem:[#allocation4] sm:$0xff] %vm3172, %v3167
        %vm3174 = vcmask 650752
        %3175 = vst.msk [vmem:[#allocation4 + $0x10] sm:$0xf] %vm3174, %v3169
        %v3176 = vrot.slane %v2987, 5
        %v3177 = vrot.slane %v2989, 4
        %v3178 = vsel %vm3024, %v3177, %v3176
        %v3179 = vrot.slane %v2991, 3
        %v3180 = vsel %vm3027, %v3179, %v3178
        %v3181 = vrot.slane %v2993, 2
        %v3182 = vsel %vm3030, %v3181, %v3180
        %v3183 = vrot.slane %v2995, 1
        %v3184 = vsel %vm3033, %v3183, %v3182
        %v3185 = vsel %vm3036, %v2997, %v3184
        %v3186 = vrot.slane %v2999, 7
        %v3187 = vsel %vm3039, %v3186, %v3185
        %v3188 = vrot.slane %v3001, 6
        %v3189 = vsel %vm3042, %v3188, %v3187
        %v3190 = vrot.slane %v3003, 5
        %v3191 = vrot.slane %v3005, 4
        %v3192 = vsel %vm3024, %v3191, %v3190
        %v3193 = vrot.slane %v3007, 3
        %v3194 = vsel %vm3027, %v3193, %v3192
        %v3195 = vrot.slane %v3009, 2
        %v3196 = vsel %vm3030, %v3195, %v3194
        %3197 = vrot.lane.b32.xlu0 %v3189, 80
        %v3198 = vpop.permute.xlu0 %3197
        %3199 = vrot.lane.b32.xlu0 %v3196, 80
        %v3200 = vpop.permute.xlu0 %3199
        %vm3203 = vcmask 786048
        %3204 = vst.msk [vmem:[#allocation4] sm:$0xff] %vm3203, %v3198
        %vm3205 = vcmask 781952
        %3206 = vst.msk [vmem:[#allocation4 + $0x10] sm:$0xf] %vm3205, %v3200
        %v3207 = vrot.slane %v2987, 6
        %v3208 = vrot.slane %v2989, 5
        %v3209 = vsel %vm3024, %v3208, %v3207
        %v3210 = vrot.slane %v2991, 4
        %v3211 = vsel %vm3027, %v3210, %v3209
        %v3212 = vrot.slane %v2993, 3
        %v3213 = vsel %vm3030, %v3212, %v3211
        %v3214 = vrot.slane %v2995, 2
        %v3215 = vsel %vm3033, %v3214, %v3213
        %v3216 = vrot.slane %v2997, 1
        %v3217 = vsel %vm3036, %v3216, %v3215
        %v3218 = vsel %vm3039, %v2999, %v3217
        %v3219 = vrot.slane %v3001, 7
        %v3220 = vsel %vm3042, %v3219, %v3218
        %v3221 = vrot.slane %v3003, 6
        %v3222 = vrot.slane %v3005, 5
        %v3223 = vsel %vm3024, %v3222, %v3221
        %v3224 = vrot.slane %v3007, 4
        %v3225 = vsel %vm3027, %v3224, %v3223
        %v3226 = vrot.slane %v3009, 3
        %v3227 = vsel %vm3030, %v3226, %v3225
        %3228 = vrot.lane.b32.xlu0 %v3220, 96
        %v3229 = vpop.permute.xlu0 %3228
        %3230 = vrot.lane.b32.xlu0 %v3227, 96
        %v3231 = vpop.permute.xlu0 %3230
        %vm3234 = vcmask 917248
        %3235 = vst.msk [vmem:[#allocation4] sm:$0xff] %vm3234, %v3229
        %vm3236 = vcmask 913152
        %3237 = vst.msk [vmem:[#allocation4 + $0x10] sm:$0xf] %vm3236, %v3231
        %v3238 = vrot.slane %v2987, 7
        %v3239 = vrot.slane %v2989, 6
        %v3240 = vsel %vm3024, %v3239, %v3238
        %v3241 = vrot.slane %v2991, 5
        %v3242 = vsel %vm3027, %v3241, %v3240
        %v3243 = vrot.slane %v2993, 4
        %v3244 = vsel %vm3030, %v3243, %v3242
        %v3245 = vrot.slane %v2995, 3
        %v3246 = vsel %vm3033, %v3245, %v3244
        %v3247 = vrot.slane %v2997, 2
        %v3248 = vsel %vm3036, %v3247, %v3246
        %v3249 = vrot.slane %v2999, 1
        %v3250 = vsel %vm3039, %v3249, %v3248
        %v3251 = vsel %vm3042, %v3001, %v3250
        %v3252 = vrot.slane %v3003, 7
        %v3253 = vrot.slane %v3005, 6
        %v3254 = vsel %vm3024, %v3253, %v3252
        %v3255 = vrot.slane %v3007, 5
        %v3256 = vsel %vm3027, %v3255, %v3254
        %v3257 = vrot.slane %v3009, 4
        %v3258 = vsel %vm3030, %v3257, %v3256
        %3259 = vrot.lane.b32.xlu0 %v3251, 112
        %v3260 = vpop.permute.xlu0 %3259
        %3261 = vrot.lane.b32.xlu0 %v3258, 112
        %v3262 = vpop.permute.xlu0 %3261
        %vm3265 = vcmask 1048448
        %3266 = vst.msk [vmem:[#allocation4] sm:$0xff] %vm3265, %v3260
        %vm3267 = vcmask 1044352
        %3268 = vst.msk [vmem:[#allocation4 + $0x10] sm:$0xf] %vm3267, %v3262
        %v3281 = vrot.slane %v2990, 7
        %v3282 = vsel %vm3024, %v3281, %v2988
        %v3283 = vrot.slane %v2992, 6
        %v3284 = vsel %vm3027, %v3283, %v3282
        %v3285 = vrot.slane %v2994, 5
        %v3286 = vsel %vm3030, %v3285, %v3284
        %v3287 = vrot.slane %v2996, 4
        %v3288 = vsel %vm3033, %v3287, %v3286
        %v3289 = vrot.slane %v2998, 3
        %v3290 = vsel %vm3036, %v3289, %v3288
        %v3291 = vrot.slane %v3000, 2
        %v3292 = vsel %vm3039, %v3291, %v3290
        %v3293 = vrot.slane %v3002, 1
        %v3294 = vsel %vm3042, %v3293, %v3292
        %v3295 = vrot.slane %v3006, 7
        %v3296 = vsel %vm3024, %v3295, %v3004
        %v3297 = vrot.slane %v3008, 6
        %v3298 = vsel %vm3027, %v3297, %v3296
        %v3299 = vrot.slane %v3010, 5
        %v3300 = vsel %vm3030, %v3299, %v3298
        %3303 = vst.msk [vmem:[#allocation4 + $0x8] sm:$0xff] %vm428, %v3294
        %3304 = vst.msk [vmem:[#allocation4 + $0x18] sm:$0xf] %vm3053, %v3300
        %v3305 = vrot.slane %v2988, 1
        %v3306 = vsel %vm3024, %v2990, %v3305
        %v3307 = vrot.slane %v2992, 7
        %v3308 = vsel %vm3027, %v3307, %v3306
        %v3309 = vrot.slane %v2994, 6
        %v3310 = vsel %vm3030, %v3309, %v3308
        %v3311 = vrot.slane %v2996, 5
        %v3312 = vsel %vm3033, %v3311, %v3310
        %v3313 = vrot.slane %v2998, 4
        %v3314 = vsel %vm3036, %v3313, %v3312
        %v3315 = vrot.slane %v3000, 3
        %v3316 = vsel %vm3039, %v3315, %v3314
        %v3317 = vrot.slane %v3002, 2
        %v3318 = vsel %vm3042, %v3317, %v3316
        %v3319 = vrot.slane %v3004, 1
        %v3320 = vsel %vm3024, %v3006, %v3319
        %v3321 = vrot.slane %v3008, 7
        %v3322 = vsel %vm3027, %v3321, %v3320
        %v3323 = vrot.slane %v3010, 6
        %v3324 = vsel %vm3030, %v3323, %v3322
        %3325 = vrot.lane.b32.xlu0 %v3318, 16
        %v3326 = vpop.permute.xlu0 %3325
        %3327 = vrot.lane.b32.xlu0 %v3324, 16
        %v3328 = vpop.permute.xlu0 %3327
        %3331 = vst.msk [vmem:[#allocation4 + $0x8] sm:$0xff] %vm3081, %v3326
        %3332 = vst.msk [vmem:[#allocation4 + $0x18] sm:$0xf] %vm3083, %v3328
        %v3333 = vrot.slane %v2988, 2
        %v3334 = vrot.slane %v2990, 1
        %v3335 = vsel %vm3024, %v3334, %v3333
        %v3336 = vsel %vm3027, %v2992, %v3335
        %v3337 = vrot.slane %v2994, 7
        %v3338 = vsel %vm3030, %v3337, %v3336
        %v3339 = vrot.slane %v2996, 6
        %v3340 = vsel %vm3033, %v3339, %v3338
        %v3341 = vrot.slane %v2998, 5
        %v3342 = vsel %vm3036, %v3341, %v3340
        %v3343 = vrot.slane %v3000, 4
        %v3344 = vsel %vm3039, %v3343, %v3342
        %v3345 = vrot.slane %v3002, 3
        %v3346 = vsel %vm3042, %v3345, %v3344
        %v3347 = vrot.slane %v3004, 2
        %v3348 = vrot.slane %v3006, 1
        %v3349 = vsel %vm3024, %v3348, %v3347
        %v3350 = vsel %vm3027, %v3008, %v3349
        %v3351 = vrot.slane %v3010, 7
        %v3352 = vsel %vm3030, %v3351, %v3350
        %3353 = vrot.lane.b32.xlu0 %v3346, 32
        %v3354 = vpop.permute.xlu0 %3353
        %3355 = vrot.lane.b32.xlu0 %v3352, 32
        %v3356 = vpop.permute.xlu0 %3355
        %3359 = vst.msk [vmem:[#allocation4 + $0x8] sm:$0xff] %vm3111, %v3354
        %3360 = vst.msk [vmem:[#allocation4 + $0x18] sm:$0xf] %vm3113, %v3356
        %v3361 = vrot.slane %v2988, 3
        %v3362 = vrot.slane %v2990, 2
        %v3363 = vsel %vm3024, %v3362, %v3361
        %v3364 = vrot.slane %v2992, 1
        %v3365 = vsel %vm3027, %v3364, %v3363
        %v3366 = vsel %vm3030, %v2994, %v3365
        %v3367 = vrot.slane %v2996, 7
        %v3368 = vsel %vm3033, %v3367, %v3366
        %v3369 = vrot.slane %v2998, 6
        %v3370 = vsel %vm3036, %v3369, %v3368
        %v3371 = vrot.slane %v3000, 5
        %v3372 = vsel %vm3039, %v3371, %v3370
        %v3373 = vrot.slane %v3002, 4
        %v3374 = vsel %vm3042, %v3373, %v3372
        %v3375 = vrot.slane %v3004, 3
        %v3376 = vrot.slane %v3006, 2
        %v3377 = vsel %vm3024, %v3376, %v3375
        %v3378 = vrot.slane %v3008, 1
        %v3379 = vsel %vm3027, %v3378, %v3377
        %v3380 = vsel %vm3030, %v3010, %v3379
        %3381 = vrot.lane.b32.xlu0 %v3374, 48
        %v3382 = vpop.permute.xlu0 %3381
        %3383 = vrot.lane.b32.xlu0 %v3380, 48
        %v3384 = vpop.permute.xlu0 %3383
        %3387 = vst.msk [vmem:[#allocation4 + $0x8] sm:$0xff] %vm3141, %v3382
        %3388 = vst.msk [vmem:[#allocation4 + $0x18] sm:$0xf] %vm3143, %v3384
        %v3389 = vrot.slane %v2988, 4
        %v3390 = vrot.slane %v2990, 3
        %v3391 = vsel %vm3024, %v3390, %v3389
        %v3392 = vrot.slane %v2992, 2
        %v3393 = vsel %vm3027, %v3392, %v3391
        %v3394 = vrot.slane %v2994, 1
        %v3395 = vsel %vm3030, %v3394, %v3393
        %v3396 = vsel %vm3033, %v2996, %v3395
        %v3397 = vrot.slane %v2998, 7
        %v3398 = vsel %vm3036, %v3397, %v3396
        %v3399 = vrot.slane %v3000, 6
        %v3400 = vsel %vm3039, %v3399, %v3398
        %v3401 = vrot.slane %v3002, 5
        %v3402 = vsel %vm3042, %v3401, %v3400
        %v3403 = vrot.slane %v3004, 4
        %v3404 = vrot.slane %v3006, 3
        %v3405 = vsel %vm3024, %v3404, %v3403
        %v3406 = vrot.slane %v3008, 2
        %v3407 = vsel %vm3027, %v3406, %v3405
        %v3408 = vrot.slane %v3010, 1
        %v3409 = vsel %vm3030, %v3408, %v3407
        %3410 = vrot.lane.b32.xlu0 %v3402, 64
        %v3411 = vpop.permute.xlu0 %3410
        %3412 = vrot.lane.b32.xlu0 %v3409, 64
        %v3413 = vpop.permute.xlu0 %3412
        %3416 = vst.msk [vmem:[#allocation4 + $0x8] sm:$0xff] %vm3172, %v3411
        %3417 = vst.msk [vmem:[#allocation4 + $0x18] sm:$0xf] %vm3174, %v3413
        %v3418 = vrot.slane %v2988, 5
        %v3419 = vrot.slane %v2990, 4
        %v3420 = vsel %vm3024, %v3419, %v3418
        %v3421 = vrot.slane %v2992, 3
        %v3422 = vsel %vm3027, %v3421, %v3420
        %v3423 = vrot.slane %v2994, 2
        %v3424 = vsel %vm3030, %v3423, %v3422
        %v3425 = vrot.slane %v2996, 1
        %v3426 = vsel %vm3033, %v3425, %v3424
        %v3427 = vsel %vm3036, %v2998, %v3426
        %v3428 = vrot.slane %v3000, 7
        %v3429 = vsel %vm3039, %v3428, %v3427
        %v3430 = vrot.slane %v3002, 6
        %v3431 = vsel %vm3042, %v3430, %v3429
        %v3432 = vrot.slane %v3004, 5
        %v3433 = vrot.slane %v3006, 4
        %v3434 = vsel %vm3024, %v3433, %v3432
        %v3435 = vrot.slane %v3008, 3
        %v3436 = vsel %vm3027, %v3435, %v3434
        %v3437 = vrot.slane %v3010, 2
        %v3438 = vsel %vm3030, %v3437, %v3436
        %3439 = vrot.lane.b32.xlu0 %v3431, 80
        %v3440 = vpop.permute.xlu0 %3439
        %3441 = vrot.lane.b32.xlu0 %v3438, 80
        %v3442 = vpop.permute.xlu0 %3441
        %3445 = vst.msk [vmem:[#allocation4 + $0x8] sm:$0xff] %vm3203, %v3440
        %3446 = vst.msk [vmem:[#allocation4 + $0x18] sm:$0xf] %vm3205, %v3442
        %v3447 = vrot.slane %v2988, 6
        %v3448 = vrot.slane %v2990, 5
        %v3449 = vsel %vm3024, %v3448, %v3447
        %v3450 = vrot.slane %v2992, 4
        %v3451 = vsel %vm3027, %v3450, %v3449
        %v3452 = vrot.slane %v2994, 3
        %v3453 = vsel %vm3030, %v3452, %v3451
        %v3454 = vrot.slane %v2996, 2
        %v3455 = vsel %vm3033, %v3454, %v3453
        %v3456 = vrot.slane %v2998, 1
        %v3457 = vsel %vm3036, %v3456, %v3455
        %v3458 = vsel %vm3039, %v3000, %v3457
        %v3459 = vrot.slane %v3002, 7
        %v3460 = vsel %vm3042, %v3459, %v3458
        %v3461 = vrot.slane %v3004, 6
        %v3462 = vrot.slane %v3006, 5
        %v3463 = vsel %vm3024, %v3462, %v3461
        %v3464 = vrot.slane %v3008, 4
        %v3465 = vsel %vm3027, %v3464, %v3463
        %v3466 = vrot.slane %v3010, 3
        %v3467 = vsel %vm3030, %v3466, %v3465
        %3468 = vrot.lane.b32.xlu0 %v3460, 96
        %v3469 = vpop.permute.xlu0 %3468
        %3470 = vrot.lane.b32.xlu0 %v3467, 96
        %v3471 = vpop.permute.xlu0 %3470
        %3474 = vst.msk [vmem:[#allocation4 + $0x8] sm:$0xff] %vm3234, %v3469
        %3475 = vst.msk [vmem:[#allocation4 + $0x18] sm:$0xf] %vm3236, %v3471
        %v3476 = vrot.slane %v2988, 7
        %v3477 = vrot.slane %v2990, 6
        %v3478 = vsel %vm3024, %v3477, %v3476
        %v3479 = vrot.slane %v2992, 5
        %v3480 = vsel %vm3027, %v3479, %v3478
        %v3481 = vrot.slane %v2994, 4
        %v3482 = vsel %vm3030, %v3481, %v3480
        %v3483 = vrot.slane %v2996, 3
        %v3484 = vsel %vm3033, %v3483, %v3482
        %v3485 = vrot.slane %v2998, 2
        %v3486 = vsel %vm3036, %v3485, %v3484
        %v3487 = vrot.slane %v3000, 1
        %v3488 = vsel %vm3039, %v3487, %v3486
        %v3489 = vsel %vm3042, %v3002, %v3488
        %v3490 = vrot.slane %v3004, 7
        %v3491 = vrot.slane %v3006, 6
        %v3492 = vsel %vm3024, %v3491, %v3490
        %v3493 = vrot.slane %v3008, 5
        %v3494 = vsel %vm3027, %v3493, %v3492
        %v3495 = vrot.slane %v3010, 4
        %v3496 = vsel %vm3030, %v3495, %v3494
        %3497 = vrot.lane.b32.xlu0 %v3489, 112
        %v3498 = vpop.permute.xlu0 %3497
        %3499 = vrot.lane.b32.xlu0 %v3496, 112
        %v3500 = vpop.permute.xlu0 %3499
        %3503 = vst.msk [vmem:[#allocation4 + $0x8] sm:$0xff] %vm3265, %v3498
        %3504 = vst.msk [vmem:[#allocation4 + $0x18] sm:$0xf] %vm3267, %v3500
        %v3505 = vld [vmem:[#allocation4] sm:$0xf]
        %v3506 = vld [vmem:[#allocation4 + $0x8] sm:$0xf]
        %3507 = vst [vmem:[#allocation1] ss:$2 sm:$0xff] %v314
        %v3508 = vld.sshfl [vmem:[#allocation1] sm:$0xff pattern:$0x75316420]
        %v3509 = vld.sshfl [vmem:[#allocation1 + $0x8] sm:$0xff pattern:$0x75316420]
        %v3512 = vmul.f32 %v3505, %v3508
        %v3513 = vmul.f32 %v3506, %v3509
        %v3514 = vadd.f32 %v3512, 0.0
        %v3515 = vadd.f32 %v3513, 0.0
        %v3516 = vadd.f32 %v3505, 0.0
        %v3517 = vadd.f32 %v3506, 0.0
        %v3518 = vld [vmem:[#allocation4] sm:$0xf0]
        %v3519 = vld [vmem:[#allocation4 + $0x8] sm:$0xf0]
        %s3520 = scalar_lea.vmem [#allocation1], 1
        %3521 = vst [vmem:[%s3520] ss:$2 sm:$0xff] %v315
        %v3522 = vld.sshfl [vmem:[#allocation1] sm:$0xff pattern:$0x75316420]
        %v3523 = vld.sshfl [vmem:[#allocation1 + $0x8] sm:$0xff pattern:$0x75316420]
        %v3526 = vmul.f32 %v3518, %v3522
        %v3527 = vmul.f32 %v3519, %v3523
        %v3530 = vrot.slane %v3526, 4
        %v3531 = vrot.slane %v3527, 4
        %v3534 = vadd.f32 %v3514, %v3530
        %v3535 = vadd.f32 %v3515, %v3531
        %v3538 = vrot.slane %v3518, 4
        %v3539 = vrot.slane %v3519, 4
        %v3542 = vadd.f32 %v3516, %v3538
        %v3543 = vadd.f32 %v3517, %v3539
        %v3544 = vld [vmem:[#allocation4 + $0x10] sm:$0xf]
        %v3545 = vld [vmem:[#allocation4 + $0x18] sm:$0xf]
        %3546 = vst [vmem:[#allocation1] ss:$2 sm:$0xff] %v316
        %v3547 = vld.sshfl [vmem:[#allocation1] sm:$0xff pattern:$0x75316420]
        %v3548 = vld.sshfl [vmem:[#allocation1 + $0x8] sm:$0xff pattern:$0x75316420]
        %v3551 = vmul.f32 %v3544, %v3547
        %v3552 = vmul.f32 %v3545, %v3548
        %v3553 = vadd.f32 %v3534, %v3551
        %v3554 = vadd.f32 %v3535, %v3552
        %v3555 = vadd.f32 %v3542, %v3544
        %v3556 = vadd.f32 %v3543, %v3545
        %v3557 = vrcp.pop %v3555
        %v3558 = vrcp.pop %v3556
        %v3559 = vmul.f32 %v3553, %v3557
        %v3560 = vmul.f32 %v3554, %v3558
        %3561 = vst [vmem:[#allocation1] ss:$2 sm:$0xff] %v313
        %v3562 = vld.sshfl [vmem:[#allocation1] sm:$0xff pattern:$0x75316420]
        %v3563 = vld.sshfl [vmem:[#allocation1 + $0x8] sm:$0xff pattern:$0x75316420]
        %v3566 = vadd.f32 %v3559, %v3562
        %v3567 = vadd.f32 %v3560, %v3563
        %v3570 = vrot.slane %v3567, 4
        %vm3571 = vcmask 1043456
        %v3572 = vsel %vm3571, %v3566, %v3570
        %3574 = vst [vmem:[%s261] sm:$0xff] %v3572
        %p3575 = scmp.lt.s32.totalorder %s15, 1
        %s3576 = scalar_select %p3575, %s15, 1
        %s3577 = smul.addr %s3576, 2
        %s3578 = smul.addr %s3577, 4
        %s3579 = scalar_lea.vmem %s4, %s3578
        // Predicated region
        $region75: #{feature_aggregation.1} parent=69 // pred_check
          %p3580 = pneg %p127
        $region76: #{feature_aggregation.1} parent=69 // pred_check_branch
          %3582 = sbr.rel (%p3580) target = $region78
        $region77: #{feature_aggregation.1} parent=69 // pred_region
          _
        $region78: #{feature_aggregation.1} parent=69 // pred_fallthru
          _
      $region70: #{feature_aggregation.1} parent=5 // pred_fallthru
        _
      %p3583 = scmp.le.s32.totalorder 2, %s10
      // Predicated region
      $region79: #{feature_aggregation.1} parent=5 // pred_check
        %p3584 = pneg %p3583
      $region80: #{feature_aggregation.1} parent=5 // pred_check_branch
        %3586 = sbr.rel (%p3584) target = $region82
      $region81: #{feature_aggregation.1} parent=5 // pred_region
        %s3587 = ssub.s32 %s10, 2
        // Predicated region
        $region83: #{feature_aggregation.1} parent=81 // pred_check
          %p3588 = pneg %p133
        $region84: #{feature_aggregation.1} parent=81 // pred_check_branch
          %3590 = sbr.rel (%p3588) target = $region86
        $region85: #{feature_aggregation.1} parent=81 // pred_region
          %p3591 = scmp.lt.s32.totalorder %s16, 1
          %s3592 = scalar_select %p3591, %s16, 1
          %s3593 = smul.addr %s3592, 2
          %s3594 = smul.addr %s3593, 4
          %s3595 = scalar_lea.vmem %s4, %s3594
        $region86: #{feature_aggregation.1} parent=81 // pred_fallthru
          _
      $region82: #{feature_aggregation.1} parent=5 // pred_fallthru
        _
    $region6: #{feature_aggregation.1} parent=1 // loop_footer
      %s14 = sadd.s32 1, %s10
    $region7: #{feature_aggregation.1} parent=1 // loop_footer_branch
      %9 = sbr.rel target = $region3
    $region8: #{feature_aggregation.1} parent=1 // loop_exit
      _

</llo_original>
